<compile_context>
chip_gen: v7x
topology: tpu7x:2x2x1
jax: 0.10.0
libtpu: 0.0.40
codegen_flags: <defaults>
</compile_context>

<pallas_src>
import jax
import jax.numpy as jnp
from jax import lax
from jax.experimental import pallas as pl
from jax.experimental.pallas import tpu as pltpu

BN_EPS = 1e-5


def _down_kernel(xp_ref, w1_ref, s1_ref, b1_ref, w2_ref, s2_ref, b2_ref,
                 wr_ref, out_ref, pad2):
    """Fused ResidualBlock on one (already max-pooled, zero-padded) image.

    xp_ref : (1, Hp+2, Wp+2, C_in)  bf16  pooled input with conv halo
    w1_ref : (9, C_in, C_mid)       bf16  conv1 3x3 weights, tap = dh*3+dw
    w2_ref : (9, C_mid, C_out)      bf16  conv2 3x3 weights
    wr_ref : (C_in, C_out)          bf16  1x1 residual conv
    s*/b*  : (1, C)                 f32   folded eval-mode BatchNorm scale/bias
    out_ref: (1, Hp*Wp, C_out)      f32   flattened-pixel output slab
    pad2   : (Hp+2, Wp+2, C_mid)    bf16  VMEM scratch for conv2 input + halo
    """
    Hp = xp_ref.shape[1] - 2
    Wp = xp_ref.shape[2] - 2
    C_in = xp_ref.shape[3]
    C_mid = w1_ref.shape[2]
    C_out = out_ref.shape[2]

    # Zero only the halo ring of the conv2 scratch (interior is overwritten
    # below). Four tiny stores instead of a full-buffer zero fill.
    zrow = jnp.zeros((1, Wp + 2, C_mid), pad2.dtype)
    zcol = jnp.zeros((Hp + 2, 1, C_mid), pad2.dtype)
    pad2[pl.ds(0, 1), :, :] = zrow
    pad2[pl.ds(Hp + 1, 1), :, :] = zrow
    pad2[:, pl.ds(0, 1), :] = zcol
    pad2[:, pl.ds(Wp + 1, 1), :] = zcol

    s1 = s1_ref[...]
    b1 = b1_ref[...]

    # ---- conv1 (3x3, pad 1, no bias): 9 per-tap matmuls over all pixels ----
    acc1 = jnp.zeros((Hp * Wp, C_mid), jnp.float32)
    for dh in range(3):
        for dw in range(3):
            patch = xp_ref[0, pl.ds(dh, Hp), pl.ds(dw, Wp), :]   # (Hp,Wp,Cin)
            acc1 = acc1 + jnp.dot(patch.reshape(Hp * Wp, C_in),
                                  w1_ref[dh * 3 + dw],
                                  preferred_element_type=jnp.float32)
    a1 = jnp.maximum(acc1 * s1 + b1, 0.0)                        # f32 epilogue
    pad2[pl.ds(1, Hp), pl.ds(1, Wp), :] = (
        a1.reshape(Hp, Wp, C_mid).astype(pad2.dtype))

    s2 = s2_ref[...]
    b2 = b2_ref[...]

    # ---- conv2 (3x3, pad 1, no bias): 9 per-tap matmuls ----
    acc2 = jnp.zeros((Hp * Wp, C_out), jnp.float32)
    for dh in range(3):
        for dw in range(3):
            patch = pad2[pl.ds(dh, Hp), pl.ds(dw, Wp), :]        # (Hp,Wp,Cmid)
            acc2 = acc2 + jnp.dot(patch.reshape(Hp * Wp, C_mid),
                                  w2_ref[dh * 3 + dw],
                                  preferred_element_type=jnp.float32)
    y = acc2 * s2 + b2

    # ---- 1x1 residual conv: one matmul over all pixels ----
    xin = xp_ref[0, pl.ds(1, Hp), pl.ds(1, Wp), :].reshape(Hp * Wp, C_in)
    res = jnp.dot(xin, wr_ref[...], preferred_element_type=jnp.float32)

    # Single slab store for the whole image.
    out_ref[0] = jnp.maximum(y + res, 0.0)


def down_forward(x_nchw, params):
    """Layout plumbing + pooling + BN folding in plain JAX, compute in Pallas."""
    N, C_in, H, W = x_nchw.shape
    assert H % 2 == 0 and W % 2 == 0
    Hp, Wp = H // 2, W // 2
    C_mid = params["w1"].shape[0]
    C_out = params["w2"].shape[0]

    # NCHW -> NHWC, 2x2 max-pool and zero halo in the wrapper: the kernel
    # input is 4x smaller than x and already padded for the 3x3 convs.
    x = jnp.transpose(x_nchw, (0, 2, 3, 1)).astype(jnp.float32)
    pooled = jnp.max(x.reshape(N, Hp, 2, Wp, 2, C_in), axis=(2, 4))
    xp = jnp.pad(pooled, ((0, 0), (1, 1), (1, 1), (0, 0))).astype(jnp.bfloat16)

    # torch OIHW -> (tap, C_in, C_out), tap = dh*3 + dw; bf16 for the MXU.
    w1 = jnp.transpose(params["w1"], (2, 3, 1, 0)).reshape(9, C_in, C_mid)
    w2 = jnp.transpose(params["w2"], (2, 3, 1, 0)).reshape(9, C_mid, C_out)
    wr = jnp.transpose(params["w1x1"].reshape(C_out, C_in), (1, 0))
    w1 = w1.astype(jnp.bfloat16)
    w2 = w2.astype(jnp.bfloat16)
    wr = wr.astype(jnp.bfloat16)

    # Fold eval-mode BatchNorm into per-channel f32 scale / bias.
    s1 = params["bn1_gamma"] / jnp.sqrt(params["bn1_var"] + BN_EPS)
    b1 = params["bn1_beta"] - params["bn1_mean"] * s1
    s2 = params["bn2_gamma"] / jnp.sqrt(params["bn2_var"] + BN_EPS)
    b2 = params["bn2_beta"] - params["bn2_mean"] * s2
    s1, b1 = s1.reshape(1, C_mid), b1.reshape(1, C_mid)
    s2, b2 = s2.reshape(1, C_out), b2.reshape(1, C_out)

    out = pl.pallas_call(
        _down_kernel,
        out_shape=jax.ShapeDtypeStruct((N, Hp * Wp, C_out), jnp.float32),
        grid=(N,),
        in_specs=[
            pl.BlockSpec((1, Hp + 2, Wp + 2, C_in), lambda n: (n, 0, 0, 0)),
            pl.BlockSpec((9, C_in, C_mid), lambda n: (0, 0, 0)),
            pl.BlockSpec((1, C_mid), lambda n: (0, 0)),
            pl.BlockSpec((1, C_mid), lambda n: (0, 0)),
            pl.BlockSpec((9, C_mid, C_out), lambda n: (0, 0, 0)),
            pl.BlockSpec((1, C_out), lambda n: (0, 0)),
            pl.BlockSpec((1, C_out), lambda n: (0, 0)),
            pl.BlockSpec((C_in, C_out), lambda n: (0, 0)),
        ],
        out_specs=pl.BlockSpec((1, Hp * Wp, C_out), lambda n: (n, 0, 0)),
        scratch_shapes=[
            pltpu.VMEM((Hp + 2, Wp + 2, C_mid), jnp.bfloat16),
        ],
        compiler_params=pltpu.CompilerParams(
            dimension_semantics=("parallel",),
            vmem_limit_bytes=32 * 1024 * 1024),
    )(xp, w1, s1, b1, w2, s2, b2, wr)

    out = out.reshape(N, Hp, Wp, C_out)
    return jnp.transpose(out, (0, 3, 1, 2))  # back to NCHW


def init_params(key, c_in, c_out):
    c_mid = c_out  # DoubleConv default: mid_channels = out_channels
    ks = jax.random.split(key, 11)
    return {
        "w1": jax.random.normal(ks[0], (c_mid, c_in, 3, 3), jnp.float32) * 0.2,
        "w2": jax.random.normal(ks[1], (c_out, c_mid, 3, 3), jnp.float32) * 0.2,
        "w1x1": jax.random.normal(ks[2], (c_out, c_in, 1, 1), jnp.float32) * 0.2,
        "bn1_gamma": jax.random.uniform(ks[3], (c_mid,), jnp.float32, 0.5, 1.5),
        "bn1_beta": jax.random.normal(ks[4], (c_mid,), jnp.float32) * 0.1,
        "bn1_mean": jax.random.normal(ks[5], (c_mid,), jnp.float32) * 0.1,
        "bn1_var": jax.random.uniform(ks[6], (c_mid,), jnp.float32, 0.5, 1.5),
        "bn2_gamma": jax.random.uniform(ks[7], (c_out,), jnp.float32, 0.5, 1.5),
        "bn2_beta": jax.random.normal(ks[8], (c_out,), jnp.float32) * 0.1,
        "bn2_mean": jax.random.normal(ks[9], (c_out,), jnp.float32) * 0.1,
        "bn2_var": jax.random.uniform(ks[10], (c_out,), jnp.float32, 0.5, 1.5),
    }


def ref_down(x, p):
    """Pure-JAX eval-mode reference (NCHW). Conv inputs/weights are cast to
    bf16 with f32 accumulation so it mirrors the kernel's MXU precision."""
    xp = lax.reduce_window(x, -jnp.inf, lax.max,
                           (1, 1, 2, 2), (1, 1, 2, 2), "VALID")

    def conv(v, w, pad):
        return lax.conv_general_dilated(
            v.astype(jnp.bfloat16), w.astype(jnp.bfloat16), (1, 1), pad,
            dimension_numbers=("NCHW", "OIHW", "NCHW"),
            preferred_element_type=jnp.float32)

    def bn(v, g, b, m, var):
        inv = g / jnp.sqrt(var + BN_EPS)
        return v * inv[None, :, None, None] + (b - m * inv)[None, :, None, None]

    h = conv(xp, p["w1"], [(1, 1), (1, 1)])
    h = jnp.maximum(bn(h, p["bn1_gamma"], p["bn1_beta"],
                       p["bn1_mean"], p["bn1_var"]), 0.0)
    h = conv(h, p["w2"], [(1, 1), (1, 1)])
    h = bn(h, p["bn2_gamma"], p["bn2_beta"], p["bn2_mean"], p["bn2_var"])
    res = conv(xp, p["w1x1"], [(0, 0), (0, 0)])
    return jnp.maximum(h + res, 0.0)


if __name__ == "__main__":
    key = jax.random.PRNGKey(0)
    kx, kp = jax.random.split(key)
    N, C_in, H, W = 2, 4, 16, 16
    C_out = 8

    x = jax.random.normal(kx, (N, C_in, H, W), jnp.float32)
    params = init_params(kp, C_in, C_out)

    out = down_forward(x, params)
    out = jax.block_until_ready(out)

    ref = ref_down(x, params)
    assert out.shape == (N, C_out, H // 2, W // 2)
    max_err = float(jnp.max(jnp.abs(out - ref)))
    assert jnp.allclose(out, ref, atol=1e-2, rtol=1e-2), max_err
    print("KERNEL_OK")
</pallas_src>

<mosaic_0001>
module attributes {stable_mosaic.version = 11 : i64} {
  func.func @_down_kernel(%arg0: i32, %arg1: memref<1x10x10x4xbf16, #tpu.memory_space<vmem>>, %arg2: memref<9x4x8xbf16, #tpu.memory_space<vmem>>, %arg3: memref<1x8xf32, #tpu.memory_space<vmem>>, %arg4: memref<1x8xf32, #tpu.memory_space<vmem>>, %arg5: memref<9x8x8xbf16, #tpu.memory_space<vmem>>, %arg6: memref<1x8xf32, #tpu.memory_space<vmem>>, %arg7: memref<1x8xf32, #tpu.memory_space<vmem>>, %arg8: memref<4x8xbf16, #tpu.memory_space<vmem>>, %arg9: memref<1x64x8xf32, #tpu.memory_space<vmem>>, %arg10: memref<10x10x8xbf16, #tpu.memory_space<vmem>>) attributes {dimension_semantics = [#tpu.dimension_semantics<parallel>], iteration_bounds = array<i64: 2>, scalar_prefetch = 0 : i64, scratch_operands = 1 : i64, tpu.core_type = #tpu.core_type<tc>, window_params = [{transform_indices = @transform_0, window_bounds = array<i64: 1, 10, 10, 4>}, {pipeline_mode = #tpu.pipeline_mode<synchronous>, transform_indices = @transform_1, window_bounds = array<i64: 9, 4, 8>}, {pipeline_mode = #tpu.pipeline_mode<synchronous>, transform_indices = @transform_2, window_bounds = array<i64: 1, 8>}, {pipeline_mode = #tpu.pipeline_mode<synchronous>, transform_indices = @transform_3, window_bounds = array<i64: 1, 8>}, {pipeline_mode = #tpu.pipeline_mode<synchronous>, transform_indices = @transform_4, window_bounds = array<i64: 9, 8, 8>}, {pipeline_mode = #tpu.pipeline_mode<synchronous>, transform_indices = @transform_5, window_bounds = array<i64: 1, 8>}, {pipeline_mode = #tpu.pipeline_mode<synchronous>, transform_indices = @transform_6, window_bounds = array<i64: 1, 8>}, {pipeline_mode = #tpu.pipeline_mode<synchronous>, transform_indices = @transform_7, window_bounds = array<i64: 4, 8>}, {transform_indices = @transform_8, window_bounds = array<i64: 1, 64, 8>}]} {
    %cst = arith.constant 0.000000e+00 : bf16
    %0 = vector.broadcast %cst : bf16 to vector<1x10x8xbf16>
    %cst_0 = arith.constant 0.000000e+00 : bf16
    %1 = vector.broadcast %cst_0 : bf16 to vector<10x1x8xbf16>
    %c0 = arith.constant 0 : index
    %c0_1 = arith.constant 0 : index
    %c0_2 = arith.constant 0 : index
    %2 = vector.load %arg10[%c0, %c0_1, %c0_2] : memref<10x10x8xbf16, #tpu.memory_space<vmem>>, vector<1x10x8xbf16>
    tpu.vector_store %arg10[%c0, %c0_1, %c0_2], %0 {strides = array<i32>} : memref<10x10x8xbf16, #tpu.memory_space<vmem>>, vector<1x10x8xbf16>,
    %c9 = arith.constant 9 : index
    %c0_3 = arith.constant 0 : index
    %c0_4 = arith.constant 0 : index
    %3 = vector.load %arg10[%c9, %c0_3, %c0_4] : memref<10x10x8xbf16, #tpu.memory_space<vmem>>, vector<1x10x8xbf16>
    tpu.vector_store %arg10[%c9, %c0_3, %c0_4], %0 {strides = array<i32>} : memref<10x10x8xbf16, #tpu.memory_space<vmem>>, vector<1x10x8xbf16>,
    %c0_5 = arith.constant 0 : index
    %c0_6 = arith.constant 0 : index
    %c0_7 = arith.constant 0 : index
    %4 = vector.load %arg10[%c0_5, %c0_6, %c0_7] : memref<10x10x8xbf16, #tpu.memory_space<vmem>>, vector<10x1x8xbf16>
    tpu.vector_store %arg10[%c0_5, %c0_6, %c0_7], %1 {strides = array<i32>} : memref<10x10x8xbf16, #tpu.memory_space<vmem>>, vector<10x1x8xbf16>,
    %c0_8 = arith.constant 0 : index
    %c9_9 = arith.constant 9 : index
    %c0_10 = arith.constant 0 : index
    %5 = vector.load %arg10[%c0_8, %c9_9, %c0_10] : memref<10x10x8xbf16, #tpu.memory_space<vmem>>, vector<10x1x8xbf16>
    tpu.vector_store %arg10[%c0_8, %c9_9, %c0_10], %1 {strides = array<i32>} : memref<10x10x8xbf16, #tpu.memory_space<vmem>>, vector<10x1x8xbf16>,
    %c0_11 = arith.constant 0 : index
    %c0_12 = arith.constant 0 : index
    %6 = vector.load %arg3[%c0_11, %c0_12] : memref<1x8xf32, #tpu.memory_space<vmem>>, vector<1x8xf32>
    %c0_13 = arith.constant 0 : index
    %c0_14 = arith.constant 0 : index
    %7 = vector.load %arg4[%c0_13, %c0_14] : memref<1x8xf32, #tpu.memory_space<vmem>>, vector<1x8xf32>
    %cst_15 = arith.constant 0.000000e+00 : f32
    %8 = vector.broadcast %cst_15 : f32 to vector<64x8xf32>
    %c0_16 = arith.constant 0 : index
    %c0_17 = arith.constant 0 : index
    %c0_18 = arith.constant 0 : index
    %c0_19 = arith.constant 0 : index
    %9 = vector.load %arg1[%c0_16, %c0_17, %c0_18, %c0_19] : memref<1x10x10x4xbf16, #tpu.memory_space<vmem>>, vector<1x8x8x4xbf16>
    %10 = vector.shape_cast %9 : vector<1x8x8x4xbf16> to vector<8x8x4xbf16>
    %11 = vector.shape_cast %10 : vector<8x8x4xbf16> to vector<64x4xbf16>
    %c0_20 = arith.constant 0 : index
    %c0_21 = arith.constant 0 : index
    %c0_22 = arith.constant 0 : index
    %12 = vector.load %arg2[%c0_20, %c0_21, %c0_22] : memref<9x4x8xbf16, #tpu.memory_space<vmem>>, vector<1x4x8xbf16>
    %13 = vector.shape_cast %12 : vector<1x4x8xbf16> to vector<4x8xbf16>
    %cst_23 = arith.constant dense<0.000000e+00> : vector<64x8xf32>
    %14 = tpu.matmul %11, %13, %cst_23 {dimension_numbers = #tpu.dot_dimension_numbers<[1], [0], [0], [1], [0, 0, 1, 1], [], []>} : vector<64x4xbf16>, vector<4x8xbf16>, vector<64x8xf32> -> vector<64x8xf32>
    %15 = arith.addf %8, %14 : vector<64x8xf32>
    %c0_24 = arith.constant 0 : index
    %c0_25 = arith.constant 0 : index
    %c1 = arith.constant 1 : index
    %c0_26 = arith.constant 0 : index
    %16 = vector.load %arg1[%c0_24, %c0_25, %c1, %c0_26] : memref<1x10x10x4xbf16, #tpu.memory_space<vmem>>, vector<1x8x8x4xbf16>
    %17 = vector.shape_cast %16 : vector<1x8x8x4xbf16> to vector<8x8x4xbf16>
    %18 = vector.shape_cast %17 : vector<8x8x4xbf16> to vector<64x4xbf16>
    %c1_27 = arith.constant 1 : index
    %c0_28 = arith.constant 0 : index
    %c0_29 = arith.constant 0 : index
    %19 = vector.load %arg2[%c1_27, %c0_28, %c0_29] : memref<9x4x8xbf16, #tpu.memory_space<vmem>>, vector<1x4x8xbf16>
    %20 = vector.shape_cast %19 : vector<1x4x8xbf16> to vector<4x8xbf16>
    %cst_30 = arith.constant dense<0.000000e+00> : vector<64x8xf32>
    %21 = tpu.matmul %18, %20, %cst_30 {dimension_numbers = #tpu.dot_dimension_numbers<[1], [0], [0], [1], [0, 0, 1, 1], [], []>} : vector<64x4xbf16>, vector<4x8xbf16>, vector<64x8xf32> -> vector<64x8xf32>
    %22 = arith.addf %15, %21 : vector<64x8xf32>
    %c0_31 = arith.constant 0 : index
    %c0_32 = arith.constant 0 : index
    %c2 = arith.constant 2 : index
    %c0_33 = arith.constant 0 : index
    %23 = vector.load %arg1[%c0_31, %c0_32, %c2, %c0_33] : memref<1x10x10x4xbf16, #tpu.memory_space<vmem>>, vector<1x8x8x4xbf16>
    %24 = vector.shape_cast %23 : vector<1x8x8x4xbf16> to vector<8x8x4xbf16>
    %25 = vector.shape_cast %24 : vector<8x8x4xbf16> to vector<64x4xbf16>
    %c2_34 = arith.constant 2 : index
    %c0_35 = arith.constant 0 : index
    %c0_36 = arith.constant 0 : index
    %26 = vector.load %arg2[%c2_34, %c0_35, %c0_36] : memref<9x4x8xbf16, #tpu.memory_space<vmem>>, vector<1x4x8xbf16>
    %27 = vector.shape_cast %26 : vector<1x4x8xbf16> to vector<4x8xbf16>
    %cst_37 = arith.constant dense<0.000000e+00> : vector<64x8xf32>
    %28 = tpu.matmul %25, %27, %cst_37 {dimension_numbers = #tpu.dot_dimension_numbers<[1], [0], [0], [1], [0, 0, 1, 1], [], []>} : vector<64x4xbf16>, vector<4x8xbf16>, vector<64x8xf32> -> vector<64x8xf32>
    %29 = arith.addf %22, %28 : vector<64x8xf32>
    %c0_38 = arith.constant 0 : index
    %c1_39 = arith.constant 1 : index
    %c0_40 = arith.constant 0 : index
    %c0_41 = arith.constant 0 : index
    %30 = vector.load %arg1[%c0_38, %c1_39, %c0_40, %c0_41] : memref<1x10x10x4xbf16, #tpu.memory_space<vmem>>, vector<1x8x8x4xbf16>
    %31 = vector.shape_cast %30 : vector<1x8x8x4xbf16> to vector<8x8x4xbf16>
    %32 = vector.shape_cast %31 : vector<8x8x4xbf16> to vector<64x4xbf16>
    %c3 = arith.constant 3 : index
    %c0_42 = arith.constant 0 : index
    %c0_43 = arith.constant 0 : index
    %33 = vector.load %arg2[%c3, %c0_42, %c0_43] : memref<9x4x8xbf16, #tpu.memory_space<vmem>>, vector<1x4x8xbf16>
    %34 = vector.shape_cast %33 : vector<1x4x8xbf16> to vector<4x8xbf16>
    %cst_44 = arith.constant dense<0.000000e+00> : vector<64x8xf32>
    %35 = tpu.matmul %32, %34, %cst_44 {dimension_numbers = #tpu.dot_dimension_numbers<[1], [0], [0], [1], [0, 0, 1, 1], [], []>} : vector<64x4xbf16>, vector<4x8xbf16>, vector<64x8xf32> -> vector<64x8xf32>
    %36 = arith.addf %29, %35 : vector<64x8xf32>
    %c0_45 = arith.constant 0 : index
    %c1_46 = arith.constant 1 : index
    %c1_47 = arith.constant 1 : index
    %c0_48 = arith.constant 0 : index
    %37 = vector.load %arg1[%c0_45, %c1_46, %c1_47, %c0_48] : memref<1x10x10x4xbf16, #tpu.memory_space<vmem>>, vector<1x8x8x4xbf16>
    %38 = vector.shape_cast %37 : vector<1x8x8x4xbf16> to vector<8x8x4xbf16>
    %39 = vector.shape_cast %38 : vector<8x8x4xbf16> to vector<64x4xbf16>
    %c4 = arith.constant 4 : index
    %c0_49 = arith.constant 0 : index
    %c0_50 = arith.constant 0 : index
    %40 = vector.load %arg2[%c4, %c0_49, %c0_50] : memref<9x4x8xbf16, #tpu.memory_space<vmem>>, vector<1x4x8xbf16>
    %41 = vector.shape_cast %40 : vector<1x4x8xbf16> to vector<4x8xbf16>
    %cst_51 = arith.constant dense<0.000000e+00> : vector<64x8xf32>
    %42 = tpu.matmul %39, %41, %cst_51 {dimension_numbers = #tpu.dot_dimension_numbers<[1], [0], [0], [1], [0, 0, 1, 1], [], []>} : vector<64x4xbf16>, vector<4x8xbf16>, vector<64x8xf32> -> vector<64x8xf32>
    %43 = arith.addf %36, %42 : vector<64x8xf32>
    %c0_52 = arith.constant 0 : index
    %c1_53 = arith.constant 1 : index
    %c2_54 = arith.constant 2 : index
    %c0_55 = arith.constant 0 : index
    %44 = vector.load %arg1[%c0_52, %c1_53, %c2_54, %c0_55] : memref<1x10x10x4xbf16, #tpu.memory_space<vmem>>, vector<1x8x8x4xbf16>
    %45 = vector.shape_cast %44 : vector<1x8x8x4xbf16> to vector<8x8x4xbf16>
    %46 = vector.shape_cast %45 : vector<8x8x4xbf16> to vector<64x4xbf16>
    %c5 = arith.constant 5 : index
    %c0_56 = arith.constant 0 : index
    %c0_57 = arith.constant 0 : index
    %47 = vector.load %arg2[%c5, %c0_56, %c0_57] : memref<9x4x8xbf16, #tpu.memory_space<vmem>>, vector<1x4x8xbf16>
    %48 = vector.shape_cast %47 : vector<1x4x8xbf16> to vector<4x8xbf16>
    %cst_58 = arith.constant dense<0.000000e+00> : vector<64x8xf32>
    %49 = tpu.matmul %46, %48, %cst_58 {dimension_numbers = #tpu.dot_dimension_numbers<[1], [0], [0], [1], [0, 0, 1, 1], [], []>} : vector<64x4xbf16>, vector<4x8xbf16>, vector<64x8xf32> -> vector<64x8xf32>
    %50 = arith.addf %43, %49 : vector<64x8xf32>
    %c0_59 = arith.constant 0 : index
    %c2_60 = arith.constant 2 : index
    %c0_61 = arith.constant 0 : index
    %c0_62 = arith.constant 0 : index
    %51 = vector.load %arg1[%c0_59, %c2_60, %c0_61, %c0_62] : memref<1x10x10x4xbf16, #tpu.memory_space<vmem>>, vector<1x8x8x4xbf16>
    %52 = vector.shape_cast %51 : vector<1x8x8x4xbf16> to vector<8x8x4xbf16>
    %53 = vector.shape_cast %52 : vector<8x8x4xbf16> to vector<64x4xbf16>
    %c6 = arith.constant 6 : index
    %c0_63 = arith.constant 0 : index
    %c0_64 = arith.constant 0 : index
    %54 = vector.load %arg2[%c6, %c0_63, %c0_64] : memref<9x4x8xbf16, #tpu.memory_space<vmem>>, vector<1x4x8xbf16>
    %55 = vector.shape_cast %54 : vector<1x4x8xbf16> to vector<4x8xbf16>
    %cst_65 = arith.constant dense<0.000000e+00> : vector<64x8xf32>
    %56 = tpu.matmul %53, %55, %cst_65 {dimension_numbers = #tpu.dot_dimension_numbers<[1], [0], [0], [1], [0, 0, 1, 1], [], []>} : vector<64x4xbf16>, vector<4x8xbf16>, vector<64x8xf32> -> vector<64x8xf32>
    %57 = arith.addf %50, %56 : vector<64x8xf32>
    %c0_66 = arith.constant 0 : index
    %c2_67 = arith.constant 2 : index
    %c1_68 = arith.constant 1 : index
    %c0_69 = arith.constant 0 : index
    %58 = vector.load %arg1[%c0_66, %c2_67, %c1_68, %c0_69] : memref<1x10x10x4xbf16, #tpu.memory_space<vmem>>, vector<1x8x8x4xbf16>
    %59 = vector.shape_cast %58 : vector<1x8x8x4xbf16> to vector<8x8x4xbf16>
    %60 = vector.shape_cast %59 : vector<8x8x4xbf16> to vector<64x4xbf16>
    %c7 = arith.constant 7 : index
    %c0_70 = arith.constant 0 : index
    %c0_71 = arith.constant 0 : index
    %61 = vector.load %arg2[%c7, %c0_70, %c0_71] : memref<9x4x8xbf16, #tpu.memory_space<vmem>>, vector<1x4x8xbf16>
    %62 = vector.shape_cast %61 : vector<1x4x8xbf16> to vector<4x8xbf16>
    %cst_72 = arith.constant dense<0.000000e+00> : vector<64x8xf32>
    %63 = tpu.matmul %60, %62, %cst_72 {dimension_numbers = #tpu.dot_dimension_numbers<[1], [0], [0], [1], [0, 0, 1, 1], [], []>} : vector<64x4xbf16>, vector<4x8xbf16>, vector<64x8xf32> -> vector<64x8xf32>
    %64 = arith.addf %57, %63 : vector<64x8xf32>
    %c0_73 = arith.constant 0 : index
    %c2_74 = arith.constant 2 : index
    %c2_75 = arith.constant 2 : index
    %c0_76 = arith.constant 0 : index
    %65 = vector.load %arg1[%c0_73, %c2_74, %c2_75, %c0_76] : memref<1x10x10x4xbf16, #tpu.memory_space<vmem>>, vector<1x8x8x4xbf16>
    %66 = vector.shape_cast %65 : vector<1x8x8x4xbf16> to vector<8x8x4xbf16>
    %67 = vector.shape_cast %66 : vector<8x8x4xbf16> to vector<64x4xbf16>
    %c8 = arith.constant 8 : index
    %c0_77 = arith.constant 0 : index
    %c0_78 = arith.constant 0 : index
    %68 = vector.load %arg2[%c8, %c0_77, %c0_78] : memref<9x4x8xbf16, #tpu.memory_space<vmem>>, vector<1x4x8xbf16>
    %69 = vector.shape_cast %68 : vector<1x4x8xbf16> to vector<4x8xbf16>
    %cst_79 = arith.constant dense<0.000000e+00> : vector<64x8xf32>
    %70 = tpu.matmul %67, %69, %cst_79 {dimension_numbers = #tpu.dot_dimension_numbers<[1], [0], [0], [1], [0, 0, 1, 1], [], []>} : vector<64x4xbf16>, vector<4x8xbf16>, vector<64x8xf32> -> vector<64x8xf32>
    %71 = arith.addf %64, %70 : vector<64x8xf32>
    %72 = vector.broadcast %6 : vector<1x8xf32> to vector<64x8xf32>
    %73 = arith.mulf %71, %72 : vector<64x8xf32>
    %74 = vector.broadcast %7 : vector<1x8xf32> to vector<64x8xf32>
    %75 = arith.addf %73, %74 : vector<64x8xf32>
    %cst_80 = arith.constant 0.000000e+00 : f32
    %76 = vector.broadcast %cst_80 : f32 to vector<64x8xf32>
    %77 = arith.maximumf %75, %76 : vector<64x8xf32>
    %78 = vector.shape_cast %77 : vector<64x8xf32> to vector<8x8x8xf32>
    %79 = arith.truncf %78 : vector<8x8x8xf32> to vector<8x8x8xbf16>
    %c1_81 = arith.constant 1 : index
    %c1_82 = arith.constant 1 : index
    %c0_83 = arith.constant 0 : index
    %80 = vector.load %arg10[%c1_81, %c1_82, %c0_83] : memref<10x10x8xbf16, #tpu.memory_space<vmem>>, vector<8x8x8xbf16>
    tpu.vector_store %arg10[%c1_81, %c1_82, %c0_83], %79 {strides = array<i32>} : memref<10x10x8xbf16, #tpu.memory_space<vmem>>, vector<8x8x8xbf16>,
    %c0_84 = arith.constant 0 : index
    %c0_85 = arith.constant 0 : index
    %81 = vector.load %arg6[%c0_84, %c0_85] : memref<1x8xf32, #tpu.memory_space<vmem>>, vector<1x8xf32>
    %c0_86 = arith.constant 0 : index
    %c0_87 = arith.constant 0 : index
    %82 = vector.load %arg7[%c0_86, %c0_87] : memref<1x8xf32, #tpu.memory_space<vmem>>, vector<1x8xf32>
    %cst_88 = arith.constant 0.000000e+00 : f32
    %83 = vector.broadcast %cst_88 : f32 to vector<64x8xf32>
    %c0_89 = arith.constant 0 : index
    %c0_90 = arith.constant 0 : index
    %c0_91 = arith.constant 0 : index
    %84 = vector.load %arg10[%c0_89, %c0_90, %c0_91] : memref<10x10x8xbf16, #tpu.memory_space<vmem>>, vector<8x8x8xbf16>
    %85 = vector.shape_cast %84 : vector<8x8x8xbf16> to vector<64x8xbf16>
    %c0_92 = arith.constant 0 : index
    %c0_93 = arith.constant 0 : index
    %c0_94 = arith.constant 0 : index
    %86 = vector.load %arg5[%c0_92, %c0_93, %c0_94] : memref<9x8x8xbf16, #tpu.memory_space<vmem>>, vector<1x8x8xbf16>
    %87 = vector.shape_cast %86 : vector<1x8x8xbf16> to vector<8x8xbf16>
    %cst_95 = arith.constant dense<0.000000e+00> : vector<64x8xf32>
    %88 = tpu.matmul %85, %87, %cst_95 {dimension_numbers = #tpu.dot_dimension_numbers<[1], [0], [0], [1], [0, 0, 1, 1], [], []>} : vector<64x8xbf16>, vector<8x8xbf16>, vector<64x8xf32> -> vector<64x8xf32>
    %89 = arith.addf %83, %88 : vector<64x8xf32>
    %c0_96 = arith.constant 0 : index
    %c1_97 = arith.constant 1 : index
    %c0_98 = arith.constant 0 : index
    %90 = vector.load %arg10[%c0_96, %c1_97, %c0_98] : memref<10x10x8xbf16, #tpu.memory_space<vmem>>, vector<8x8x8xbf16>
    %91 = vector.shape_cast %90 : vector<8x8x8xbf16> to vector<64x8xbf16>
    %c1_99 = arith.constant 1 : index
    %c0_100 = arith.constant 0 : index
    %c0_101 = arith.constant 0 : index
    %92 = vector.load %arg5[%c1_99, %c0_100, %c0_101] : memref<9x8x8xbf16, #tpu.memory_space<vmem>>, vector<1x8x8xbf16>
    %93 = vector.shape_cast %92 : vector<1x8x8xbf16> to vector<8x8xbf16>
    %cst_102 = arith.constant dense<0.000000e+00> : vector<64x8xf32>
    %94 = tpu.matmul %91, %93, %cst_102 {dimension_numbers = #tpu.dot_dimension_numbers<[1], [0], [0], [1], [0, 0, 1, 1], [], []>} : vector<64x8xbf16>, vector<8x8xbf16>, vector<64x8xf32> -> vector<64x8xf32>
    %95 = arith.addf %89, %94 : vector<64x8xf32>
    %c0_103 = arith.constant 0 : index
    %c2_104 = arith.constant 2 : index
    %c0_105 = arith.constant 0 : index
    %96 = vector.load %arg10[%c0_103, %c2_104, %c0_105] : memref<10x10x8xbf16, #tpu.memory_space<vmem>>, vector<8x8x8xbf16>
    %97 = vector.shape_cast %96 : vector<8x8x8xbf16> to vector<64x8xbf16>
    %c2_106 = arith.constant 2 : index
    %c0_107 = arith.constant 0 : index
    %c0_108 = arith.constant 0 : index
    %98 = vector.load %arg5[%c2_106, %c0_107, %c0_108] : memref<9x8x8xbf16, #tpu.memory_space<vmem>>, vector<1x8x8xbf16>
    %99 = vector.shape_cast %98 : vector<1x8x8xbf16> to vector<8x8xbf16>
    %cst_109 = arith.constant dense<0.000000e+00> : vector<64x8xf32>
    %100 = tpu.matmul %97, %99, %cst_109 {dimension_numbers = #tpu.dot_dimension_numbers<[1], [0], [0], [1], [0, 0, 1, 1], [], []>} : vector<64x8xbf16>, vector<8x8xbf16>, vector<64x8xf32> -> vector<64x8xf32>
    %101 = arith.addf %95, %100 : vector<64x8xf32>
    %c1_110 = arith.constant 1 : index
    %c0_111 = arith.constant 0 : index
    %c0_112 = arith.constant 0 : index
    %102 = vector.load %arg10[%c1_110, %c0_111, %c0_112] : memref<10x10x8xbf16, #tpu.memory_space<vmem>>, vector<8x8x8xbf16>
    %103 = vector.shape_cast %102 : vector<8x8x8xbf16> to vector<64x8xbf16>
    %c3_113 = arith.constant 3 : index
    %c0_114 = arith.constant 0 : index
    %c0_115 = arith.constant 0 : index
    %104 = vector.load %arg5[%c3_113, %c0_114, %c0_115] : memref<9x8x8xbf16, #tpu.memory_space<vmem>>, vector<1x8x8xbf16>
    %105 = vector.shape_cast %104 : vector<1x8x8xbf16> to vector<8x8xbf16>
    %cst_116 = arith.constant dense<0.000000e+00> : vector<64x8xf32>
    %106 = tpu.matmul %103, %105, %cst_116 {dimension_numbers = #tpu.dot_dimension_numbers<[1], [0], [0], [1], [0, 0, 1, 1], [], []>} : vector<64x8xbf16>, vector<8x8xbf16>, vector<64x8xf32> -> vector<64x8xf32>
    %107 = arith.addf %101, %106 : vector<64x8xf32>
    %c1_117 = arith.constant 1 : index
    %c1_118 = arith.constant 1 : index
    %c0_119 = arith.constant 0 : index
    %108 = vector.load %arg10[%c1_117, %c1_118, %c0_119] : memref<10x10x8xbf16, #tpu.memory_space<vmem>>, vector<8x8x8xbf16>
    %109 = vector.shape_cast %108 : vector<8x8x8xbf16> to vector<64x8xbf16>
    %c4_120 = arith.constant 4 : index
    %c0_121 = arith.constant 0 : index
    %c0_122 = arith.constant 0 : index
    %110 = vector.load %arg5[%c4_120, %c0_121, %c0_122] : memref<9x8x8xbf16, #tpu.memory_space<vmem>>, vector<1x8x8xbf16>
    %111 = vector.shape_cast %110 : vector<1x8x8xbf16> to vector<8x8xbf16>
    %cst_123 = arith.constant dense<0.000000e+00> : vector<64x8xf32>
    %112 = tpu.matmul %109, %111, %cst_123 {dimension_numbers = #tpu.dot_dimension_numbers<[1], [0], [0], [1], [0, 0, 1, 1], [], []>} : vector<64x8xbf16>, vector<8x8xbf16>, vector<64x8xf32> -> vector<64x8xf32>
    %113 = arith.addf %107, %112 : vector<64x8xf32>
    %c1_124 = arith.constant 1 : index
    %c2_125 = arith.constant 2 : index
    %c0_126 = arith.constant 0 : index
    %114 = vector.load %arg10[%c1_124, %c2_125, %c0_126] : memref<10x10x8xbf16, #tpu.memory_space<vmem>>, vector<8x8x8xbf16>
    %115 = vector.shape_cast %114 : vector<8x8x8xbf16> to vector<64x8xbf16>
    %c5_127 = arith.constant 5 : index
    %c0_128 = arith.constant 0 : index
    %c0_129 = arith.constant 0 : index
    %116 = vector.load %arg5[%c5_127, %c0_128, %c0_129] : memref<9x8x8xbf16, #tpu.memory_space<vmem>>, vector<1x8x8xbf16>
    %117 = vector.shape_cast %116 : vector<1x8x8xbf16> to vector<8x8xbf16>
    %cst_130 = arith.constant dense<0.000000e+00> : vector<64x8xf32>
    %118 = tpu.matmul %115, %117, %cst_130 {dimension_numbers = #tpu.dot_dimension_numbers<[1], [0], [0], [1], [0, 0, 1, 1], [], []>} : vector<64x8xbf16>, vector<8x8xbf16>, vector<64x8xf32> -> vector<64x8xf32>
    %119 = arith.addf %113, %118 : vector<64x8xf32>
    %c2_131 = arith.constant 2 : index
    %c0_132 = arith.constant 0 : index
    %c0_133 = arith.constant 0 : index
    %120 = vector.load %arg10[%c2_131, %c0_132, %c0_133] : memref<10x10x8xbf16, #tpu.memory_space<vmem>>, vector<8x8x8xbf16>
    %121 = vector.shape_cast %120 : vector<8x8x8xbf16> to vector<64x8xbf16>
    %c6_134 = arith.constant 6 : index
    %c0_135 = arith.constant 0 : index
    %c0_136 = arith.constant 0 : index
    %122 = vector.load %arg5[%c6_134, %c0_135, %c0_136] : memref<9x8x8xbf16, #tpu.memory_space<vmem>>, vector<1x8x8xbf16>
    %123 = vector.shape_cast %122 : vector<1x8x8xbf16> to vector<8x8xbf16>
    %cst_137 = arith.constant dense<0.000000e+00> : vector<64x8xf32>
    %124 = tpu.matmul %121, %123, %cst_137 {dimension_numbers = #tpu.dot_dimension_numbers<[1], [0], [0], [1], [0, 0, 1, 1], [], []>} : vector<64x8xbf16>, vector<8x8xbf16>, vector<64x8xf32> -> vector<64x8xf32>
    %125 = arith.addf %119, %124 : vector<64x8xf32>
    %c2_138 = arith.constant 2 : index
    %c1_139 = arith.constant 1 : index
    %c0_140 = arith.constant 0 : index
    %126 = vector.load %arg10[%c2_138, %c1_139, %c0_140] : memref<10x10x8xbf16, #tpu.memory_space<vmem>>, vector<8x8x8xbf16>
    %127 = vector.shape_cast %126 : vector<8x8x8xbf16> to vector<64x8xbf16>
    %c7_141 = arith.constant 7 : index
    %c0_142 = arith.constant 0 : index
    %c0_143 = arith.constant 0 : index
    %128 = vector.load %arg5[%c7_141, %c0_142, %c0_143] : memref<9x8x8xbf16, #tpu.memory_space<vmem>>, vector<1x8x8xbf16>
    %129 = vector.shape_cast %128 : vector<1x8x8xbf16> to vector<8x8xbf16>
    %cst_144 = arith.constant dense<0.000000e+00> : vector<64x8xf32>
    %130 = tpu.matmul %127, %129, %cst_144 {dimension_numbers = #tpu.dot_dimension_numbers<[1], [0], [0], [1], [0, 0, 1, 1], [], []>} : vector<64x8xbf16>, vector<8x8xbf16>, vector<64x8xf32> -> vector<64x8xf32>
    %131 = arith.addf %125, %130 : vector<64x8xf32>
    %c2_145 = arith.constant 2 : index
    %c2_146 = arith.constant 2 : index
    %c0_147 = arith.constant 0 : index
    %132 = vector.load %arg10[%c2_145, %c2_146, %c0_147] : memref<10x10x8xbf16, #tpu.memory_space<vmem>>, vector<8x8x8xbf16>
    %133 = vector.shape_cast %132 : vector<8x8x8xbf16> to vector<64x8xbf16>
    %c8_148 = arith.constant 8 : index
    %c0_149 = arith.constant 0 : index
    %c0_150 = arith.constant 0 : index
    %134 = vector.load %arg5[%c8_148, %c0_149, %c0_150] : memref<9x8x8xbf16, #tpu.memory_space<vmem>>, vector<1x8x8xbf16>
    %135 = vector.shape_cast %134 : vector<1x8x8xbf16> to vector<8x8xbf16>
    %cst_151 = arith.constant dense<0.000000e+00> : vector<64x8xf32>
    %136 = tpu.matmul %133, %135, %cst_151 {dimension_numbers = #tpu.dot_dimension_numbers<[1], [0], [0], [1], [0, 0, 1, 1], [], []>} : vector<64x8xbf16>, vector<8x8xbf16>, vector<64x8xf32> -> vector<64x8xf32>
    %137 = arith.addf %131, %136 : vector<64x8xf32>
    %138 = vector.broadcast %81 : vector<1x8xf32> to vector<64x8xf32>
    %139 = arith.mulf %137, %138 : vector<64x8xf32>
    %140 = vector.broadcast %82 : vector<1x8xf32> to vector<64x8xf32>
    %141 = arith.addf %139, %140 : vector<64x8xf32>
    %c0_152 = arith.constant 0 : index
    %c1_153 = arith.constant 1 : index
    %c1_154 = arith.constant 1 : index
    %c0_155 = arith.constant 0 : index
    %142 = vector.load %arg1[%c0_152, %c1_153, %c1_154, %c0_155] : memref<1x10x10x4xbf16, #tpu.memory_space<vmem>>, vector<1x8x8x4xbf16>
    %143 = vector.shape_cast %142 : vector<1x8x8x4xbf16> to vector<8x8x4xbf16>
    %144 = vector.shape_cast %143 : vector<8x8x4xbf16> to vector<64x4xbf16>
    %c0_156 = arith.constant 0 : index
    %c0_157 = arith.constant 0 : index
    %145 = vector.load %arg8[%c0_156, %c0_157] : memref<4x8xbf16, #tpu.memory_space<vmem>>, vector<4x8xbf16>
    %cst_158 = arith.constant dense<0.000000e+00> : vector<64x8xf32>
    %146 = tpu.matmul %144, %145, %cst_158 {dimension_numbers = #tpu.dot_dimension_numbers<[1], [0], [0], [1], [0, 0, 1, 1], [], []>} : vector<64x4xbf16>, vector<4x8xbf16>, vector<64x8xf32> -> vector<64x8xf32>
    %147 = arith.addf %141, %146 : vector<64x8xf32>
    %cst_159 = arith.constant 0.000000e+00 : f32
    %148 = vector.broadcast %cst_159 : f32 to vector<64x8xf32>
    %149 = arith.maximumf %147, %148 : vector<64x8xf32>
    %c0_160 = arith.constant 0 : index
    %c0_161 = arith.constant 0 : index
    %c0_162 = arith.constant 0 : index
    %150 = vector.load %arg9[%c0_160, %c0_161, %c0_162] : memref<1x64x8xf32, #tpu.memory_space<vmem>>, vector<1x64x8xf32>
    %151 = vector.shape_cast %150 : vector<1x64x8xf32> to vector<64x8xf32>
    %152 = vector.shape_cast %149 : vector<64x8xf32> to vector<1x64x8xf32>
    tpu.vector_store %arg9[%c0_160, %c0_161, %c0_162], %152 {strides = array<i32>} : memref<1x64x8xf32, #tpu.memory_space<vmem>>, vector<1x64x8xf32>,
    return
  }
  func.func @transform_0(%arg0: i32) -> (i32, i32, i32, i32) {
    %c0_i32 = arith.constant 0 : i32
    %c0_i32_0 = arith.constant 0 : i32
    %c0_i32_1 = arith.constant 0 : i32
    %c0_i32_2 = arith.constant 0 : i32
    return %arg0, %c0_i32, %c0_i32_0, %c0_i32_1 : i32, i32, i32, i32
  }
  func.func @transform_1(%arg0: i32) -> (i32, i32, i32) {
    %c0_i32 = arith.constant 0 : i32
    %c0_i32_0 = arith.constant 0 : i32
    %c0_i32_1 = arith.constant 0 : i32
    %c0_i32_2 = arith.constant 0 : i32
    return %c0_i32, %c0_i32_0, %c0_i32_1 : i32, i32, i32
  }
  func.func @transform_2(%arg0: i32) -> (i32, i32) {
    %c0_i32 = arith.constant 0 : i32
    %c0_i32_0 = arith.constant 0 : i32
    %c0_i32_1 = arith.constant 0 : i32
    return %c0_i32, %c0_i32_0 : i32, i32
  }
  func.func @transform_3(%arg0: i32) -> (i32, i32) {
    %c0_i32 = arith.constant 0 : i32
    %c0_i32_0 = arith.constant 0 : i32
    %c0_i32_1 = arith.constant 0 : i32
    return %c0_i32, %c0_i32_0 : i32, i32
  }
  func.func @transform_4(%arg0: i32) -> (i32, i32, i32) {
    %c0_i32 = arith.constant 0 : i32
    %c0_i32_0 = arith.constant 0 : i32
    %c0_i32_1 = arith.constant 0 : i32
    %c0_i32_2 = arith.constant 0 : i32
    return %c0_i32, %c0_i32_0, %c0_i32_1 : i32, i32, i32
  }
  func.func @transform_5(%arg0: i32) -> (i32, i32) {
    %c0_i32 = arith.constant 0 : i32
    %c0_i32_0 = arith.constant 0 : i32
    %c0_i32_1 = arith.constant 0 : i32
    return %c0_i32, %c0_i32_0 : i32, i32
  }
  func.func @transform_6(%arg0: i32) -> (i32, i32) {
    %c0_i32 = arith.constant 0 : i32
    %c0_i32_0 = arith.constant 0 : i32
    %c0_i32_1 = arith.constant 0 : i32
    return %c0_i32, %c0_i32_0 : i32, i32
  }
  func.func @transform_7(%arg0: i32) -> (i32, i32) {
    %c0_i32 = arith.constant 0 : i32
    %c0_i32_0 = arith.constant 0 : i32
    %c0_i32_1 = arith.constant 0 : i32
    return %c0_i32, %c0_i32_0 : i32, i32
  }
  func.func @transform_8(%arg0: i32) -> (i32, i32, i32) {
    %c0_i32 = arith.constant 0 : i32
    %c0_i32_0 = arith.constant 0 : i32
    %c0_i32_1 = arith.constant 0 : i32
    return %arg0, %c0_i32, %c0_i32_0 : i32, i32, i32
  }
}

</mosaic_0001>

<llo_original>
// kernel: tpu_custom_call.1
$region0: #{tpu_custom_call.1}
  #allocation0 [shape = 'u32[]', space=smem, size = 0x4, offset = 0x4, fixed_abs, tag = 'smem constant byte address 0x4 - core index']
  #allocation1 [shape = 'u32[144,128]{1,0:T(1,128)}', space=vmem, size = 0x12000, scoped, tag = 'internal scratch']
  #allocation2 [shape = 'bf16[10,10,8]{2,1,0:T(8,128)(2,1)}', space=vmem, size = 0xa000, scoped, tag = 'scratch operand']
  %s0 = inlined_call_operand.vmem [shape: bf16[2,10,10,4], index: 0, kind: input, shape index: {}]
  %s1 = inlined_call_operand.vmem [shape: bf16[9,4,8], index: 1, kind: input, shape index: {}]
  %s2 = inlined_call_operand.vmem [shape: f32[1,8], index: 2, kind: input, shape index: {}]
  %s3 = inlined_call_operand.vmem [shape: f32[1,8], index: 3, kind: input, shape index: {}]
  %s4 = inlined_call_operand.vmem [shape: bf16[9,8,8], index: 4, kind: input, shape index: {}]
  %s5 = inlined_call_operand.vmem [shape: f32[1,8], index: 5, kind: input, shape index: {}]
  %s6 = inlined_call_operand.vmem [shape: f32[1,8], index: 6, kind: input, shape index: {}]
  %s7 = inlined_call_operand.vmem [shape: bf16[4,8], index: 7, kind: input, shape index: {}]
  %s8 = inlined_call_operand.vmem [shape: f32[2,64,8], index: 8, kind: output, shape index: {}]
  %s9 = sld [smem:[#allocation0]]
  $region65: #{tpu_custom_call.1} parent=0
    _
  %s11 = ssub.s32 1, %s9
  %s12 = scalar_select 0, %s11, %s9
  loop: start=0, step=1, limit=4
  $region2: #{tpu_custom_call.1} parent=0 // loop_pre_header
    _
  $region3: #{tpu_custom_call.1} parent=0 // loop_header
    %s14 = sphi 0, %s18
    %p15 = scmp.ge.s32.totalorder %s14, 4
    %s24 = sphi 0, %s26
    %s27 = sphi 0, %s24
    %s28 = sphi 0, %s27
    %s44 = sphi 0, %s28
    %s48 = sphi 0, %s48
    %s50 = sphi 0, %s48
    %s51 = sphi 0, %s50
    %s65 = sphi 0, %s51
    %s69 = sphi 0, %s69
    %s71 = sphi 0, %s69
    %s72 = sphi 0, %s71
    %s86 = sphi 0, %s72
    %s90 = sphi 0, %s90
    %s92 = sphi 0, %s90
    %s93 = sphi 0, %s92
    %s107 = sphi 0, %s93
    %s111 = sphi 0, %s111
    %s113 = sphi 0, %s111
    %s114 = sphi 0, %s113
    %s128 = sphi 0, %s114
    %s132 = sphi 0, %s132
    %s134 = sphi 0, %s132
    %s135 = sphi 0, %s134
    %s149 = sphi 0, %s135
    %s153 = sphi 0, %s153
    %s155 = sphi 0, %s153
    %s156 = sphi 0, %s155
    %s170 = sphi 0, %s156
    %s174 = sphi 0, %s174
    %s176 = sphi 0, %s174
    %s177 = sphi 0, %s176
    %s191 = sphi 0, %s177
    %s197 = sphi 0, %s199
    %s200 = sphi 0, %s197
    %s201 = sphi 0, %s200
    %s217 = sphi 0, %s201
  $region4: #{tpu_custom_call.1} parent=0 // loop_header_branch
    %17 = sbr.rel (%p15) target = $region8
  $region5: #{tpu_custom_call.1} parent=0 // loop_body
    %s19 = ssub.s32 %s14, 1
    %s20 = ssub.s32 %s14, 2
    %s21 = sadd.s32 %s14, 1
    %s22 = ssub.s32 %s14, %s21
    %p23 = scmp.eq.s32.totalorder %s22, 0
    %s25 = sadd.s32 %s24, 1
    %s26 = scalar_select %p23, %s24, %s25
    %p29 = pneg %p23
    %p30 = scmp.eq.s32.totalorder %s14, 1
    %p31 = por %p29, %p30
    %p32 = scmp.ne.s32.totalorder %s24, %s27
    %p33 = scmp.eq.s32.totalorder %s14, 0
    %p34 = por %p32, %p33
    %p35 = scmp.ne.s32.totalorder %s24, %s27
    %p36 = scmp.eq.s32.totalorder %s19, 1
    %p37 = por %p35, %p36
    %p38 = scmp.ne.s32.totalorder %s27, %s28
    %p39 = scmp.eq.s32.totalorder %s19, 0
    %p40 = por %p38, %p39
    %p41 = scmp.ne.s32.totalorder %s27, %s28
    %p42 = scmp.eq.s32.totalorder %s20, 1
    %p43 = por %p41, %p42
    %p45 = scmp.ne.s32.totalorder %s28, %s44
    %p46 = scmp.eq.s32.totalorder %s20, 0
    %p47 = por %p45, %p46
    %s49 = sadd.s32 %s48, 1
    %p52 = scmp.eq.s32.totalorder %s14, 1
    %p53 = scmp.ne.s32.totalorder %s48, %s50
    %p54 = scmp.eq.s32.totalorder %s14, 0
    %p55 = por %p53, %p54
    %p56 = scmp.ne.s32.totalorder %s48, %s50
    %p57 = scmp.eq.s32.totalorder %s19, 1
    %p58 = por %p56, %p57
    %p59 = scmp.ne.s32.totalorder %s50, %s51
    %p60 = scmp.eq.s32.totalorder %s19, 0
    %p61 = por %p59, %p60
    %p62 = scmp.ne.s32.totalorder %s50, %s51
    %p63 = scmp.eq.s32.totalorder %s20, 1
    %p64 = por %p62, %p63
    %p66 = scmp.ne.s32.totalorder %s51, %s65
    %p67 = scmp.eq.s32.totalorder %s20, 0
    %p68 = por %p66, %p67
    %s70 = sadd.s32 %s69, 1
    %p73 = scmp.eq.s32.totalorder %s14, 1
    %p74 = scmp.ne.s32.totalorder %s69, %s71
    %p75 = scmp.eq.s32.totalorder %s14, 0
    %p76 = por %p74, %p75
    %p77 = scmp.ne.s32.totalorder %s69, %s71
    %p78 = scmp.eq.s32.totalorder %s19, 1
    %p79 = por %p77, %p78
    %p80 = scmp.ne.s32.totalorder %s71, %s72
    %p81 = scmp.eq.s32.totalorder %s19, 0
    %p82 = por %p80, %p81
    %p83 = scmp.ne.s32.totalorder %s71, %s72
    %p84 = scmp.eq.s32.totalorder %s20, 1
    %p85 = por %p83, %p84
    %p87 = scmp.ne.s32.totalorder %s72, %s86
    %p88 = scmp.eq.s32.totalorder %s20, 0
    %p89 = por %p87, %p88
    %s91 = sadd.s32 %s90, 1
    %p94 = scmp.eq.s32.totalorder %s14, 1
    %p95 = scmp.ne.s32.totalorder %s90, %s92
    %p96 = scmp.eq.s32.totalorder %s14, 0
    %p97 = por %p95, %p96
    %p98 = scmp.ne.s32.totalorder %s90, %s92
    %p99 = scmp.eq.s32.totalorder %s19, 1
    %p100 = por %p98, %p99
    %p101 = scmp.ne.s32.totalorder %s92, %s93
    %p102 = scmp.eq.s32.totalorder %s19, 0
    %p103 = por %p101, %p102
    %p104 = scmp.ne.s32.totalorder %s92, %s93
    %p105 = scmp.eq.s32.totalorder %s20, 1
    %p106 = por %p104, %p105
    %p108 = scmp.ne.s32.totalorder %s93, %s107
    %p109 = scmp.eq.s32.totalorder %s20, 0
    %p110 = por %p108, %p109
    %s112 = sadd.s32 %s111, 1
    %p115 = scmp.eq.s32.totalorder %s14, 1
    %p116 = scmp.ne.s32.totalorder %s111, %s113
    %p117 = scmp.eq.s32.totalorder %s14, 0
    %p118 = por %p116, %p117
    %p119 = scmp.ne.s32.totalorder %s111, %s113
    %p120 = scmp.eq.s32.totalorder %s19, 1
    %p121 = por %p119, %p120
    %p122 = scmp.ne.s32.totalorder %s113, %s114
    %p123 = scmp.eq.s32.totalorder %s19, 0
    %p124 = por %p122, %p123
    %p125 = scmp.ne.s32.totalorder %s113, %s114
    %p126 = scmp.eq.s32.totalorder %s20, 1
    %p127 = por %p125, %p126
    %p129 = scmp.ne.s32.totalorder %s114, %s128
    %p130 = scmp.eq.s32.totalorder %s20, 0
    %p131 = por %p129, %p130
    %s133 = sadd.s32 %s132, 1
    %p136 = scmp.eq.s32.totalorder %s14, 1
    %p137 = scmp.ne.s32.totalorder %s132, %s134
    %p138 = scmp.eq.s32.totalorder %s14, 0
    %p139 = por %p137, %p138
    %p140 = scmp.ne.s32.totalorder %s132, %s134
    %p141 = scmp.eq.s32.totalorder %s19, 1
    %p142 = por %p140, %p141
    %p143 = scmp.ne.s32.totalorder %s134, %s135
    %p144 = scmp.eq.s32.totalorder %s19, 0
    %p145 = por %p143, %p144
    %p146 = scmp.ne.s32.totalorder %s134, %s135
    %p147 = scmp.eq.s32.totalorder %s20, 1
    %p148 = por %p146, %p147
    %p150 = scmp.ne.s32.totalorder %s135, %s149
    %p151 = scmp.eq.s32.totalorder %s20, 0
    %p152 = por %p150, %p151
    %s154 = sadd.s32 %s153, 1
    %p157 = scmp.eq.s32.totalorder %s14, 1
    %p158 = scmp.ne.s32.totalorder %s153, %s155
    %p159 = scmp.eq.s32.totalorder %s14, 0
    %p160 = por %p158, %p159
    %p161 = scmp.ne.s32.totalorder %s153, %s155
    %p162 = scmp.eq.s32.totalorder %s19, 1
    %p163 = por %p161, %p162
    %p164 = scmp.ne.s32.totalorder %s155, %s156
    %p165 = scmp.eq.s32.totalorder %s19, 0
    %p166 = por %p164, %p165
    %p167 = scmp.ne.s32.totalorder %s155, %s156
    %p168 = scmp.eq.s32.totalorder %s20, 1
    %p169 = por %p167, %p168
    %p171 = scmp.ne.s32.totalorder %s156, %s170
    %p172 = scmp.eq.s32.totalorder %s20, 0
    %p173 = por %p171, %p172
    %s175 = sadd.s32 %s174, 1
    %p178 = scmp.eq.s32.totalorder %s14, 1
    %p179 = scmp.ne.s32.totalorder %s174, %s176
    %p180 = scmp.eq.s32.totalorder %s14, 0
    %p181 = por %p179, %p180
    %p182 = scmp.ne.s32.totalorder %s174, %s176
    %p183 = scmp.eq.s32.totalorder %s19, 1
    %p184 = por %p182, %p183
    %p185 = scmp.ne.s32.totalorder %s176, %s177
    %p186 = scmp.eq.s32.totalorder %s19, 0
    %p187 = por %p185, %p186
    %p188 = scmp.ne.s32.totalorder %s176, %s177
    %p189 = scmp.eq.s32.totalorder %s20, 1
    %p190 = por %p188, %p189
    %p192 = scmp.ne.s32.totalorder %s177, %s191
    %p193 = scmp.eq.s32.totalorder %s20, 0
    %p194 = por %p192, %p193
    %s195 = ssub.s32 %s14, %s21
    %p196 = scmp.eq.s32.totalorder %s195, 0
    %s198 = sadd.s32 %s197, 1
    %s199 = scalar_select %p196, %s197, %s198
    %p202 = pneg %p196
    %p203 = scmp.eq.s32.totalorder %s14, 1
    %p204 = por %p202, %p203
    %p205 = scmp.ne.s32.totalorder %s197, %s200
    %p206 = scmp.eq.s32.totalorder %s14, 0
    %p207 = por %p205, %p206
    %p208 = scmp.ne.s32.totalorder %s197, %s200
    %p209 = scmp.eq.s32.totalorder %s19, 1
    %p210 = por %p208, %p209
    %p211 = scmp.ne.s32.totalorder %s200, %s201
    %p212 = scmp.eq.s32.totalorder %s19, 0
    %p213 = por %p211, %p212
    %p214 = scmp.ne.s32.totalorder %s200, %s201
    %p215 = scmp.eq.s32.totalorder %s20, 1
    %p216 = por %p214, %p215
    %p218 = scmp.ne.s32.totalorder %s201, %s217
    %p219 = scmp.eq.s32.totalorder %s20, 0
    %p220 = por %p218, %p219
    %p221 = scmp.le.s32.totalorder 1, %s14
    %p222 = scmp.lt.s32.totalorder %s14, 3
    %p223 = pnand %p221, %p222
    %p224 = pneg %p223
    // Predicated region
    $region9: #{tpu_custom_call.1} parent=5 // pred_check
      _
    $region10: #{tpu_custom_call.1} parent=5 // pred_check_branch
      %226 = sbr.rel (%p223) target = $region12
    $region11: #{tpu_custom_call.1} parent=5 // pred_region
      %s227 = ssub.s32 %s14, 1
      // Predicated region
      $region13: #{tpu_custom_call.1} parent=11 // pred_check
        %p228 = pneg %p61
      $region14: #{tpu_custom_call.1} parent=11 // pred_check_branch
        %230 = sbr.rel (%p228) target = $region16
      $region15: #{tpu_custom_call.1} parent=11 // pred_region
        _
      $region16: #{tpu_custom_call.1} parent=11 // pred_fallthru
        _
      // Predicated region
      $region17: #{tpu_custom_call.1} parent=11 // pred_check
        %p231 = pneg %p82
      $region18: #{tpu_custom_call.1} parent=11 // pred_check_branch
        %233 = sbr.rel (%p231) target = $region20
      $region19: #{tpu_custom_call.1} parent=11 // pred_region
        _
      $region20: #{tpu_custom_call.1} parent=11 // pred_fallthru
        _
      // Predicated region
      $region21: #{tpu_custom_call.1} parent=11 // pred_check
        %p234 = pneg %p103
      $region22: #{tpu_custom_call.1} parent=11 // pred_check_branch
        %236 = sbr.rel (%p234) target = $region24
      $region23: #{tpu_custom_call.1} parent=11 // pred_region
        _
      $region24: #{tpu_custom_call.1} parent=11 // pred_fallthru
        _
      // Predicated region
      $region25: #{tpu_custom_call.1} parent=11 // pred_check
        %p237 = pneg %p124
      $region26: #{tpu_custom_call.1} parent=11 // pred_check_branch
        %239 = sbr.rel (%p237) target = $region28
      $region27: #{tpu_custom_call.1} parent=11 // pred_region
        _
      $region28: #{tpu_custom_call.1} parent=11 // pred_fallthru
        _
      // Predicated region
      $region29: #{tpu_custom_call.1} parent=11 // pred_check
        %p240 = pneg %p145
      $region30: #{tpu_custom_call.1} parent=11 // pred_check_branch
        %242 = sbr.rel (%p240) target = $region32
      $region31: #{tpu_custom_call.1} parent=11 // pred_region
        _
      $region32: #{tpu_custom_call.1} parent=11 // pred_fallthru
        _
      // Predicated region
      $region33: #{tpu_custom_call.1} parent=11 // pred_check
        %p243 = pneg %p166
      $region34: #{tpu_custom_call.1} parent=11 // pred_check_branch
        %245 = sbr.rel (%p243) target = $region36
      $region35: #{tpu_custom_call.1} parent=11 // pred_region
        _
      $region36: #{tpu_custom_call.1} parent=11 // pred_fallthru
        _
      // Predicated region
      $region37: #{tpu_custom_call.1} parent=11 // pred_check
        %p246 = pneg %p187
      $region38: #{tpu_custom_call.1} parent=11 // pred_check_branch
        %248 = sbr.rel (%p246) target = $region40
      $region39: #{tpu_custom_call.1} parent=11 // pred_region
        _
      $region40: #{tpu_custom_call.1} parent=11 // pred_fallthru
        _
    $region12: #{tpu_custom_call.1} parent=5 // pred_fallthru
      _
    %p249 = scmp.lt.s32.totalorder %s14, 2
    // Predicated region
    $region41: #{tpu_custom_call.1} parent=5 // pred_check
      %p250 = pneg %p249
    $region42: #{tpu_custom_call.1} parent=5 // pred_check_branch
      %252 = sbr.rel (%p250) target = $region44
    $region43: #{tpu_custom_call.1} parent=5 // pred_region
      // Predicated region
      $region45: #{tpu_custom_call.1} parent=43 // pred_check
        %p253 = pneg %p34
      $region46: #{tpu_custom_call.1} parent=43 // pred_check_branch
        %255 = sbr.rel (%p253) target = $region48
      $region47: #{tpu_custom_call.1} parent=43 // pred_region
        %p256 = scmp.lt.s32.totalorder %s14, 1
        %s257 = scalar_select %p256, %s14, 1
        %s258 = smul.addr %s257, 20
        %s259 = smul.addr %s258, 4
        %s260 = scalar_lea.vmem %s0, %s259
      $region48: #{tpu_custom_call.1} parent=43 // pred_fallthru
        _
    $region44: #{tpu_custom_call.1} parent=5 // pred_fallthru
      _
    %p261 = scmp.le.s32.totalorder 1, %s14
    %p262 = scmp.lt.s32.totalorder %s14, 3
    %p263 = pnand %p261, %p262
    %p264 = pneg %p263
    // Predicated region
    $region49: #{tpu_custom_call.1} parent=5 // pred_check
      _
    $region50: #{tpu_custom_call.1} parent=5 // pred_check_branch
      %266 = sbr.rel (%p263) target = $region52
    $region51: #{tpu_custom_call.1} parent=5 // pred_region
      %s267 = ssub.s32 %s14, 1
      %p268 = scmp.lt.s32.totalorder %s19, 1
      %s269 = scalar_select %p268, %s19, 1
      %s270 = smul.addr %s269, 20
      %s271 = smul.addr %s270, 4
      %s272 = scalar_lea.vmem %s0, %s271
      %p273 = pneg %p40
      %p274 = pneg %p37
      %p275 = pneg %p61
      %p276 = pneg %p58
      %p277 = pneg %p82
      %p278 = pneg %p79
      %p279 = pneg %p103
      %p280 = pneg %p100
      %p281 = pneg %p124
      %p282 = pneg %p121
      %p283 = pneg %p145
      %p284 = pneg %p142
      %p285 = pneg %p166
      %p286 = pneg %p163
      %p287 = pneg %p187
      %p288 = pneg %p184
      %p289 = pneg %p213
      %p290 = pneg %p210
      %p291 = scmp.lt.s32.totalorder %s19, 1
      %s292 = scalar_select %p291, %s19, 1
      %s293 = smul.addr %s292, 8
      %s294 = smul.addr %s293, 8
      %s295 = scalar_lea.vmem %s8, %s294
      %p296 = scmp.lt.s32.totalorder %s19, 1
      %s297 = scalar_select %p296, %s19, 1
      %s298 = smul.addr %s297, 20
      %s299 = smul.addr %s298, 4
      %s300 = scalar_lea.vmem %s0, %s299
      %p301 = scmp.lt.s32.totalorder %s19, 1
      %s302 = scalar_select %p301, %s19, 1
      %s303 = smul.addr %s302, 8
      %s304 = smul.addr %s303, 8
      %s305 = scalar_lea.vmem %s8, %s304
      %vm307 = vcmask 60416
      %308 = vst.msk [vmem:[#allocation2] sm:$0xf] %vm307, 0
      %vm309 = vcmask 57344
      %310 = vst.msk [vmem:[#allocation2 + $0x4] sm:$0x1] %vm309, 0
      %s311 = scalar_lea.vmem [#allocation2], 72
      %312 = vst.msk [vmem:[%s311] sm:$0xf] %vm307, 0
      %313 = vst.msk [vmem:[%s311 + $0x4] sm:$0x1] %vm309, 0
      %vm314 = vcmask 57344
      %vm315 = vsmask.f32 256
      %vm316 = vmand %vm314, %vm315
      %v317 = vld [vmem:[#allocation2] sm:$0x1]
      %v318 = vsel %vm316, 0, %v317
      %319 = vst [vmem:[#allocation2] sm:$0x1] %v318
      %v320 = vld [vmem:[#allocation2 + $0x8] sm:$0x1]
      %v321 = vsel %vm316, 0, %v320
      %322 = vst [vmem:[#allocation2 + $0x8] sm:$0x1] %v321
      %v323 = vld [vmem:[#allocation2 + $0x10] sm:$0x1]
      %v324 = vsel %vm316, 0, %v323
      %325 = vst [vmem:[#allocation2 + $0x10] sm:$0x1] %v324
      %v326 = vld [vmem:[#allocation2 + $0x18] sm:$0x1]
      %v327 = vsel %vm316, 0, %v326
      %328 = vst [vmem:[#allocation2 + $0x18] sm:$0x1] %v327
      %v329 = vld [vmem:[#allocation2 + $0x20] sm:$0x1]
      %v330 = vsel %vm316, 0, %v329
      %331 = vst [vmem:[#allocation2 + $0x20] sm:$0x1] %v330
      %v332 = vld [vmem:[#allocation2 + $0x28] sm:$0x1]
      %v333 = vsel %vm316, 0, %v332
      %334 = vst [vmem:[#allocation2 + $0x28] sm:$0x1] %v333
      %v335 = vld [vmem:[#allocation2 + $0x30] sm:$0x1]
      %v336 = vsel %vm316, 0, %v335
      %337 = vst [vmem:[#allocation2 + $0x30] sm:$0x1] %v336
      %v338 = vld [vmem:[#allocation2 + $0x38] sm:$0x1]
      %v339 = vsel %vm316, 0, %v338
      %340 = vst [vmem:[#allocation2 + $0x38] sm:$0x1] %v339
      %v341 = vld [vmem:[#allocation2 + $0x40] sm:$0x1]
      %v342 = vsel %vm316, 0, %v341
      %343 = vst [vmem:[#allocation2 + $0x40] sm:$0x1] %v342
      %v344 = vld [vmem:[#allocation2 + $0x48] sm:$0x1]
      %v345 = vsel %vm316, 0, %v344
      %346 = vst [vmem:[#allocation2 + $0x48] sm:$0x1] %v345
      %vm347 = vsmask.f32 7938
      %vm348 = vmand %vm314, %vm347
      %v349 = vld [vmem:[#allocation2 + $0x4] sm:$0x1]
      %v350 = vsel %vm348, 0, %v349
      %351 = vst [vmem:[#allocation2 + $0x4] sm:$0x1] %v350
      %v352 = vld [vmem:[#allocation2 + $0xc] sm:$0x1]
      %v353 = vsel %vm348, 0, %v352
      %354 = vst [vmem:[#allocation2 + $0xc] sm:$0x1] %v353
      %v355 = vld [vmem:[#allocation2 + $0x14] sm:$0x1]
      %v356 = vsel %vm348, 0, %v355
      %357 = vst [vmem:[#allocation2 + $0x14] sm:$0x1] %v356
      %v358 = vld [vmem:[#allocation2 + $0x1c] sm:$0x1]
      %v359 = vsel %vm348, 0, %v358
      %360 = vst [vmem:[#allocation2 + $0x1c] sm:$0x1] %v359
      %v361 = vld [vmem:[#allocation2 + $0x24] sm:$0x1]
      %v362 = vsel %vm348, 0, %v361
      %363 = vst [vmem:[#allocation2 + $0x24] sm:$0x1] %v362
      %v364 = vld [vmem:[#allocation2 + $0x2c] sm:$0x1]
      %v365 = vsel %vm348, 0, %v364
      %366 = vst [vmem:[#allocation2 + $0x2c] sm:$0x1] %v365
      %v367 = vld [vmem:[#allocation2 + $0x34] sm:$0x1]
      %v368 = vsel %vm348, 0, %v367
      %369 = vst [vmem:[#allocation2 + $0x34] sm:$0x1] %v368
      %v370 = vld [vmem:[#allocation2 + $0x3c] sm:$0x1]
      %v371 = vsel %vm348, 0, %v370
      %372 = vst [vmem:[#allocation2 + $0x3c] sm:$0x1] %v371
      %v373 = vld [vmem:[#allocation2 + $0x44] sm:$0x1]
      %v374 = vsel %vm348, 0, %v373
      %375 = vst [vmem:[#allocation2 + $0x44] sm:$0x1] %v374
      %v376 = vld [vmem:[#allocation2 + $0x4c] sm:$0x1]
      %v377 = vsel %vm348, 0, %v376
      %378 = vst [vmem:[#allocation2 + $0x4c] sm:$0x1] %v377
      %v379 = vld [vmem:[%s2] sm:$0x1]
      %v380 = vld [vmem:[%s3] sm:$0x1]
      %v381 = vld [vmem:[%s300] sm:$0xf]
      %v382 = vld [vmem:[%s300 + $0x8] sm:$0xf]
      %v383 = vld [vmem:[%s300 + $0x10] sm:$0xf]
      %v384 = vld [vmem:[%s300 + $0x18] sm:$0xf]
      %v385 = vld [vmem:[%s300 + $0x20] sm:$0xf]
      %v386 = vld [vmem:[%s300 + $0x28] sm:$0xf]
      %v387 = vld [vmem:[%s300 + $0x30] sm:$0xf]
      %v388 = vld [vmem:[%s300 + $0x38] sm:$0xf]
      %v389 = vld [vmem:[%s1] sm:$0x3]
      %v390 = vld [vmem:[%s300 + $0x4] sm:$0x1]
      %v391 = vld [vmem:[%s300 + $0xc] sm:$0x1]
      %v392 = vld [vmem:[%s300 + $0x14] sm:$0x1]
      %v393 = vld [vmem:[%s300 + $0x1c] sm:$0x1]
      %v394 = vld [vmem:[%s300 + $0x24] sm:$0x1]
      %v395 = vld [vmem:[%s300 + $0x2c] sm:$0x1]
      %v396 = vld [vmem:[%s300 + $0x34] sm:$0x1]
      %v397 = vld [vmem:[%s300 + $0x3c] sm:$0x1]
      %vm398 = vsmask.f32 3328
      %vm399 = vsmask.f32 7440
      %vm400 = vmor %vm398, %vm399
      %v402 = vshrl.u32 %v381, 16
      %v404 = vrot.slane %v402, 4
      %v405 = vshll.u32 %v381, 16
      %v407 = vrot.slane %v405, 5
      %v408 = vor.u32 %v404, %v407
      %v409 = vrot.slane %v408, 4
      %v411 = vshll.u32 %v390, 16
      %v413 = vrot.slane %v411, 5
      %v414 = vsel %vm400, %v409, %v413
      %v416 = vshrl.u32 %v382, 16
      %v418 = vrot.slane %v416, 4
      %v419 = vshll.u32 %v382, 16
      %v421 = vrot.slane %v419, 5
      %v422 = vor.u32 %v418, %v421
      %v423 = vrot.slane %v422, 4
      %v425 = vshll.u32 %v391, 16
      %v427 = vrot.slane %v425, 5
      %v428 = vsel %vm400, %v423, %v427
      %v430 = vshrl.u32 %v383, 16
      %v432 = vrot.slane %v430, 4
      %v433 = vshll.u32 %v383, 16
      %v435 = vrot.slane %v433, 5
      %v436 = vor.u32 %v432, %v435
      %v437 = vrot.slane %v436, 4
      %v439 = vshll.u32 %v392, 16
      %v441 = vrot.slane %v439, 5
      %v442 = vsel %vm400, %v437, %v441
      %v444 = vshrl.u32 %v384, 16
      %v446 = vrot.slane %v444, 4
      %v447 = vshll.u32 %v384, 16
      %v449 = vrot.slane %v447, 5
      %v450 = vor.u32 %v446, %v449
      %v451 = vrot.slane %v450, 4
      %v453 = vshll.u32 %v393, 16
      %v455 = vrot.slane %v453, 5
      %v456 = vsel %vm400, %v451, %v455
      %v458 = vshrl.u32 %v385, 16
      %v460 = vrot.slane %v458, 4
      %v461 = vshll.u32 %v385, 16
      %v463 = vrot.slane %v461, 5
      %v464 = vor.u32 %v460, %v463
      %v465 = vrot.slane %v464, 4
      %v467 = vshll.u32 %v394, 16
      %v469 = vrot.slane %v467, 5
      %v470 = vsel %vm400, %v465, %v469
      %v472 = vshrl.u32 %v386, 16
      %v474 = vrot.slane %v472, 4
      %v475 = vshll.u32 %v386, 16
      %v477 = vrot.slane %v475, 5
      %v478 = vor.u32 %v474, %v477
      %v479 = vrot.slane %v478, 4
      %v481 = vshll.u32 %v395, 16
      %v483 = vrot.slane %v481, 5
      %v484 = vsel %vm400, %v479, %v483
      %v486 = vshrl.u32 %v387, 16
      %v488 = vrot.slane %v486, 4
      %v489 = vshll.u32 %v387, 16
      %v491 = vrot.slane %v489, 5
      %v492 = vor.u32 %v488, %v491
      %v493 = vrot.slane %v492, 4
      %v495 = vshll.u32 %v396, 16
      %v497 = vrot.slane %v495, 5
      %v498 = vsel %vm400, %v493, %v497
      %v500 = vshrl.u32 %v388, 16
      %v502 = vrot.slane %v500, 4
      %v503 = vshll.u32 %v388, 16
      %v505 = vrot.slane %v503, 5
      %v506 = vor.u32 %v502, %v505
      %v507 = vrot.slane %v506, 4
      %v509 = vshll.u32 %v397, 16
      %v511 = vrot.slane %v509, 5
      %v512 = vsel %vm400, %v507, %v511
      %s513 = scalar_lea.vmem %s1, 2
      %v514 = vld [vmem:[%s513] sm:$0x3]
      %v515 = vunpack.c.l.b16 %v414
      %v516 = vunpack.c.l.b16 %v428
      %v517 = vunpack.c.l.b16 %v442
      %v518 = vunpack.c.l.b16 %v456
      %v519 = vunpack.c.l.b16 %v470
      %v520 = vunpack.c.l.b16 %v484
      %v521 = vunpack.c.l.b16 %v498
      %v522 = vunpack.c.l.b16 %v512
      %v523 = vpack.c.b16 %v516, %v515
      %v524 = vpack.c.b16 %v518, %v517
      %v525 = vpack.c.b16 %v520, %v519
      %v526 = vpack.c.b16 %v522, %v521
      %vm527 = vcmask 31744
      %v529 = vsel %vm527, %v523, 0
      %v532 = vsel %vm527, %v524, 0
      %v535 = vsel %vm527, %v525, 0
      %v538 = vsel %vm527, %v526, 0
      %vm540 = vcmask 1041408
      %v542 = vsel %vm540, %v514, 0
      %544 = vmatprep.subr.bf16.mxu0 0
      %545 = vmatpush1.bf16.msra.mxu0 %v542
      %546 = vmatprep.subr.bf16.mxu0 0
      %547 = vmatpush1.bf16.msra.mxu0 0
      %548 = vmatprep.subr.bf16.mxu0 0
      %549 = vmatpush1.bf16.msra.mxu0 0
      %550 = vmatprep.subr.bf16.mxu0 0
      %551 = vmatpush1.bf16.msra.mxu0 0
      %552 = vmatprep.subr.bf16.mxu0 0
      %553 = vmatpush1.bf16.msra.mxu0 0
      %554 = vmatprep.subr.bf16.mxu0 0
      %555 = vmatpush1.bf16.msra.mxu0 0
      %556 = vmatprep.subr.bf16.mxu0 0
      %557 = vmatpush1.bf16.msra.mxu0 0
      %558 = vmatprep.subr.bf16.mxu0 0
      %559 = vmatpush1.bf16.msra.mxu0 0
      %560 = vmatprep.subr.bf16.mxu0 0
      %561 = vmatpush1.bf16.msra.mxu0 0
      %562 = vmatprep.subr.bf16.mxu0 0
      %563 = vmatpush1.bf16.msra.mxu0 0
      %564 = vmatprep.subr.bf16.mxu0 0
      %565 = vmatpush1.bf16.msra.mxu0 0
      %566 = vmatprep.subr.bf16.mxu0 0
      %567 = vmatpush1.bf16.msra.mxu0 0
      %568 = vmatprep.subr.bf16.mxu0 0
      %569 = vmatpush1.bf16.msra.mxu0 0
      %570 = vmatprep.subr.bf16.mxu0 0
      %571 = vmatpush1.bf16.msra.mxu0 0
      %572 = vmatprep.subr.bf16.mxu0 0
      %573 = vmatpush1.bf16.msra.mxu0 0
      %574 = vmatprep.subr.bf16.mxu0 0
      %575 = vmatpush1.bf16.msra.mxu0 0
      %576 = vmatprep.mubr.bf16.mxu0 0
      %577 = vmatmul.mubr.bf16.gmra.mrb[0].mxu0 %v529
      %v578 = vpop.f32.mrb[0].mxu0
      %v579 = vadd.f32 0.0, %v578
      %v580 = vpop.f32.mrb[0].mxu0
      %v581 = vpop.f32.mrb[0].mxu0
      %v582 = vadd.f32 0.0, %v581
      %v583 = vpop.f32.mrb[0].mxu0
      %584 = vmatprep.mubr.bf16.mxu0 0
      %585 = vmatmul.mubr.bf16.gmra.mrb[0].mxu0 %v532
      %v586 = vpop.f32.mrb[0].mxu0
      %v587 = vadd.f32 0.0, %v586
      %v588 = vpop.f32.mrb[0].mxu0
      %v589 = vpop.f32.mrb[0].mxu0
      %v590 = vadd.f32 0.0, %v589
      %v591 = vpop.f32.mrb[0].mxu0
      %592 = vmatprep.mubr.bf16.mxu0 0
      %593 = vmatmul.mubr.bf16.gmra.mrb[0].mxu0 %v535
      %v594 = vpop.f32.mrb[0].mxu0
      %v595 = vadd.f32 0.0, %v594
      %v596 = vpop.f32.mrb[0].mxu0
      %v597 = vpop.f32.mrb[0].mxu0
      %v598 = vadd.f32 0.0, %v597
      %v599 = vpop.f32.mrb[0].mxu0
      %600 = vmatprep.mubr.bf16.mxu0 0
      %601 = vmatmul.mubr.bf16.gmra.mrb[0].mxu0 %v538
      %v602 = vpop.f32.mrb[0].mxu0
      %v603 = vadd.f32 0.0, %v602
      %v604 = vpop.f32.mrb[0].mxu0
      %v605 = vpop.f32.mrb[0].mxu0
      %v606 = vadd.f32 0.0, %v605
      %v607 = vpop.f32.mrb[0].mxu0
      %608 = vdwg.mxu0
      %v617 = vunpack.c.l.b16 %v381
      %v618 = vunpack.c.l.b16 %v382
      %v619 = vunpack.c.l.b16 %v383
      %v620 = vunpack.c.l.b16 %v384
      %v621 = vunpack.c.l.b16 %v385
      %v622 = vunpack.c.l.b16 %v386
      %v623 = vunpack.c.l.b16 %v387
      %v624 = vunpack.c.l.b16 %v388
      %v625 = vpack.c.b16 %v618, %v617
      %v626 = vpack.c.b16 %v620, %v619
      %v627 = vpack.c.b16 %v622, %v621
      %v628 = vpack.c.b16 %v624, %v623
      %v630 = vsel %vm527, %v625, 0
      %v633 = vsel %vm527, %v626, 0
      %v636 = vsel %vm527, %v627, 0
      %v639 = vsel %vm527, %v628, 0
      %v642 = vsel %vm540, %v389, 0
      %644 = vmatprep.subr.bf16.mxu0 0
      %645 = vmatpush1.bf16.msra.mxu0 %v642
      %646 = vmatprep.subr.bf16.mxu0 0
      %647 = vmatpush1.bf16.msra.mxu0 0
      %648 = vmatprep.subr.bf16.mxu0 0
      %649 = vmatpush1.bf16.msra.mxu0 0
      %650 = vmatprep.subr.bf16.mxu0 0
      %651 = vmatpush1.bf16.msra.mxu0 0
      %652 = vmatprep.subr.bf16.mxu0 0
      %653 = vmatpush1.bf16.msra.mxu0 0
      %654 = vmatprep.subr.bf16.mxu0 0
      %655 = vmatpush1.bf16.msra.mxu0 0
      %656 = vmatprep.subr.bf16.mxu0 0
      %657 = vmatpush1.bf16.msra.mxu0 0
      %658 = vmatprep.subr.bf16.mxu0 0
      %659 = vmatpush1.bf16.msra.mxu0 0
      %660 = vmatprep.subr.bf16.mxu0 0
      %661 = vmatpush1.bf16.msra.mxu0 0
      %662 = vmatprep.subr.bf16.mxu0 0
      %663 = vmatpush1.bf16.msra.mxu0 0
      %664 = vmatprep.subr.bf16.mxu0 0
      %665 = vmatpush1.bf16.msra.mxu0 0
      %666 = vmatprep.subr.bf16.mxu0 0
      %667 = vmatpush1.bf16.msra.mxu0 0
      %668 = vmatprep.subr.bf16.mxu0 0
      %669 = vmatpush1.bf16.msra.mxu0 0
      %670 = vmatprep.subr.bf16.mxu0 0
      %671 = vmatpush1.bf16.msra.mxu0 0
      %672 = vmatprep.subr.bf16.mxu0 0
      %673 = vmatpush1.bf16.msra.mxu0 0
      %674 = vmatprep.subr.bf16.mxu0 0
      %675 = vmatpush1.bf16.msra.mxu0 0
      %676 = vmatprep.mubr.bf16.mxu0 0
      %677 = vmatmul.mubr.bf16.gmra.mrb[0].mxu0 %v630
      %v678 = vpop.f32.mrb[0].mxu0
      %v679 = vadd.f32 %v579, %v678
      %v680 = vpop.f32.mrb[0].mxu0
      %v681 = vpop.f32.mrb[0].mxu0
      %v682 = vadd.f32 %v582, %v681
      %v683 = vpop.f32.mrb[0].mxu0
      %684 = vmatprep.mubr.bf16.mxu0 0
      %685 = vmatmul.mubr.bf16.gmra.mrb[0].mxu0 %v633
      %v686 = vpop.f32.mrb[0].mxu0
      %v687 = vadd.f32 %v587, %v686
      %v688 = vpop.f32.mrb[0].mxu0
      %v689 = vpop.f32.mrb[0].mxu0
      %v690 = vadd.f32 %v590, %v689
      %v691 = vpop.f32.mrb[0].mxu0
      %692 = vmatprep.mubr.bf16.mxu0 0
      %693 = vmatmul.mubr.bf16.gmra.mrb[0].mxu0 %v636
      %v694 = vpop.f32.mrb[0].mxu0
      %v695 = vadd.f32 %v595, %v694
      %v696 = vpop.f32.mrb[0].mxu0
      %v697 = vpop.f32.mrb[0].mxu0
      %v698 = vadd.f32 %v598, %v697
      %v699 = vpop.f32.mrb[0].mxu0
      %700 = vmatprep.mubr.bf16.mxu0 0
      %701 = vmatmul.mubr.bf16.gmra.mrb[0].mxu0 %v639
      %v702 = vpop.f32.mrb[0].mxu0
      %v703 = vadd.f32 %v603, %v702
      %v704 = vpop.f32.mrb[0].mxu0
      %v705 = vpop.f32.mrb[0].mxu0
      %v706 = vadd.f32 %v606, %v705
      %v707 = vpop.f32.mrb[0].mxu0
      %708 = vdwg.mxu0
      %v709 = vld [vmem:[%s300] sm:$0xe]
      %v710 = vld [vmem:[%s300 + $0x8] sm:$0xe]
      %v711 = vld [vmem:[%s300 + $0x10] sm:$0xe]
      %v712 = vld [vmem:[%s300 + $0x18] sm:$0xe]
      %v713 = vld [vmem:[%s300 + $0x20] sm:$0xe]
      %v714 = vld [vmem:[%s300 + $0x28] sm:$0xe]
      %v715 = vld [vmem:[%s300 + $0x30] sm:$0xe]
      %v716 = vld [vmem:[%s300 + $0x38] sm:$0xe]
      %vm733 = vcmask 1042432
      %vm734 = vcmask 1046532
      %vm735 = vmor %vm733, %vm734
      %v736 = vrot.slane %v709, 5
      %v737 = vrot.slane %v736, 4
      %v738 = vrot.slane %v390, 5
      %v739 = vsel %vm735, %v737, %v738
      %v740 = vrot.slane %v710, 5
      %v741 = vrot.slane %v740, 4
      %v742 = vrot.slane %v391, 5
      %v743 = vsel %vm735, %v741, %v742
      %v744 = vrot.slane %v711, 5
      %v745 = vrot.slane %v744, 4
      %v746 = vrot.slane %v392, 5
      %v747 = vsel %vm735, %v745, %v746
      %v748 = vrot.slane %v712, 5
      %v749 = vrot.slane %v748, 4
      %v750 = vrot.slane %v393, 5
      %v751 = vsel %vm735, %v749, %v750
      %v752 = vrot.slane %v713, 5
      %v753 = vrot.slane %v752, 4
      %v754 = vrot.slane %v394, 5
      %v755 = vsel %vm735, %v753, %v754
      %v756 = vrot.slane %v714, 5
      %v757 = vrot.slane %v756, 4
      %v758 = vrot.slane %v395, 5
      %v759 = vsel %vm735, %v757, %v758
      %v760 = vrot.slane %v715, 5
      %v761 = vrot.slane %v760, 4
      %v762 = vrot.slane %v396, 5
      %v763 = vsel %vm735, %v761, %v762
      %v764 = vrot.slane %v716, 5
      %v765 = vrot.slane %v764, 4
      %v766 = vrot.slane %v397, 5
      %v767 = vsel %vm735, %v765, %v766
      %s768 = scalar_lea.vmem %s1, 4
      %v769 = vld [vmem:[%s768] sm:$0x3]
      %v770 = vunpack.c.l.b16 %v739
      %v771 = vunpack.c.l.b16 %v743
      %v772 = vunpack.c.l.b16 %v747
      %v773 = vunpack.c.l.b16 %v751
      %v774 = vunpack.c.l.b16 %v755
      %v775 = vunpack.c.l.b16 %v759
      %v776 = vunpack.c.l.b16 %v763
      %v777 = vunpack.c.l.b16 %v767
      %v778 = vpack.c.b16 %v771, %v770
      %v779 = vpack.c.b16 %v773, %v772
      %v780 = vpack.c.b16 %v775, %v774
      %v781 = vpack.c.b16 %v777, %v776
      %v783 = vsel %vm527, %v778, 0
      %v786 = vsel %vm527, %v779, 0
      %v789 = vsel %vm527, %v780, 0
      %v792 = vsel %vm527, %v781, 0
      %v795 = vsel %vm540, %v769, 0
      %797 = vmatprep.subr.bf16.mxu0 0
      %798 = vmatpush1.bf16.msra.mxu0 %v795
      %799 = vmatprep.subr.bf16.mxu0 0
      %800 = vmatpush1.bf16.msra.mxu0 0
      %801 = vmatprep.subr.bf16.mxu0 0
      %802 = vmatpush1.bf16.msra.mxu0 0
      %803 = vmatprep.subr.bf16.mxu0 0
      %804 = vmatpush1.bf16.msra.mxu0 0
      %805 = vmatprep.subr.bf16.mxu0 0
      %806 = vmatpush1.bf16.msra.mxu0 0
      %807 = vmatprep.subr.bf16.mxu0 0
      %808 = vmatpush1.bf16.msra.mxu0 0
      %809 = vmatprep.subr.bf16.mxu0 0
      %810 = vmatpush1.bf16.msra.mxu0 0
      %811 = vmatprep.subr.bf16.mxu0 0
      %812 = vmatpush1.bf16.msra.mxu0 0
      %813 = vmatprep.subr.bf16.mxu0 0
      %814 = vmatpush1.bf16.msra.mxu0 0
      %815 = vmatprep.subr.bf16.mxu0 0
      %816 = vmatpush1.bf16.msra.mxu0 0
      %817 = vmatprep.subr.bf16.mxu0 0
      %818 = vmatpush1.bf16.msra.mxu0 0
      %819 = vmatprep.subr.bf16.mxu0 0
      %820 = vmatpush1.bf16.msra.mxu0 0
      %821 = vmatprep.subr.bf16.mxu0 0
      %822 = vmatpush1.bf16.msra.mxu0 0
      %823 = vmatprep.subr.bf16.mxu0 0
      %824 = vmatpush1.bf16.msra.mxu0 0
      %825 = vmatprep.subr.bf16.mxu0 0
      %826 = vmatpush1.bf16.msra.mxu0 0
      %827 = vmatprep.subr.bf16.mxu0 0
      %828 = vmatpush1.bf16.msra.mxu0 0
      %829 = vmatprep.mubr.bf16.mxu0 0
      %830 = vmatmul.mubr.bf16.gmra.mrb[0].mxu0 %v783
      %v831 = vpop.f32.mrb[0].mxu0
      %v832 = vadd.f32 0.0, %v831
      %v833 = vpop.f32.mrb[0].mxu0
      %v834 = vpop.f32.mrb[0].mxu0
      %v835 = vadd.f32 0.0, %v834
      %v836 = vpop.f32.mrb[0].mxu0
      %837 = vmatprep.mubr.bf16.mxu0 0
      %838 = vmatmul.mubr.bf16.gmra.mrb[0].mxu0 %v786
      %v839 = vpop.f32.mrb[0].mxu0
      %v840 = vadd.f32 0.0, %v839
      %v841 = vpop.f32.mrb[0].mxu0
      %v842 = vpop.f32.mrb[0].mxu0
      %v843 = vadd.f32 0.0, %v842
      %v844 = vpop.f32.mrb[0].mxu0
      %845 = vmatprep.mubr.bf16.mxu0 0
      %846 = vmatmul.mubr.bf16.gmra.mrb[0].mxu0 %v789
      %v847 = vpop.f32.mrb[0].mxu0
      %v848 = vadd.f32 0.0, %v847
      %v849 = vpop.f32.mrb[0].mxu0
      %v850 = vpop.f32.mrb[0].mxu0
      %v851 = vadd.f32 0.0, %v850
      %v852 = vpop.f32.mrb[0].mxu0
      %853 = vmatprep.mubr.bf16.mxu0 0
      %854 = vmatmul.mubr.bf16.gmra.mrb[0].mxu0 %v792
      %v855 = vpop.f32.mrb[0].mxu0
      %v856 = vadd.f32 0.0, %v855
      %v857 = vpop.f32.mrb[0].mxu0
      %v858 = vpop.f32.mrb[0].mxu0
      %v859 = vadd.f32 0.0, %v858
      %v860 = vpop.f32.mrb[0].mxu0
      %861 = vdwg.mxu0
      %v862 = vadd.f32 %v679, %v832
      %v863 = vadd.f32 %v682, %v835
      %v864 = vadd.f32 %v687, %v840
      %v865 = vadd.f32 %v690, %v843
      %v866 = vadd.f32 %v695, %v848
      %v867 = vadd.f32 %v698, %v851
      %v868 = vadd.f32 %v703, %v856
      %v869 = vadd.f32 %v706, %v859
      %s870 = scalar_lea.vmem %s300, 8
      %v871 = vld [vmem:[%s870] sm:$0xf]
      %v872 = vld [vmem:[%s870 + $0x8] sm:$0xf]
      %v873 = vld [vmem:[%s870 + $0x10] sm:$0xf]
      %v874 = vld [vmem:[%s870 + $0x18] sm:$0xf]
      %v875 = vld [vmem:[%s870 + $0x20] sm:$0xf]
      %v876 = vld [vmem:[%s870 + $0x28] sm:$0xf]
      %v877 = vld [vmem:[%s870 + $0x30] sm:$0xf]
      %v878 = vld [vmem:[%s870 + $0x38] sm:$0xf]
      %s879 = scalar_lea.vmem %s1, 6
      %v880 = vld [vmem:[%s879] sm:$0x3]
      %v889 = vunpack.c.l.b16 %v871
      %v890 = vunpack.c.l.b16 %v872
      %v891 = vunpack.c.l.b16 %v873
      %v892 = vunpack.c.l.b16 %v874
      %v893 = vunpack.c.l.b16 %v875
      %v894 = vunpack.c.l.b16 %v876
      %v895 = vunpack.c.l.b16 %v877
      %v896 = vunpack.c.l.b16 %v878
      %v897 = vpack.c.b16 %v890, %v889
      %v898 = vpack.c.b16 %v892, %v891
      %v899 = vpack.c.b16 %v894, %v893
      %v900 = vpack.c.b16 %v896, %v895
      %v902 = vsel %vm527, %v897, 0
      %v905 = vsel %vm527, %v898, 0
      %v908 = vsel %vm527, %v899, 0
      %v911 = vsel %vm527, %v900, 0
      %v914 = vsel %vm540, %v880, 0
      %916 = vmatprep.subr.bf16.mxu0 0
      %917 = vmatpush1.bf16.msra.mxu0 %v914
      %918 = vmatprep.subr.bf16.mxu0 0
      %919 = vmatpush1.bf16.msra.mxu0 0
      %920 = vmatprep.subr.bf16.mxu0 0
      %921 = vmatpush1.bf16.msra.mxu0 0
      %922 = vmatprep.subr.bf16.mxu0 0
      %923 = vmatpush1.bf16.msra.mxu0 0
      %924 = vmatprep.subr.bf16.mxu0 0
      %925 = vmatpush1.bf16.msra.mxu0 0
      %926 = vmatprep.subr.bf16.mxu0 0
      %927 = vmatpush1.bf16.msra.mxu0 0
      %928 = vmatprep.subr.bf16.mxu0 0
      %929 = vmatpush1.bf16.msra.mxu0 0
      %930 = vmatprep.subr.bf16.mxu0 0
      %931 = vmatpush1.bf16.msra.mxu0 0
      %932 = vmatprep.subr.bf16.mxu0 0
      %933 = vmatpush1.bf16.msra.mxu0 0
      %934 = vmatprep.subr.bf16.mxu0 0
      %935 = vmatpush1.bf16.msra.mxu0 0
      %936 = vmatprep.subr.bf16.mxu0 0
      %937 = vmatpush1.bf16.msra.mxu0 0
      %938 = vmatprep.subr.bf16.mxu0 0
      %939 = vmatpush1.bf16.msra.mxu0 0
      %940 = vmatprep.subr.bf16.mxu0 0
      %941 = vmatpush1.bf16.msra.mxu0 0
      %942 = vmatprep.subr.bf16.mxu0 0
      %943 = vmatpush1.bf16.msra.mxu0 0
      %944 = vmatprep.subr.bf16.mxu0 0
      %945 = vmatpush1.bf16.msra.mxu0 0
      %946 = vmatprep.subr.bf16.mxu0 0
      %947 = vmatpush1.bf16.msra.mxu0 0
      %948 = vmatprep.mubr.bf16.mxu0 0
      %949 = vmatmul.mubr.bf16.gmra.mrb[0].mxu0 %v902
      %v950 = vpop.f32.mrb[0].mxu0
      %v951 = vadd.f32 0.0, %v950
      %v952 = vpop.f32.mrb[0].mxu0
      %v953 = vpop.f32.mrb[0].mxu0
      %v954 = vadd.f32 0.0, %v953
      %v955 = vpop.f32.mrb[0].mxu0
      %956 = vmatprep.mubr.bf16.mxu0 0
      %957 = vmatmul.mubr.bf16.gmra.mrb[0].mxu0 %v905
      %v958 = vpop.f32.mrb[0].mxu0
      %v959 = vadd.f32 0.0, %v958
      %v960 = vpop.f32.mrb[0].mxu0
      %v961 = vpop.f32.mrb[0].mxu0
      %v962 = vadd.f32 0.0, %v961
      %v963 = vpop.f32.mrb[0].mxu0
      %964 = vmatprep.mubr.bf16.mxu0 0
      %965 = vmatmul.mubr.bf16.gmra.mrb[0].mxu0 %v908
      %v966 = vpop.f32.mrb[0].mxu0
      %v967 = vadd.f32 0.0, %v966
      %v968 = vpop.f32.mrb[0].mxu0
      %v969 = vpop.f32.mrb[0].mxu0
      %v970 = vadd.f32 0.0, %v969
      %v971 = vpop.f32.mrb[0].mxu0
      %972 = vmatprep.mubr.bf16.mxu0 0
      %973 = vmatmul.mubr.bf16.gmra.mrb[0].mxu0 %v911
      %v974 = vpop.f32.mrb[0].mxu0
      %v975 = vadd.f32 0.0, %v974
      %v976 = vpop.f32.mrb[0].mxu0
      %v977 = vpop.f32.mrb[0].mxu0
      %v978 = vadd.f32 0.0, %v977
      %v979 = vpop.f32.mrb[0].mxu0
      %980 = vdwg.mxu0
      %v981 = vadd.f32 %v862, %v951
      %v982 = vadd.f32 %v863, %v954
      %v983 = vadd.f32 %v864, %v959
      %v984 = vadd.f32 %v865, %v962
      %v985 = vadd.f32 %v866, %v967
      %v986 = vadd.f32 %v867, %v970
      %v987 = vadd.f32 %v868, %v975
      %v988 = vadd.f32 %v869, %v978
      %v989 = vld [vmem:[%s870] sm:$0xf]
      %v990 = vld [vmem:[%s870 + $0x4] sm:$0x1]
      %v991 = vld [vmem:[%s870 + $0x8] sm:$0xf]
      %v992 = vld [vmem:[%s870 + $0xc] sm:$0x1]
      %v993 = vld [vmem:[%s870 + $0x10] sm:$0xf]
      %v994 = vld [vmem:[%s870 + $0x14] sm:$0x1]
      %v995 = vld [vmem:[%s870 + $0x18] sm:$0xf]
      %v996 = vld [vmem:[%s870 + $0x1c] sm:$0x1]
      %v997 = vld [vmem:[%s870 + $0x20] sm:$0xf]
      %v998 = vld [vmem:[%s870 + $0x24] sm:$0x1]
      %v999 = vld [vmem:[%s870 + $0x28] sm:$0xf]
      %v1000 = vld [vmem:[%s870 + $0x2c] sm:$0x1]
      %v1001 = vld [vmem:[%s870 + $0x30] sm:$0xf]
      %v1002 = vld [vmem:[%s870 + $0x34] sm:$0x1]
      %v1003 = vld [vmem:[%s870 + $0x38] sm:$0xf]
      %v1004 = vld [vmem:[%s870 + $0x3c] sm:$0x1]
      %v1006 = vshrl.u32 %v989, 16
      %v1008 = vrot.slane %v1006, 4
      %v1009 = vshll.u32 %v989, 16
      %v1011 = vrot.slane %v1009, 5
      %v1012 = vor.u32 %v1008, %v1011
      %v1013 = vrot.slane %v1012, 4
      %v1015 = vshll.u32 %v990, 16
      %v1017 = vrot.slane %v1015, 5
      %v1018 = vsel %vm400, %v1013, %v1017
      %v1020 = vshrl.u32 %v991, 16
      %v1022 = vrot.slane %v1020, 4
      %v1023 = vshll.u32 %v991, 16
      %v1025 = vrot.slane %v1023, 5
      %v1026 = vor.u32 %v1022, %v1025
      %v1027 = vrot.slane %v1026, 4
      %v1029 = vshll.u32 %v992, 16
      %v1031 = vrot.slane %v1029, 5
      %v1032 = vsel %vm400, %v1027, %v1031
      %v1034 = vshrl.u32 %v993, 16
      %v1036 = vrot.slane %v1034, 4
      %v1037 = vshll.u32 %v993, 16
      %v1039 = vrot.slane %v1037, 5
      %v1040 = vor.u32 %v1036, %v1039
      %v1041 = vrot.slane %v1040, 4
      %v1043 = vshll.u32 %v994, 16
      %v1045 = vrot.slane %v1043, 5
      %v1046 = vsel %vm400, %v1041, %v1045
      %v1048 = vshrl.u32 %v995, 16
      %v1050 = vrot.slane %v1048, 4
      %v1051 = vshll.u32 %v995, 16
      %v1053 = vrot.slane %v1051, 5
      %v1054 = vor.u32 %v1050, %v1053
      %v1055 = vrot.slane %v1054, 4
      %v1057 = vshll.u32 %v996, 16
      %v1059 = vrot.slane %v1057, 5
      %v1060 = vsel %vm400, %v1055, %v1059
      %v1062 = vshrl.u32 %v997, 16
      %v1064 = vrot.slane %v1062, 4
      %v1065 = vshll.u32 %v997, 16
      %v1067 = vrot.slane %v1065, 5
      %v1068 = vor.u32 %v1064, %v1067
      %v1069 = vrot.slane %v1068, 4
      %v1071 = vshll.u32 %v998, 16
      %v1073 = vrot.slane %v1071, 5
      %v1074 = vsel %vm400, %v1069, %v1073
      %v1076 = vshrl.u32 %v999, 16
      %v1078 = vrot.slane %v1076, 4
      %v1079 = vshll.u32 %v999, 16
      %v1081 = vrot.slane %v1079, 5
      %v1082 = vor.u32 %v1078, %v1081
      %v1083 = vrot.slane %v1082, 4
      %v1085 = vshll.u32 %v1000, 16
      %v1087 = vrot.slane %v1085, 5
      %v1088 = vsel %vm400, %v1083, %v1087
      %v1090 = vshrl.u32 %v1001, 16
      %v1092 = vrot.slane %v1090, 4
      %v1093 = vshll.u32 %v1001, 16
      %v1095 = vrot.slane %v1093, 5
      %v1096 = vor.u32 %v1092, %v1095
      %v1097 = vrot.slane %v1096, 4
      %v1099 = vshll.u32 %v1002, 16
      %v1101 = vrot.slane %v1099, 5
      %v1102 = vsel %vm400, %v1097, %v1101
      %v1104 = vshrl.u32 %v1003, 16
      %v1106 = vrot.slane %v1104, 4
      %v1107 = vshll.u32 %v1003, 16
      %v1109 = vrot.slane %v1107, 5
      %v1110 = vor.u32 %v1106, %v1109
      %v1111 = vrot.slane %v1110, 4
      %v1113 = vshll.u32 %v1004, 16
      %v1115 = vrot.slane %v1113, 5
      %v1116 = vsel %vm400, %v1111, %v1115
      %s1117 = scalar_lea.vmem %s1, 8
      %v1118 = vld [vmem:[%s1117] sm:$0x3]
      %v1119 = vunpack.c.l.b16 %v1018
      %v1120 = vunpack.c.l.b16 %v1032
      %v1121 = vunpack.c.l.b16 %v1046
      %v1122 = vunpack.c.l.b16 %v1060
      %v1123 = vunpack.c.l.b16 %v1074
      %v1124 = vunpack.c.l.b16 %v1088
      %v1125 = vunpack.c.l.b16 %v1102
      %v1126 = vunpack.c.l.b16 %v1116
      %v1127 = vpack.c.b16 %v1120, %v1119
      %v1128 = vpack.c.b16 %v1122, %v1121
      %v1129 = vpack.c.b16 %v1124, %v1123
      %v1130 = vpack.c.b16 %v1126, %v1125
      %v1132 = vsel %vm527, %v1127, 0
      %v1135 = vsel %vm527, %v1128, 0
      %v1138 = vsel %vm527, %v1129, 0
      %v1141 = vsel %vm527, %v1130, 0
      %v1144 = vsel %vm540, %v1118, 0
      %1146 = vmatprep.subr.bf16.mxu0 0
      %1147 = vmatpush1.bf16.msra.mxu0 %v1144
      %1148 = vmatprep.subr.bf16.mxu0 0
      %1149 = vmatpush1.bf16.msra.mxu0 0
      %1150 = vmatprep.subr.bf16.mxu0 0
      %1151 = vmatpush1.bf16.msra.mxu0 0
      %1152 = vmatprep.subr.bf16.mxu0 0
      %1153 = vmatpush1.bf16.msra.mxu0 0
      %1154 = vmatprep.subr.bf16.mxu0 0
      %1155 = vmatpush1.bf16.msra.mxu0 0
      %1156 = vmatprep.subr.bf16.mxu0 0
      %1157 = vmatpush1.bf16.msra.mxu0 0
      %1158 = vmatprep.subr.bf16.mxu0 0
      %1159 = vmatpush1.bf16.msra.mxu0 0
      %1160 = vmatprep.subr.bf16.mxu0 0
      %1161 = vmatpush1.bf16.msra.mxu0 0
      %1162 = vmatprep.subr.bf16.mxu0 0
      %1163 = vmatpush1.bf16.msra.mxu0 0
      %1164 = vmatprep.subr.bf16.mxu0 0
      %1165 = vmatpush1.bf16.msra.mxu0 0
      %1166 = vmatprep.subr.bf16.mxu0 0
      %1167 = vmatpush1.bf16.msra.mxu0 0
      %1168 = vmatprep.subr.bf16.mxu0 0
      %1169 = vmatpush1.bf16.msra.mxu0 0
      %1170 = vmatprep.subr.bf16.mxu0 0
      %1171 = vmatpush1.bf16.msra.mxu0 0
      %1172 = vmatprep.subr.bf16.mxu0 0
      %1173 = vmatpush1.bf16.msra.mxu0 0
      %1174 = vmatprep.subr.bf16.mxu0 0
      %1175 = vmatpush1.bf16.msra.mxu0 0
      %1176 = vmatprep.subr.bf16.mxu0 0
      %1177 = vmatpush1.bf16.msra.mxu0 0
      %1178 = vmatprep.mubr.bf16.mxu0 0
      %1179 = vmatmul.mubr.bf16.gmra.mrb[0].mxu0 %v1132
      %v1180 = vpop.f32.mrb[0].mxu0
      %v1181 = vadd.f32 0.0, %v1180
      %v1182 = vpop.f32.mrb[0].mxu0
      %v1183 = vpop.f32.mrb[0].mxu0
      %v1184 = vadd.f32 0.0, %v1183
      %v1185 = vpop.f32.mrb[0].mxu0
      %1186 = vmatprep.mubr.bf16.mxu0 0
      %1187 = vmatmul.mubr.bf16.gmra.mrb[0].mxu0 %v1135
      %v1188 = vpop.f32.mrb[0].mxu0
      %v1189 = vadd.f32 0.0, %v1188
      %v1190 = vpop.f32.mrb[0].mxu0
      %v1191 = vpop.f32.mrb[0].mxu0
      %v1192 = vadd.f32 0.0, %v1191
      %v1193 = vpop.f32.mrb[0].mxu0
      %1194 = vmatprep.mubr.bf16.mxu0 0
      %1195 = vmatmul.mubr.bf16.gmra.mrb[0].mxu0 %v1138
      %v1196 = vpop.f32.mrb[0].mxu0
      %v1197 = vadd.f32 0.0, %v1196
      %v1198 = vpop.f32.mrb[0].mxu0
      %v1199 = vpop.f32.mrb[0].mxu0
      %v1200 = vadd.f32 0.0, %v1199
      %v1201 = vpop.f32.mrb[0].mxu0
      %1202 = vmatprep.mubr.bf16.mxu0 0
      %1203 = vmatmul.mubr.bf16.gmra.mrb[0].mxu0 %v1141
      %v1204 = vpop.f32.mrb[0].mxu0
      %v1205 = vadd.f32 0.0, %v1204
      %v1206 = vpop.f32.mrb[0].mxu0
      %v1207 = vpop.f32.mrb[0].mxu0
      %v1208 = vadd.f32 0.0, %v1207
      %v1209 = vpop.f32.mrb[0].mxu0
      %1210 = vdwg.mxu0
      %v1211 = vadd.f32 %v981, %v1181
      %v1212 = vadd.f32 %v982, %v1184
      %v1213 = vadd.f32 %v983, %v1189
      %v1214 = vadd.f32 %v984, %v1192
      %v1215 = vadd.f32 %v985, %v1197
      %v1216 = vadd.f32 %v986, %v1200
      %v1217 = vadd.f32 %v987, %v1205
      %v1218 = vadd.f32 %v988, %v1208
      %v1219 = vld [vmem:[%s870] sm:$0xe]
      %v1220 = vld [vmem:[%s870 + $0x8] sm:$0xe]
      %v1221 = vld [vmem:[%s870 + $0x10] sm:$0xe]
      %v1222 = vld [vmem:[%s870 + $0x18] sm:$0xe]
      %v1223 = vld [vmem:[%s870 + $0x20] sm:$0xe]
      %v1224 = vld [vmem:[%s870 + $0x28] sm:$0xe]
      %v1225 = vld [vmem:[%s870 + $0x30] sm:$0xe]
      %v1226 = vld [vmem:[%s870 + $0x38] sm:$0xe]
      %v1243 = vrot.slane %v1219, 5
      %v1244 = vrot.slane %v1243, 4
      %v1245 = vrot.slane %v990, 5
      %v1246 = vsel %vm735, %v1244, %v1245
      %v1247 = vrot.slane %v1220, 5
      %v1248 = vrot.slane %v1247, 4
      %v1249 = vrot.slane %v992, 5
      %v1250 = vsel %vm735, %v1248, %v1249
      %v1251 = vrot.slane %v1221, 5
      %v1252 = vrot.slane %v1251, 4
      %v1253 = vrot.slane %v994, 5
      %v1254 = vsel %vm735, %v1252, %v1253
      %v1255 = vrot.slane %v1222, 5
      %v1256 = vrot.slane %v1255, 4
      %v1257 = vrot.slane %v996, 5
      %v1258 = vsel %vm735, %v1256, %v1257
      %v1259 = vrot.slane %v1223, 5
      %v1260 = vrot.slane %v1259, 4
      %v1261 = vrot.slane %v998, 5
      %v1262 = vsel %vm735, %v1260, %v1261
      %v1263 = vrot.slane %v1224, 5
      %v1264 = vrot.slane %v1263, 4
      %v1265 = vrot.slane %v1000, 5
      %v1266 = vsel %vm735, %v1264, %v1265
      %v1267 = vrot.slane %v1225, 5
      %v1268 = vrot.slane %v1267, 4
      %v1269 = vrot.slane %v1002, 5
      %v1270 = vsel %vm735, %v1268, %v1269
      %v1271 = vrot.slane %v1226, 5
      %v1272 = vrot.slane %v1271, 4
      %v1273 = vrot.slane %v1004, 5
      %v1274 = vsel %vm735, %v1272, %v1273
      %s1275 = scalar_lea.vmem %s1, 10
      %v1276 = vld [vmem:[%s1275] sm:$0x3]
      %v1277 = vunpack.c.l.b16 %v1246
      %v1278 = vunpack.c.l.b16 %v1250
      %v1279 = vunpack.c.l.b16 %v1254
      %v1280 = vunpack.c.l.b16 %v1258
      %v1281 = vunpack.c.l.b16 %v1262
      %v1282 = vunpack.c.l.b16 %v1266
      %v1283 = vunpack.c.l.b16 %v1270
      %v1284 = vunpack.c.l.b16 %v1274
      %v1285 = vpack.c.b16 %v1278, %v1277
      %v1286 = vpack.c.b16 %v1280, %v1279
      %v1287 = vpack.c.b16 %v1282, %v1281
      %v1288 = vpack.c.b16 %v1284, %v1283
      %v1290 = vsel %vm527, %v1285, 0
      %v1293 = vsel %vm527, %v1286, 0
      %v1296 = vsel %vm527, %v1287, 0
      %v1299 = vsel %vm527, %v1288, 0
      %v1302 = vsel %vm540, %v1276, 0
      %1304 = vmatprep.subr.bf16.mxu0 0
      %1305 = vmatpush1.bf16.msra.mxu0 %v1302
      %1306 = vmatprep.subr.bf16.mxu0 0
      %1307 = vmatpush1.bf16.msra.mxu0 0
      %1308 = vmatprep.subr.bf16.mxu0 0
      %1309 = vmatpush1.bf16.msra.mxu0 0
      %1310 = vmatprep.subr.bf16.mxu0 0
      %1311 = vmatpush1.bf16.msra.mxu0 0
      %1312 = vmatprep.subr.bf16.mxu0 0
      %1313 = vmatpush1.bf16.msra.mxu0 0
      %1314 = vmatprep.subr.bf16.mxu0 0
      %1315 = vmatpush1.bf16.msra.mxu0 0
      %1316 = vmatprep.subr.bf16.mxu0 0
      %1317 = vmatpush1.bf16.msra.mxu0 0
      %1318 = vmatprep.subr.bf16.mxu0 0
      %1319 = vmatpush1.bf16.msra.mxu0 0
      %1320 = vmatprep.subr.bf16.mxu0 0
      %1321 = vmatpush1.bf16.msra.mxu0 0
      %1322 = vmatprep.subr.bf16.mxu0 0
      %1323 = vmatpush1.bf16.msra.mxu0 0
      %1324 = vmatprep.subr.bf16.mxu0 0
      %1325 = vmatpush1.bf16.msra.mxu0 0
      %1326 = vmatprep.subr.bf16.mxu0 0
      %1327 = vmatpush1.bf16.msra.mxu0 0
      %1328 = vmatprep.subr.bf16.mxu0 0
      %1329 = vmatpush1.bf16.msra.mxu0 0
      %1330 = vmatprep.subr.bf16.mxu0 0
      %1331 = vmatpush1.bf16.msra.mxu0 0
      %1332 = vmatprep.subr.bf16.mxu0 0
      %1333 = vmatpush1.bf16.msra.mxu0 0
      %1334 = vmatprep.subr.bf16.mxu0 0
      %1335 = vmatpush1.bf16.msra.mxu0 0
      %1336 = vmatprep.mubr.bf16.mxu0 0
      %1337 = vmatmul.mubr.bf16.gmra.mrb[0].mxu0 %v1290
      %v1338 = vpop.f32.mrb[0].mxu0
      %v1339 = vadd.f32 0.0, %v1338
      %v1340 = vpop.f32.mrb[0].mxu0
      %v1341 = vpop.f32.mrb[0].mxu0
      %v1342 = vadd.f32 0.0, %v1341
      %v1343 = vpop.f32.mrb[0].mxu0
      %1344 = vmatprep.mubr.bf16.mxu0 0
      %1345 = vmatmul.mubr.bf16.gmra.mrb[0].mxu0 %v1293
      %v1346 = vpop.f32.mrb[0].mxu0
      %v1347 = vadd.f32 0.0, %v1346
      %v1348 = vpop.f32.mrb[0].mxu0
      %v1349 = vpop.f32.mrb[0].mxu0
      %v1350 = vadd.f32 0.0, %v1349
      %v1351 = vpop.f32.mrb[0].mxu0
      %1352 = vmatprep.mubr.bf16.mxu0 0
      %1353 = vmatmul.mubr.bf16.gmra.mrb[0].mxu0 %v1296
      %v1354 = vpop.f32.mrb[0].mxu0
      %v1355 = vadd.f32 0.0, %v1354
      %v1356 = vpop.f32.mrb[0].mxu0
      %v1357 = vpop.f32.mrb[0].mxu0
      %v1358 = vadd.f32 0.0, %v1357
      %v1359 = vpop.f32.mrb[0].mxu0
      %1360 = vmatprep.mubr.bf16.mxu0 0
      %1361 = vmatmul.mubr.bf16.gmra.mrb[0].mxu0 %v1299
      %v1362 = vpop.f32.mrb[0].mxu0
      %v1363 = vadd.f32 0.0, %v1362
      %v1364 = vpop.f32.mrb[0].mxu0
      %v1365 = vpop.f32.mrb[0].mxu0
      %v1366 = vadd.f32 0.0, %v1365
      %v1367 = vpop.f32.mrb[0].mxu0
      %1368 = vdwg.mxu0
      %v1369 = vadd.f32 %v1211, %v1339
      %v1370 = vadd.f32 %v1212, %v1342
      %v1371 = vadd.f32 %v1213, %v1347
      %v1372 = vadd.f32 %v1214, %v1350
      %v1373 = vadd.f32 %v1215, %v1355
      %v1374 = vadd.f32 %v1216, %v1358
      %v1375 = vadd.f32 %v1217, %v1363
      %v1376 = vadd.f32 %v1218, %v1366
      %s1377 = scalar_lea.vmem %s300, 16
      %v1378 = vld [vmem:[%s1377] sm:$0xf]
      %v1379 = vld [vmem:[%s1377 + $0x8] sm:$0xf]
      %v1380 = vld [vmem:[%s1377 + $0x10] sm:$0xf]
      %v1381 = vld [vmem:[%s1377 + $0x18] sm:$0xf]
      %v1382 = vld [vmem:[%s1377 + $0x20] sm:$0xf]
      %v1383 = vld [vmem:[%s1377 + $0x28] sm:$0xf]
      %v1384 = vld [vmem:[%s1377 + $0x30] sm:$0xf]
      %v1385 = vld [vmem:[%s1377 + $0x38] sm:$0xf]
      %s1386 = scalar_lea.vmem %s1, 12
      %v1387 = vld [vmem:[%s1386] sm:$0x3]
      %v1396 = vunpack.c.l.b16 %v1378
      %v1397 = vunpack.c.l.b16 %v1379
      %v1398 = vunpack.c.l.b16 %v1380
      %v1399 = vunpack.c.l.b16 %v1381
      %v1400 = vunpack.c.l.b16 %v1382
      %v1401 = vunpack.c.l.b16 %v1383
      %v1402 = vunpack.c.l.b16 %v1384
      %v1403 = vunpack.c.l.b16 %v1385
      %v1404 = vpack.c.b16 %v1397, %v1396
      %v1405 = vpack.c.b16 %v1399, %v1398
      %v1406 = vpack.c.b16 %v1401, %v1400
      %v1407 = vpack.c.b16 %v1403, %v1402
      %v1409 = vsel %vm527, %v1404, 0
      %v1412 = vsel %vm527, %v1405, 0
      %v1415 = vsel %vm527, %v1406, 0
      %v1418 = vsel %vm527, %v1407, 0
      %v1421 = vsel %vm540, %v1387, 0
      %1423 = vmatprep.subr.bf16.mxu0 0
      %1424 = vmatpush1.bf16.msra.mxu0 %v1421
      %1425 = vmatprep.subr.bf16.mxu0 0
      %1426 = vmatpush1.bf16.msra.mxu0 0
      %1427 = vmatprep.subr.bf16.mxu0 0
      %1428 = vmatpush1.bf16.msra.mxu0 0
      %1429 = vmatprep.subr.bf16.mxu0 0
      %1430 = vmatpush1.bf16.msra.mxu0 0
      %1431 = vmatprep.subr.bf16.mxu0 0
      %1432 = vmatpush1.bf16.msra.mxu0 0
      %1433 = vmatprep.subr.bf16.mxu0 0
      %1434 = vmatpush1.bf16.msra.mxu0 0
      %1435 = vmatprep.subr.bf16.mxu0 0
      %1436 = vmatpush1.bf16.msra.mxu0 0
      %1437 = vmatprep.subr.bf16.mxu0 0
      %1438 = vmatpush1.bf16.msra.mxu0 0
      %1439 = vmatprep.subr.bf16.mxu0 0
      %1440 = vmatpush1.bf16.msra.mxu0 0
      %1441 = vmatprep.subr.bf16.mxu0 0
      %1442 = vmatpush1.bf16.msra.mxu0 0
      %1443 = vmatprep.subr.bf16.mxu0 0
      %1444 = vmatpush1.bf16.msra.mxu0 0
      %1445 = vmatprep.subr.bf16.mxu0 0
      %1446 = vmatpush1.bf16.msra.mxu0 0
      %1447 = vmatprep.subr.bf16.mxu0 0
      %1448 = vmatpush1.bf16.msra.mxu0 0
      %1449 = vmatprep.subr.bf16.mxu0 0
      %1450 = vmatpush1.bf16.msra.mxu0 0
      %1451 = vmatprep.subr.bf16.mxu0 0
      %1452 = vmatpush1.bf16.msra.mxu0 0
      %1453 = vmatprep.subr.bf16.mxu0 0
      %1454 = vmatpush1.bf16.msra.mxu0 0
      %1455 = vmatprep.mubr.bf16.mxu0 0
      %1456 = vmatmul.mubr.bf16.gmra.mrb[0].mxu0 %v1409
      %v1457 = vpop.f32.mrb[0].mxu0
      %v1458 = vadd.f32 0.0, %v1457
      %v1459 = vpop.f32.mrb[0].mxu0
      %v1460 = vpop.f32.mrb[0].mxu0
      %v1461 = vadd.f32 0.0, %v1460
      %v1462 = vpop.f32.mrb[0].mxu0
      %1463 = vmatprep.mubr.bf16.mxu0 0
      %1464 = vmatmul.mubr.bf16.gmra.mrb[0].mxu0 %v1412
      %v1465 = vpop.f32.mrb[0].mxu0
      %v1466 = vadd.f32 0.0, %v1465
      %v1467 = vpop.f32.mrb[0].mxu0
      %v1468 = vpop.f32.mrb[0].mxu0
      %v1469 = vadd.f32 0.0, %v1468
      %v1470 = vpop.f32.mrb[0].mxu0
      %1471 = vmatprep.mubr.bf16.mxu0 0
      %1472 = vmatmul.mubr.bf16.gmra.mrb[0].mxu0 %v1415
      %v1473 = vpop.f32.mrb[0].mxu0
      %v1474 = vadd.f32 0.0, %v1473
      %v1475 = vpop.f32.mrb[0].mxu0
      %v1476 = vpop.f32.mrb[0].mxu0
      %v1477 = vadd.f32 0.0, %v1476
      %v1478 = vpop.f32.mrb[0].mxu0
      %1479 = vmatprep.mubr.bf16.mxu0 0
      %1480 = vmatmul.mubr.bf16.gmra.mrb[0].mxu0 %v1418
      %v1481 = vpop.f32.mrb[0].mxu0
      %v1482 = vadd.f32 0.0, %v1481
      %v1483 = vpop.f32.mrb[0].mxu0
      %v1484 = vpop.f32.mrb[0].mxu0
      %v1485 = vadd.f32 0.0, %v1484
      %v1486 = vpop.f32.mrb[0].mxu0
      %1487 = vdwg.mxu0
      %v1488 = vadd.f32 %v1369, %v1458
      %v1489 = vadd.f32 %v1370, %v1461
      %v1490 = vadd.f32 %v1371, %v1466
      %v1491 = vadd.f32 %v1372, %v1469
      %v1492 = vadd.f32 %v1373, %v1474
      %v1493 = vadd.f32 %v1374, %v1477
      %v1494 = vadd.f32 %v1375, %v1482
      %v1495 = vadd.f32 %v1376, %v1485
      %v1496 = vld [vmem:[%s1377] sm:$0xf]
      %v1497 = vld [vmem:[%s1377 + $0x4] sm:$0x1]
      %v1498 = vld [vmem:[%s1377 + $0x8] sm:$0xf]
      %v1499 = vld [vmem:[%s1377 + $0xc] sm:$0x1]
      %v1500 = vld [vmem:[%s1377 + $0x10] sm:$0xf]
      %v1501 = vld [vmem:[%s1377 + $0x14] sm:$0x1]
      %v1502 = vld [vmem:[%s1377 + $0x18] sm:$0xf]
      %v1503 = vld [vmem:[%s1377 + $0x1c] sm:$0x1]
      %v1504 = vld [vmem:[%s1377 + $0x20] sm:$0xf]
      %v1505 = vld [vmem:[%s1377 + $0x24] sm:$0x1]
      %v1506 = vld [vmem:[%s1377 + $0x28] sm:$0xf]
      %v1507 = vld [vmem:[%s1377 + $0x2c] sm:$0x1]
      %v1508 = vld [vmem:[%s1377 + $0x30] sm:$0xf]
      %v1509 = vld [vmem:[%s1377 + $0x34] sm:$0x1]
      %v1510 = vld [vmem:[%s1377 + $0x38] sm:$0xf]
      %v1511 = vld [vmem:[%s1377 + $0x3c] sm:$0x1]
      %v1513 = vshrl.u32 %v1496, 16
      %v1515 = vrot.slane %v1513, 4
      %v1516 = vshll.u32 %v1496, 16
      %v1518 = vrot.slane %v1516, 5
      %v1519 = vor.u32 %v1515, %v1518
      %v1520 = vrot.slane %v1519, 4
      %v1522 = vshll.u32 %v1497, 16
      %v1524 = vrot.slane %v1522, 5
      %v1525 = vsel %vm400, %v1520, %v1524
      %v1527 = vshrl.u32 %v1498, 16
      %v1529 = vrot.slane %v1527, 4
      %v1530 = vshll.u32 %v1498, 16
      %v1532 = vrot.slane %v1530, 5
      %v1533 = vor.u32 %v1529, %v1532
      %v1534 = vrot.slane %v1533, 4
      %v1536 = vshll.u32 %v1499, 16
      %v1538 = vrot.slane %v1536, 5
      %v1539 = vsel %vm400, %v1534, %v1538
      %v1541 = vshrl.u32 %v1500, 16
      %v1543 = vrot.slane %v1541, 4
      %v1544 = vshll.u32 %v1500, 16
      %v1546 = vrot.slane %v1544, 5
      %v1547 = vor.u32 %v1543, %v1546
      %v1548 = vrot.slane %v1547, 4
      %v1550 = vshll.u32 %v1501, 16
      %v1552 = vrot.slane %v1550, 5
      %v1553 = vsel %vm400, %v1548, %v1552
      %v1555 = vshrl.u32 %v1502, 16
      %v1557 = vrot.slane %v1555, 4
      %v1558 = vshll.u32 %v1502, 16
      %v1560 = vrot.slane %v1558, 5
      %v1561 = vor.u32 %v1557, %v1560
      %v1562 = vrot.slane %v1561, 4
      %v1564 = vshll.u32 %v1503, 16
      %v1566 = vrot.slane %v1564, 5
      %v1567 = vsel %vm400, %v1562, %v1566
      %v1569 = vshrl.u32 %v1504, 16
      %v1571 = vrot.slane %v1569, 4
      %v1572 = vshll.u32 %v1504, 16
      %v1574 = vrot.slane %v1572, 5
      %v1575 = vor.u32 %v1571, %v1574
      %v1576 = vrot.slane %v1575, 4
      %v1578 = vshll.u32 %v1505, 16
      %v1580 = vrot.slane %v1578, 5
      %v1581 = vsel %vm400, %v1576, %v1580
      %v1583 = vshrl.u32 %v1506, 16
      %v1585 = vrot.slane %v1583, 4
      %v1586 = vshll.u32 %v1506, 16
      %v1588 = vrot.slane %v1586, 5
      %v1589 = vor.u32 %v1585, %v1588
      %v1590 = vrot.slane %v1589, 4
      %v1592 = vshll.u32 %v1507, 16
      %v1594 = vrot.slane %v1592, 5
      %v1595 = vsel %vm400, %v1590, %v1594
      %v1597 = vshrl.u32 %v1508, 16
      %v1599 = vrot.slane %v1597, 4
      %v1600 = vshll.u32 %v1508, 16
      %v1602 = vrot.slane %v1600, 5
      %v1603 = vor.u32 %v1599, %v1602
      %v1604 = vrot.slane %v1603, 4
      %v1606 = vshll.u32 %v1509, 16
      %v1608 = vrot.slane %v1606, 5
      %v1609 = vsel %vm400, %v1604, %v1608
      %v1611 = vshrl.u32 %v1510, 16
      %v1613 = vrot.slane %v1611, 4
      %v1614 = vshll.u32 %v1510, 16
      %v1616 = vrot.slane %v1614, 5
      %v1617 = vor.u32 %v1613, %v1616
      %v1618 = vrot.slane %v1617, 4
      %v1620 = vshll.u32 %v1511, 16
      %v1622 = vrot.slane %v1620, 5
      %v1623 = vsel %vm400, %v1618, %v1622
      %s1624 = scalar_lea.vmem %s1, 14
      %v1625 = vld [vmem:[%s1624] sm:$0x3]
      %v1626 = vunpack.c.l.b16 %v1525
      %v1627 = vunpack.c.l.b16 %v1539
      %v1628 = vunpack.c.l.b16 %v1553
      %v1629 = vunpack.c.l.b16 %v1567
      %v1630 = vunpack.c.l.b16 %v1581
      %v1631 = vunpack.c.l.b16 %v1595
      %v1632 = vunpack.c.l.b16 %v1609
      %v1633 = vunpack.c.l.b16 %v1623
      %v1634 = vpack.c.b16 %v1627, %v1626
      %v1635 = vpack.c.b16 %v1629, %v1628
      %v1636 = vpack.c.b16 %v1631, %v1630
      %v1637 = vpack.c.b16 %v1633, %v1632
      %v1639 = vsel %vm527, %v1634, 0
      %v1642 = vsel %vm527, %v1635, 0
      %v1645 = vsel %vm527, %v1636, 0
      %v1648 = vsel %vm527, %v1637, 0
      %v1651 = vsel %vm540, %v1625, 0
      %1653 = vmatprep.subr.bf16.mxu0 0
      %1654 = vmatpush1.bf16.msra.mxu0 %v1651
      %1655 = vmatprep.subr.bf16.mxu0 0
      %1656 = vmatpush1.bf16.msra.mxu0 0
      %1657 = vmatprep.subr.bf16.mxu0 0
      %1658 = vmatpush1.bf16.msra.mxu0 0
      %1659 = vmatprep.subr.bf16.mxu0 0
      %1660 = vmatpush1.bf16.msra.mxu0 0
      %1661 = vmatprep.subr.bf16.mxu0 0
      %1662 = vmatpush1.bf16.msra.mxu0 0
      %1663 = vmatprep.subr.bf16.mxu0 0
      %1664 = vmatpush1.bf16.msra.mxu0 0
      %1665 = vmatprep.subr.bf16.mxu0 0
      %1666 = vmatpush1.bf16.msra.mxu0 0
      %1667 = vmatprep.subr.bf16.mxu0 0
      %1668 = vmatpush1.bf16.msra.mxu0 0
      %1669 = vmatprep.subr.bf16.mxu0 0
      %1670 = vmatpush1.bf16.msra.mxu0 0
      %1671 = vmatprep.subr.bf16.mxu0 0
      %1672 = vmatpush1.bf16.msra.mxu0 0
      %1673 = vmatprep.subr.bf16.mxu0 0
      %1674 = vmatpush1.bf16.msra.mxu0 0
      %1675 = vmatprep.subr.bf16.mxu0 0
      %1676 = vmatpush1.bf16.msra.mxu0 0
      %1677 = vmatprep.subr.bf16.mxu0 0
      %1678 = vmatpush1.bf16.msra.mxu0 0
      %1679 = vmatprep.subr.bf16.mxu0 0
      %1680 = vmatpush1.bf16.msra.mxu0 0
      %1681 = vmatprep.subr.bf16.mxu0 0
      %1682 = vmatpush1.bf16.msra.mxu0 0
      %1683 = vmatprep.subr.bf16.mxu0 0
      %1684 = vmatpush1.bf16.msra.mxu0 0
      %1685 = vmatprep.mubr.bf16.mxu0 0
      %1686 = vmatmul.mubr.bf16.gmra.mrb[0].mxu0 %v1639
      %v1687 = vpop.f32.mrb[0].mxu0
      %v1688 = vadd.f32 0.0, %v1687
      %v1689 = vpop.f32.mrb[0].mxu0
      %v1690 = vpop.f32.mrb[0].mxu0
      %v1691 = vadd.f32 0.0, %v1690
      %v1692 = vpop.f32.mrb[0].mxu0
      %1693 = vmatprep.mubr.bf16.mxu0 0
      %1694 = vmatmul.mubr.bf16.gmra.mrb[0].mxu0 %v1642
      %v1695 = vpop.f32.mrb[0].mxu0
      %v1696 = vadd.f32 0.0, %v1695
      %v1697 = vpop.f32.mrb[0].mxu0
      %v1698 = vpop.f32.mrb[0].mxu0
      %v1699 = vadd.f32 0.0, %v1698
      %v1700 = vpop.f32.mrb[0].mxu0
      %1701 = vmatprep.mubr.bf16.mxu0 0
      %1702 = vmatmul.mubr.bf16.gmra.mrb[0].mxu0 %v1645
      %v1703 = vpop.f32.mrb[0].mxu0
      %v1704 = vadd.f32 0.0, %v1703
      %v1705 = vpop.f32.mrb[0].mxu0
      %v1706 = vpop.f32.mrb[0].mxu0
      %v1707 = vadd.f32 0.0, %v1706
      %v1708 = vpop.f32.mrb[0].mxu0
      %1709 = vmatprep.mubr.bf16.mxu0 0
      %1710 = vmatmul.mubr.bf16.gmra.mrb[0].mxu0 %v1648
      %v1711 = vpop.f32.mrb[0].mxu0
      %v1712 = vadd.f32 0.0, %v1711
      %v1713 = vpop.f32.mrb[0].mxu0
      %v1714 = vpop.f32.mrb[0].mxu0
      %v1715 = vadd.f32 0.0, %v1714
      %v1716 = vpop.f32.mrb[0].mxu0
      %1717 = vdwg.mxu0
      %v1718 = vadd.f32 %v1488, %v1688
      %v1719 = vadd.f32 %v1489, %v1691
      %v1720 = vadd.f32 %v1490, %v1696
      %v1721 = vadd.f32 %v1491, %v1699
      %v1722 = vadd.f32 %v1492, %v1704
      %v1723 = vadd.f32 %v1493, %v1707
      %v1724 = vadd.f32 %v1494, %v1712
      %v1725 = vadd.f32 %v1495, %v1715
      %v1726 = vld [vmem:[%s1377] sm:$0xe]
      %v1727 = vld [vmem:[%s1377 + $0x8] sm:$0xe]
      %v1728 = vld [vmem:[%s1377 + $0x10] sm:$0xe]
      %v1729 = vld [vmem:[%s1377 + $0x18] sm:$0xe]
      %v1730 = vld [vmem:[%s1377 + $0x20] sm:$0xe]
      %v1731 = vld [vmem:[%s1377 + $0x28] sm:$0xe]
      %v1732 = vld [vmem:[%s1377 + $0x30] sm:$0xe]
      %v1733 = vld [vmem:[%s1377 + $0x38] sm:$0xe]
      %v1750 = vrot.slane %v1726, 5
      %v1751 = vrot.slane %v1750, 4
      %v1752 = vrot.slane %v1497, 5
      %v1753 = vsel %vm735, %v1751, %v1752
      %v1754 = vrot.slane %v1727, 5
      %v1755 = vrot.slane %v1754, 4
      %v1756 = vrot.slane %v1499, 5
      %v1757 = vsel %vm735, %v1755, %v1756
      %v1758 = vrot.slane %v1728, 5
      %v1759 = vrot.slane %v1758, 4
      %v1760 = vrot.slane %v1501, 5
      %v1761 = vsel %vm735, %v1759, %v1760
      %v1762 = vrot.slane %v1729, 5
      %v1763 = vrot.slane %v1762, 4
      %v1764 = vrot.slane %v1503, 5
      %v1765 = vsel %vm735, %v1763, %v1764
      %v1766 = vrot.slane %v1730, 5
      %v1767 = vrot.slane %v1766, 4
      %v1768 = vrot.slane %v1505, 5
      %v1769 = vsel %vm735, %v1767, %v1768
      %v1770 = vrot.slane %v1731, 5
      %v1771 = vrot.slane %v1770, 4
      %v1772 = vrot.slane %v1507, 5
      %v1773 = vsel %vm735, %v1771, %v1772
      %v1774 = vrot.slane %v1732, 5
      %v1775 = vrot.slane %v1774, 4
      %v1776 = vrot.slane %v1509, 5
      %v1777 = vsel %vm735, %v1775, %v1776
      %v1778 = vrot.slane %v1733, 5
      %v1779 = vrot.slane %v1778, 4
      %v1780 = vrot.slane %v1511, 5
      %v1781 = vsel %vm735, %v1779, %v1780
      %s1782 = scalar_lea.vmem %s1, 16
      %v1783 = vld [vmem:[%s1782] sm:$0x3]
      %v1784 = vunpack.c.l.b16 %v1753
      %v1785 = vunpack.c.l.b16 %v1757
      %v1786 = vunpack.c.l.b16 %v1761
      %v1787 = vunpack.c.l.b16 %v1765
      %v1788 = vunpack.c.l.b16 %v1769
      %v1789 = vunpack.c.l.b16 %v1773
      %v1790 = vunpack.c.l.b16 %v1777
      %v1791 = vunpack.c.l.b16 %v1781
      %v1792 = vpack.c.b16 %v1785, %v1784
      %v1793 = vpack.c.b16 %v1787, %v1786
      %v1794 = vpack.c.b16 %v1789, %v1788
      %v1795 = vpack.c.b16 %v1791, %v1790
      %v1797 = vsel %vm527, %v1792, 0
      %v1800 = vsel %vm527, %v1793, 0
      %v1803 = vsel %vm527, %v1794, 0
      %v1806 = vsel %vm527, %v1795, 0
      %v1809 = vsel %vm540, %v1783, 0
      %1811 = vmatprep.subr.bf16.mxu0 0
      %1812 = vmatpush1.bf16.msra.mxu0 %v1809
      %1813 = vmatprep.subr.bf16.mxu0 0
      %1814 = vmatpush1.bf16.msra.mxu0 0
      %1815 = vmatprep.subr.bf16.mxu0 0
      %1816 = vmatpush1.bf16.msra.mxu0 0
      %1817 = vmatprep.subr.bf16.mxu0 0
      %1818 = vmatpush1.bf16.msra.mxu0 0
      %1819 = vmatprep.subr.bf16.mxu0 0
      %1820 = vmatpush1.bf16.msra.mxu0 0
      %1821 = vmatprep.subr.bf16.mxu0 0
      %1822 = vmatpush1.bf16.msra.mxu0 0
      %1823 = vmatprep.subr.bf16.mxu0 0
      %1824 = vmatpush1.bf16.msra.mxu0 0
      %1825 = vmatprep.subr.bf16.mxu0 0
      %1826 = vmatpush1.bf16.msra.mxu0 0
      %1827 = vmatprep.subr.bf16.mxu0 0
      %1828 = vmatpush1.bf16.msra.mxu0 0
      %1829 = vmatprep.subr.bf16.mxu0 0
      %1830 = vmatpush1.bf16.msra.mxu0 0
      %1831 = vmatprep.subr.bf16.mxu0 0
      %1832 = vmatpush1.bf16.msra.mxu0 0
      %1833 = vmatprep.subr.bf16.mxu0 0
      %1834 = vmatpush1.bf16.msra.mxu0 0
      %1835 = vmatprep.subr.bf16.mxu0 0
      %1836 = vmatpush1.bf16.msra.mxu0 0
      %1837 = vmatprep.subr.bf16.mxu0 0
      %1838 = vmatpush1.bf16.msra.mxu0 0
      %1839 = vmatprep.subr.bf16.mxu0 0
      %1840 = vmatpush1.bf16.msra.mxu0 0
      %1841 = vmatprep.subr.bf16.mxu0 0
      %1842 = vmatpush1.bf16.msra.mxu0 0
      %1843 = vmatprep.mubr.bf16.mxu0 0
      %1844 = vmatmul.mubr.bf16.gmra.mrb[0].mxu0 %v1797
      %v1845 = vpop.f32.mrb[0].mxu0
      %v1846 = vadd.f32 0.0, %v1845
      %v1847 = vpop.f32.mrb[0].mxu0
      %v1848 = vpop.f32.mrb[0].mxu0
      %v1849 = vadd.f32 0.0, %v1848
      %v1850 = vpop.f32.mrb[0].mxu0
      %1851 = vmatprep.mubr.bf16.mxu0 0
      %1852 = vmatmul.mubr.bf16.gmra.mrb[0].mxu0 %v1800
      %v1853 = vpop.f32.mrb[0].mxu0
      %v1854 = vadd.f32 0.0, %v1853
      %v1855 = vpop.f32.mrb[0].mxu0
      %v1856 = vpop.f32.mrb[0].mxu0
      %v1857 = vadd.f32 0.0, %v1856
      %v1858 = vpop.f32.mrb[0].mxu0
      %1859 = vmatprep.mubr.bf16.mxu0 0
      %1860 = vmatmul.mubr.bf16.gmra.mrb[0].mxu0 %v1803
      %v1861 = vpop.f32.mrb[0].mxu0
      %v1862 = vadd.f32 0.0, %v1861
      %v1863 = vpop.f32.mrb[0].mxu0
      %v1864 = vpop.f32.mrb[0].mxu0
      %v1865 = vadd.f32 0.0, %v1864
      %v1866 = vpop.f32.mrb[0].mxu0
      %1867 = vmatprep.mubr.bf16.mxu0 0
      %1868 = vmatmul.mubr.bf16.gmra.mrb[0].mxu0 %v1806
      %v1869 = vpop.f32.mrb[0].mxu0
      %v1870 = vadd.f32 0.0, %v1869
      %v1871 = vpop.f32.mrb[0].mxu0
      %v1872 = vpop.f32.mrb[0].mxu0
      %v1873 = vadd.f32 0.0, %v1872
      %v1874 = vpop.f32.mrb[0].mxu0
      %1875 = vdwg.mxu0
      %v1876 = vadd.f32 %v1718, %v1846
      %v1877 = vadd.f32 %v1719, %v1849
      %v1878 = vadd.f32 %v1720, %v1854
      %v1879 = vadd.f32 %v1721, %v1857
      %v1880 = vadd.f32 %v1722, %v1862
      %v1881 = vadd.f32 %v1723, %v1865
      %v1882 = vadd.f32 %v1724, %v1870
      %v1883 = vadd.f32 %v1725, %v1873
      %v1885 = vlaneseq
      %v1886 = vshrl.u32 %v1885, 7
      %v1887 = vsub.s32 0, %v1886
      %v1888 = vrot.slane %v379, %v1887
      %v1890 = vmul.f32 %v1876, %v1888
      %v1891 = vmul.f32 %v1877, %v1888
      %v1892 = vmul.f32 %v1878, %v1888
      %v1893 = vmul.f32 %v1879, %v1888
      %v1894 = vmul.f32 %v1880, %v1888
      %v1895 = vmul.f32 %v1881, %v1888
      %v1896 = vmul.f32 %v1882, %v1888
      %v1897 = vmul.f32 %v1883, %v1888
      %v1899 = vlaneseq
      %v1900 = vshrl.u32 %v1899, 7
      %v1901 = vsub.s32 0, %v1900
      %v1902 = vrot.slane %v380, %v1901
      %v1904 = vadd.f32 %v1890, %v1902
      %v1905 = vadd.f32 %v1891, %v1902
      %v1906 = vadd.f32 %v1892, %v1902
      %v1907 = vadd.f32 %v1893, %v1902
      %v1908 = vadd.f32 %v1894, %v1902
      %v1909 = vadd.f32 %v1895, %v1902
      %v1910 = vadd.f32 %v1896, %v1902
      %v1911 = vadd.f32 %v1897, %v1902
      %v1912 = vmax.f32 %v1904, 0.0
      %v1913 = vmax.f32 %v1905, 0.0
      %v1914 = vmax.f32 %v1906, 0.0
      %v1915 = vmax.f32 %v1907, 0.0
      %v1916 = vmax.f32 %v1908, 0.0
      %v1917 = vmax.f32 %v1909, 0.0
      %v1918 = vmax.f32 %v1910, 0.0
      %v1919 = vmax.f32 %v1911, 0.0
      %v1920 = vpack.c.bf16 %v1912, %v1912
      %v1921 = vpack.c.bf16 %v1913, %v1913
      %v1922 = vpack.c.bf16 %v1914, %v1914
      %v1923 = vpack.c.bf16 %v1915, %v1915
      %v1924 = vpack.c.bf16 %v1916, %v1916
      %v1925 = vpack.c.bf16 %v1917, %v1917
      %v1926 = vpack.c.bf16 %v1918, %v1918
      %v1927 = vpack.c.bf16 %v1919, %v1919
      %v1936 = vunpack.c.l.b16 %v1920
      %v1937 = vunpack.c.l.b16 %v1921
      %v1938 = vunpack.c.l.b16 %v1922
      %v1939 = vunpack.c.l.b16 %v1923
      %v1940 = vunpack.c.l.b16 %v1924
      %v1941 = vunpack.c.l.b16 %v1925
      %v1942 = vunpack.c.l.b16 %v1926
      %v1943 = vunpack.c.l.b16 %v1927
      %v1944 = vpack.c.b16 %v1936, %v1936
      %v1945 = vpack.c.b16 %v1937, %v1937
      %v1946 = vpack.c.b16 %v1938, %v1938
      %v1947 = vpack.c.b16 %v1939, %v1939
      %v1948 = vpack.c.b16 %v1940, %v1940
      %v1949 = vpack.c.b16 %v1941, %v1941
      %v1950 = vpack.c.b16 %v1942, %v1942
      %v1951 = vpack.c.b16 %v1943, %v1943
      %v1953 = vshrl.u32 %v1944, 16
      %v1955 = vrot.slane %v1953, 7
      %v1956 = vshll.u32 %v1944, 16
      %v1958 = vor.u32 %v1955, %v1956
      %v1959 = vrot.slane %v1955, 4
      %v1961 = vshrl.u32 %v1945, 16
      %v1963 = vrot.slane %v1961, 7
      %v1964 = vshll.u32 %v1945, 16
      %v1966 = vor.u32 %v1963, %v1964
      %v1967 = vrot.slane %v1963, 4
      %v1969 = vshrl.u32 %v1946, 16
      %v1971 = vrot.slane %v1969, 7
      %v1972 = vshll.u32 %v1946, 16
      %v1974 = vor.u32 %v1971, %v1972
      %v1975 = vrot.slane %v1971, 4
      %v1977 = vshrl.u32 %v1947, 16
      %v1979 = vrot.slane %v1977, 7
      %v1980 = vshll.u32 %v1947, 16
      %v1982 = vor.u32 %v1979, %v1980
      %v1983 = vrot.slane %v1979, 4
      %v1985 = vshrl.u32 %v1948, 16
      %v1987 = vrot.slane %v1985, 7
      %v1988 = vshll.u32 %v1948, 16
      %v1990 = vor.u32 %v1987, %v1988
      %v1991 = vrot.slane %v1987, 4
      %v1993 = vshrl.u32 %v1949, 16
      %v1995 = vrot.slane %v1993, 7
      %v1996 = vshll.u32 %v1949, 16
      %v1998 = vor.u32 %v1995, %v1996
      %v1999 = vrot.slane %v1995, 4
      %v2001 = vshrl.u32 %v1950, 16
      %v2003 = vrot.slane %v2001, 7
      %v2004 = vshll.u32 %v1950, 16
      %v2006 = vor.u32 %v2003, %v2004
      %v2007 = vrot.slane %v2003, 4
      %v2009 = vshrl.u32 %v1951, 16
      %v2011 = vrot.slane %v2009, 7
      %v2012 = vshll.u32 %v1951, 16
      %v2014 = vor.u32 %v2011, %v2012
      %v2015 = vrot.slane %v2011, 4
      %s2032 = scalar_lea.vmem [#allocation2], 8
      %vm2033 = vcmask 60416
      %vm2034 = vmand %vm2033, %vm347
      %v2035 = vld [vmem:[%s2032] sm:$0xf]
      %v2036 = vsel %vm2034, %v1958, %v2035
      %2037 = vst [vmem:[%s2032] sm:$0xf] %v2036
      %v2038 = vld [vmem:[%s2032 + $0x4] sm:$0x1]
      %v2039 = vsel %vm316, %v1959, %v2038
      %2040 = vst [vmem:[%s2032 + $0x4] sm:$0x1] %v2039
      %v2041 = vld [vmem:[%s2032 + $0x8] sm:$0xf]
      %v2042 = vsel %vm2034, %v1966, %v2041
      %2043 = vst [vmem:[%s2032 + $0x8] sm:$0xf] %v2042
      %v2044 = vld [vmem:[%s2032 + $0xc] sm:$0x1]
      %v2045 = vsel %vm316, %v1967, %v2044
      %2046 = vst [vmem:[%s2032 + $0xc] sm:$0x1] %v2045
      %v2047 = vld [vmem:[%s2032 + $0x10] sm:$0xf]
      %v2048 = vsel %vm2034, %v1974, %v2047
      %2049 = vst [vmem:[%s2032 + $0x10] sm:$0xf] %v2048
      %v2050 = vld [vmem:[%s2032 + $0x14] sm:$0x1]
      %v2051 = vsel %vm316, %v1975, %v2050
      %2052 = vst [vmem:[%s2032 + $0x14] sm:$0x1] %v2051
      %v2053 = vld [vmem:[%s2032 + $0x18] sm:$0xf]
      %v2054 = vsel %vm2034, %v1982, %v2053
      %2055 = vst [vmem:[%s2032 + $0x18] sm:$0xf] %v2054
      %v2056 = vld [vmem:[%s2032 + $0x1c] sm:$0x1]
      %v2057 = vsel %vm316, %v1983, %v2056
      %2058 = vst [vmem:[%s2032 + $0x1c] sm:$0x1] %v2057
      %v2059 = vld [vmem:[%s2032 + $0x20] sm:$0xf]
      %v2060 = vsel %vm2034, %v1990, %v2059
      %2061 = vst [vmem:[%s2032 + $0x20] sm:$0xf] %v2060
      %v2062 = vld [vmem:[%s2032 + $0x24] sm:$0x1]
      %v2063 = vsel %vm316, %v1991, %v2062
      %2064 = vst [vmem:[%s2032 + $0x24] sm:$0x1] %v2063
      %v2065 = vld [vmem:[%s2032 + $0x28] sm:$0xf]
      %v2066 = vsel %vm2034, %v1998, %v2065
      %2067 = vst [vmem:[%s2032 + $0x28] sm:$0xf] %v2066
      %v2068 = vld [vmem:[%s2032 + $0x2c] sm:$0x1]
      %v2069 = vsel %vm316, %v1999, %v2068
      %2070 = vst [vmem:[%s2032 + $0x2c] sm:$0x1] %v2069
      %v2071 = vld [vmem:[%s2032 + $0x30] sm:$0xf]
      %v2072 = vsel %vm2034, %v2006, %v2071
      %2073 = vst [vmem:[%s2032 + $0x30] sm:$0xf] %v2072
      %v2074 = vld [vmem:[%s2032 + $0x34] sm:$0x1]
      %v2075 = vsel %vm316, %v2007, %v2074
      %2076 = vst [vmem:[%s2032 + $0x34] sm:$0x1] %v2075
      %v2077 = vld [vmem:[%s2032 + $0x38] sm:$0xf]
      %v2078 = vsel %vm2034, %v2014, %v2077
      %2079 = vst [vmem:[%s2032 + $0x38] sm:$0xf] %v2078
      %v2080 = vld [vmem:[%s2032 + $0x3c] sm:$0x1]
      %v2081 = vsel %vm316, %v2015, %v2080
      %2082 = vst [vmem:[%s2032 + $0x3c] sm:$0x1] %v2081
      %v2083 = vld [vmem:[%s5] sm:$0x1]
      %v2084 = vld [vmem:[%s6] sm:$0x1]
      %v2085 = vld [vmem:[#allocation2] sm:$0xf]
      %v2086 = vld [vmem:[#allocation2 + $0x8] sm:$0xf]
      %v2087 = vld [vmem:[#allocation2 + $0x10] sm:$0xf]
      %v2088 = vld [vmem:[#allocation2 + $0x18] sm:$0xf]
      %v2089 = vld [vmem:[#allocation2 + $0x20] sm:$0xf]
      %v2090 = vld [vmem:[#allocation2 + $0x28] sm:$0xf]
      %v2091 = vld [vmem:[#allocation2 + $0x30] sm:$0xf]
      %v2092 = vld [vmem:[#allocation2 + $0x38] sm:$0xf]
      %v2093 = vld [vmem:[%s4] sm:$0xf]
      %v2094 = vld [vmem:[#allocation2 + $0x4] sm:$0x1]
      %v2095 = vld [vmem:[#allocation2 + $0xc] sm:$0x1]
      %v2096 = vld [vmem:[#allocation2 + $0x14] sm:$0x1]
      %v2097 = vld [vmem:[#allocation2 + $0x1c] sm:$0x1]
      %v2098 = vld [vmem:[#allocation2 + $0x24] sm:$0x1]
      %v2099 = vld [vmem:[#allocation2 + $0x2c] sm:$0x1]
      %v2100 = vld [vmem:[#allocation2 + $0x34] sm:$0x1]
      %v2101 = vld [vmem:[#allocation2 + $0x3c] sm:$0x1]
      %v2103 = vshrl.u32 %v2085, 16
      %v2105 = vrot.slane %v2103, 4
      %v2106 = vshll.u32 %v2085, 16
      %v2108 = vrot.slane %v2106, 5
      %v2109 = vor.u32 %v2105, %v2108
      %v2110 = vrot.slane %v2109, 4
      %v2112 = vshll.u32 %v2094, 16
      %v2114 = vrot.slane %v2112, 5
      %v2115 = vsel %vm400, %v2110, %v2114
      %v2117 = vshrl.u32 %v2086, 16
      %v2119 = vrot.slane %v2117, 4
      %v2120 = vshll.u32 %v2086, 16
      %v2122 = vrot.slane %v2120, 5
      %v2123 = vor.u32 %v2119, %v2122
      %v2124 = vrot.slane %v2123, 4
      %v2126 = vshll.u32 %v2095, 16
      %v2128 = vrot.slane %v2126, 5
      %v2129 = vsel %vm400, %v2124, %v2128
      %v2131 = vshrl.u32 %v2087, 16
      %v2133 = vrot.slane %v2131, 4
      %v2134 = vshll.u32 %v2087, 16
      %v2136 = vrot.slane %v2134, 5
      %v2137 = vor.u32 %v2133, %v2136
      %v2138 = vrot.slane %v2137, 4
      %v2140 = vshll.u32 %v2096, 16
      %v2142 = vrot.slane %v2140, 5
      %v2143 = vsel %vm400, %v2138, %v2142
      %v2145 = vshrl.u32 %v2088, 16
      %v2147 = vrot.slane %v2145, 4
      %v2148 = vshll.u32 %v2088, 16
      %v2150 = vrot.slane %v2148, 5
      %v2151 = vor.u32 %v2147, %v2150
      %v2152 = vrot.slane %v2151, 4
      %v2154 = vshll.u32 %v2097, 16
      %v2156 = vrot.slane %v2154, 5
      %v2157 = vsel %vm400, %v2152, %v2156
      %v2159 = vshrl.u32 %v2089, 16
      %v2161 = vrot.slane %v2159, 4
      %v2162 = vshll.u32 %v2089, 16
      %v2164 = vrot.slane %v2162, 5
      %v2165 = vor.u32 %v2161, %v2164
      %v2166 = vrot.slane %v2165, 4
      %v2168 = vshll.u32 %v2098, 16
      %v2170 = vrot.slane %v2168, 5
      %v2171 = vsel %vm400, %v2166, %v2170
      %v2173 = vshrl.u32 %v2090, 16
      %v2175 = vrot.slane %v2173, 4
      %v2176 = vshll.u32 %v2090, 16
      %v2178 = vrot.slane %v2176, 5
      %v2179 = vor.u32 %v2175, %v2178
      %v2180 = vrot.slane %v2179, 4
      %v2182 = vshll.u32 %v2099, 16
      %v2184 = vrot.slane %v2182, 5
      %v2185 = vsel %vm400, %v2180, %v2184
      %v2187 = vshrl.u32 %v2091, 16
      %v2189 = vrot.slane %v2187, 4
      %v2190 = vshll.u32 %v2091, 16
      %v2192 = vrot.slane %v2190, 5
      %v2193 = vor.u32 %v2189, %v2192
      %v2194 = vrot.slane %v2193, 4
      %v2196 = vshll.u32 %v2100, 16
      %v2198 = vrot.slane %v2196, 5
      %v2199 = vsel %vm400, %v2194, %v2198
      %v2201 = vshrl.u32 %v2092, 16
      %v2203 = vrot.slane %v2201, 4
      %v2204 = vshll.u32 %v2092, 16
      %v2206 = vrot.slane %v2204, 5
      %v2207 = vor.u32 %v2203, %v2206
      %v2208 = vrot.slane %v2207, 4
      %v2210 = vshll.u32 %v2101, 16
      %v2212 = vrot.slane %v2210, 5
      %v2213 = vsel %vm400, %v2208, %v2212
      %s2214 = scalar_lea.vmem %s4, 4
      %v2215 = vld [vmem:[%s2214] sm:$0xf]
      %v2216 = vunpack.c.l.b16 %v2115
      %v2217 = vunpack.c.l.b16 %v2129
      %v2218 = vunpack.c.l.b16 %v2143
      %v2219 = vunpack.c.l.b16 %v2157
      %v2220 = vunpack.c.l.b16 %v2171
      %v2221 = vunpack.c.l.b16 %v2185
      %v2222 = vunpack.c.l.b16 %v2199
      %v2223 = vunpack.c.l.b16 %v2213
      %v2224 = vpack.c.b16 %v2217, %v2216
      %v2225 = vpack.c.b16 %v2219, %v2218
      %v2226 = vpack.c.b16 %v2221, %v2220
      %v2227 = vpack.c.b16 %v2223, %v2222
      %vm2228 = vcmask 64512
      %v2230 = vsel %vm2228, %v2224, 0
      %v2233 = vsel %vm2228, %v2225, 0
      %v2236 = vsel %vm2228, %v2226, 0
      %v2239 = vsel %vm2228, %v2227, 0
      %vm2241 = vcmask 1043456
      %v2243 = vsel %vm2241, %v2215, 0
      %2245 = vmatprep.subr.bf16.mxu0 0
      %2246 = vmatpush1.bf16.msra.mxu0 %v2243
      %2247 = vmatprep.subr.bf16.mxu0 0
      %2248 = vmatpush1.bf16.msra.mxu0 0
      %2249 = vmatprep.subr.bf16.mxu0 0
      %2250 = vmatpush1.bf16.msra.mxu0 0
      %2251 = vmatprep.subr.bf16.mxu0 0
      %2252 = vmatpush1.bf16.msra.mxu0 0
      %2253 = vmatprep.subr.bf16.mxu0 0
      %2254 = vmatpush1.bf16.msra.mxu0 0
      %2255 = vmatprep.subr.bf16.mxu0 0
      %2256 = vmatpush1.bf16.msra.mxu0 0
      %2257 = vmatprep.subr.bf16.mxu0 0
      %2258 = vmatpush1.bf16.msra.mxu0 0
      %2259 = vmatprep.subr.bf16.mxu0 0
      %2260 = vmatpush1.bf16.msra.mxu0 0
      %2261 = vmatprep.subr.bf16.mxu0 0
      %2262 = vmatpush1.bf16.msra.mxu0 0
      %2263 = vmatprep.subr.bf16.mxu0 0
      %2264 = vmatpush1.bf16.msra.mxu0 0
      %2265 = vmatprep.subr.bf16.mxu0 0
      %2266 = vmatpush1.bf16.msra.mxu0 0
      %2267 = vmatprep.subr.bf16.mxu0 0
      %2268 = vmatpush1.bf16.msra.mxu0 0
      %2269 = vmatprep.subr.bf16.mxu0 0
      %2270 = vmatpush1.bf16.msra.mxu0 0
      %2271 = vmatprep.subr.bf16.mxu0 0
      %2272 = vmatpush1.bf16.msra.mxu0 0
      %2273 = vmatprep.subr.bf16.mxu0 0
      %2274 = vmatpush1.bf16.msra.mxu0 0
      %2275 = vmatprep.subr.bf16.mxu0 0
      %2276 = vmatpush1.bf16.msra.mxu0 0
      %2277 = vmatprep.mubr.bf16.mxu0 0
      %2278 = vmatmul.mubr.bf16.gmra.mrb[0].mxu0 %v2230
      %v2279 = vpop.f32.mrb[0].mxu0
      %v2280 = vadd.f32 0.0, %v2279
      %v2281 = vpop.f32.mrb[0].mxu0
      %v2282 = vpop.f32.mrb[0].mxu0
      %v2283 = vadd.f32 0.0, %v2282
      %v2284 = vpop.f32.mrb[0].mxu0
      %2285 = vmatprep.mubr.bf16.mxu0 0
      %2286 = vmatmul.mubr.bf16.gmra.mrb[0].mxu0 %v2233
      %v2287 = vpop.f32.mrb[0].mxu0
      %v2288 = vadd.f32 0.0, %v2287
      %v2289 = vpop.f32.mrb[0].mxu0
      %v2290 = vpop.f32.mrb[0].mxu0
      %v2291 = vadd.f32 0.0, %v2290
      %v2292 = vpop.f32.mrb[0].mxu0
      %2293 = vmatprep.mubr.bf16.mxu0 0
      %2294 = vmatmul.mubr.bf16.gmra.mrb[0].mxu0 %v2236
      %v2295 = vpop.f32.mrb[0].mxu0
      %v2296 = vadd.f32 0.0, %v2295
      %v2297 = vpop.f32.mrb[0].mxu0
      %v2298 = vpop.f32.mrb[0].mxu0
      %v2299 = vadd.f32 0.0, %v2298
      %v2300 = vpop.f32.mrb[0].mxu0
      %2301 = vmatprep.mubr.bf16.mxu0 0
      %2302 = vmatmul.mubr.bf16.gmra.mrb[0].mxu0 %v2239
      %v2303 = vpop.f32.mrb[0].mxu0
      %v2304 = vadd.f32 0.0, %v2303
      %v2305 = vpop.f32.mrb[0].mxu0
      %v2306 = vpop.f32.mrb[0].mxu0
      %v2307 = vadd.f32 0.0, %v2306
      %v2308 = vpop.f32.mrb[0].mxu0
      %2309 = vdwg.mxu0
      %v2318 = vunpack.c.l.b16 %v2085
      %v2319 = vunpack.c.l.b16 %v2086
      %v2320 = vunpack.c.l.b16 %v2087
      %v2321 = vunpack.c.l.b16 %v2088
      %v2322 = vunpack.c.l.b16 %v2089
      %v2323 = vunpack.c.l.b16 %v2090
      %v2324 = vunpack.c.l.b16 %v2091
      %v2325 = vunpack.c.l.b16 %v2092
      %v2326 = vpack.c.b16 %v2319, %v2318
      %v2327 = vpack.c.b16 %v2321, %v2320
      %v2328 = vpack.c.b16 %v2323, %v2322
      %v2329 = vpack.c.b16 %v2325, %v2324
      %v2331 = vsel %vm2228, %v2326, 0
      %v2334 = vsel %vm2228, %v2327, 0
      %v2337 = vsel %vm2228, %v2328, 0
      %v2340 = vsel %vm2228, %v2329, 0
      %v2343 = vsel %vm2241, %v2093, 0
      %2345 = vmatprep.subr.bf16.mxu0 0
      %2346 = vmatpush1.bf16.msra.mxu0 %v2343
      %2347 = vmatprep.subr.bf16.mxu0 0
      %2348 = vmatpush1.bf16.msra.mxu0 0
      %2349 = vmatprep.subr.bf16.mxu0 0
      %2350 = vmatpush1.bf16.msra.mxu0 0
      %2351 = vmatprep.subr.bf16.mxu0 0
      %2352 = vmatpush1.bf16.msra.mxu0 0
      %2353 = vmatprep.subr.bf16.mxu0 0
      %2354 = vmatpush1.bf16.msra.mxu0 0
      %2355 = vmatprep.subr.bf16.mxu0 0
      %2356 = vmatpush1.bf16.msra.mxu0 0
      %2357 = vmatprep.subr.bf16.mxu0 0
      %2358 = vmatpush1.bf16.msra.mxu0 0
      %2359 = vmatprep.subr.bf16.mxu0 0
      %2360 = vmatpush1.bf16.msra.mxu0 0
      %2361 = vmatprep.subr.bf16.mxu0 0
      %2362 = vmatpush1.bf16.msra.mxu0 0
      %2363 = vmatprep.subr.bf16.mxu0 0
      %2364 = vmatpush1.bf16.msra.mxu0 0
      %2365 = vmatprep.subr.bf16.mxu0 0
      %2366 = vmatpush1.bf16.msra.mxu0 0
      %2367 = vmatprep.subr.bf16.mxu0 0
      %2368 = vmatpush1.bf16.msra.mxu0 0
      %2369 = vmatprep.subr.bf16.mxu0 0
      %2370 = vmatpush1.bf16.msra.mxu0 0
      %2371 = vmatprep.subr.bf16.mxu0 0
      %2372 = vmatpush1.bf16.msra.mxu0 0
      %2373 = vmatprep.subr.bf16.mxu0 0
      %2374 = vmatpush1.bf16.msra.mxu0 0
      %2375 = vmatprep.subr.bf16.mxu0 0
      %2376 = vmatpush1.bf16.msra.mxu0 0
      %2377 = vmatprep.mubr.bf16.mxu0 0
      %2378 = vmatmul.mubr.bf16.gmra.mrb[0].mxu0 %v2331
      %v2379 = vpop.f32.mrb[0].mxu0
      %v2380 = vadd.f32 %v2280, %v2379
      %v2381 = vpop.f32.mrb[0].mxu0
      %v2382 = vpop.f32.mrb[0].mxu0
      %v2383 = vadd.f32 %v2283, %v2382
      %v2384 = vpop.f32.mrb[0].mxu0
      %2385 = vmatprep.mubr.bf16.mxu0 0
      %2386 = vmatmul.mubr.bf16.gmra.mrb[0].mxu0 %v2334
      %v2387 = vpop.f32.mrb[0].mxu0
      %v2388 = vadd.f32 %v2288, %v2387
      %v2389 = vpop.f32.mrb[0].mxu0
      %v2390 = vpop.f32.mrb[0].mxu0
      %v2391 = vadd.f32 %v2291, %v2390
      %v2392 = vpop.f32.mrb[0].mxu0
      %2393 = vmatprep.mubr.bf16.mxu0 0
      %2394 = vmatmul.mubr.bf16.gmra.mrb[0].mxu0 %v2337
      %v2395 = vpop.f32.mrb[0].mxu0
      %v2396 = vadd.f32 %v2296, %v2395
      %v2397 = vpop.f32.mrb[0].mxu0
      %v2398 = vpop.f32.mrb[0].mxu0
      %v2399 = vadd.f32 %v2299, %v2398
      %v2400 = vpop.f32.mrb[0].mxu0
      %2401 = vmatprep.mubr.bf16.mxu0 0
      %2402 = vmatmul.mubr.bf16.gmra.mrb[0].mxu0 %v2340
      %v2403 = vpop.f32.mrb[0].mxu0
      %v2404 = vadd.f32 %v2304, %v2403
      %v2405 = vpop.f32.mrb[0].mxu0
      %v2406 = vpop.f32.mrb[0].mxu0
      %v2407 = vadd.f32 %v2307, %v2406
      %v2408 = vpop.f32.mrb[0].mxu0
      %2409 = vdwg.mxu0
      %v2410 = vld [vmem:[#allocation2] sm:$0xe]
      %v2411 = vld [vmem:[#allocation2 + $0x8] sm:$0xe]
      %v2412 = vld [vmem:[#allocation2 + $0x10] sm:$0xe]
      %v2413 = vld [vmem:[#allocation2 + $0x18] sm:$0xe]
      %v2414 = vld [vmem:[#allocation2 + $0x20] sm:$0xe]
      %v2415 = vld [vmem:[#allocation2 + $0x28] sm:$0xe]
      %v2416 = vld [vmem:[#allocation2 + $0x30] sm:$0xe]
      %v2417 = vld [vmem:[#allocation2 + $0x38] sm:$0xe]
      %v2434 = vrot.slane %v2410, 5
      %v2435 = vrot.slane %v2434, 4
      %v2436 = vrot.slane %v2094, 5
      %v2437 = vsel %vm735, %v2435, %v2436
      %v2438 = vrot.slane %v2411, 5
      %v2439 = vrot.slane %v2438, 4
      %v2440 = vrot.slane %v2095, 5
      %v2441 = vsel %vm735, %v2439, %v2440
      %v2442 = vrot.slane %v2412, 5
      %v2443 = vrot.slane %v2442, 4
      %v2444 = vrot.slane %v2096, 5
      %v2445 = vsel %vm735, %v2443, %v2444
      %v2446 = vrot.slane %v2413, 5
      %v2447 = vrot.slane %v2446, 4
      %v2448 = vrot.slane %v2097, 5
      %v2449 = vsel %vm735, %v2447, %v2448
      %v2450 = vrot.slane %v2414, 5
      %v2451 = vrot.slane %v2450, 4
      %v2452 = vrot.slane %v2098, 5
      %v2453 = vsel %vm735, %v2451, %v2452
      %v2454 = vrot.slane %v2415, 5
      %v2455 = vrot.slane %v2454, 4
      %v2456 = vrot.slane %v2099, 5
      %v2457 = vsel %vm735, %v2455, %v2456
      %v2458 = vrot.slane %v2416, 5
      %v2459 = vrot.slane %v2458, 4
      %v2460 = vrot.slane %v2100, 5
      %v2461 = vsel %vm735, %v2459, %v2460
      %v2462 = vrot.slane %v2417, 5
      %v2463 = vrot.slane %v2462, 4
      %v2464 = vrot.slane %v2101, 5
      %v2465 = vsel %vm735, %v2463, %v2464
      %s2466 = scalar_lea.vmem %s4, 8
      %v2467 = vld [vmem:[%s2466] sm:$0xf]
      %v2468 = vunpack.c.l.b16 %v2437
      %v2469 = vunpack.c.l.b16 %v2441
      %v2470 = vunpack.c.l.b16 %v2445
      %v2471 = vunpack.c.l.b16 %v2449
      %v2472 = vunpack.c.l.b16 %v2453
      %v2473 = vunpack.c.l.b16 %v2457
      %v2474 = vunpack.c.l.b16 %v2461
      %v2475 = vunpack.c.l.b16 %v2465
      %v2476 = vpack.c.b16 %v2469, %v2468
      %v2477 = vpack.c.b16 %v2471, %v2470
      %v2478 = vpack.c.b16 %v2473, %v2472
      %v2479 = vpack.c.b16 %v2475, %v2474
      %v2481 = vsel %vm2228, %v2476, 0
      %v2484 = vsel %vm2228, %v2477, 0
      %v2487 = vsel %vm2228, %v2478, 0
      %v2490 = vsel %vm2228, %v2479, 0
      %v2493 = vsel %vm2241, %v2467, 0
      %2495 = vmatprep.subr.bf16.mxu0 0
      %2496 = vmatpush1.bf16.msra.mxu0 %v2493
      %2497 = vmatprep.subr.bf16.mxu0 0
      %2498 = vmatpush1.bf16.msra.mxu0 0
      %2499 = vmatprep.subr.bf16.mxu0 0
      %2500 = vmatpush1.bf16.msra.mxu0 0
      %2501 = vmatprep.subr.bf16.mxu0 0
      %2502 = vmatpush1.bf16.msra.mxu0 0
      %2503 = vmatprep.subr.bf16.mxu0 0
      %2504 = vmatpush1.bf16.msra.mxu0 0
      %2505 = vmatprep.subr.bf16.mxu0 0
      %2506 = vmatpush1.bf16.msra.mxu0 0
      %2507 = vmatprep.subr.bf16.mxu0 0
      %2508 = vmatpush1.bf16.msra.mxu0 0
      %2509 = vmatprep.subr.bf16.mxu0 0
      %2510 = vmatpush1.bf16.msra.mxu0 0
      %2511 = vmatprep.subr.bf16.mxu0 0
      %2512 = vmatpush1.bf16.msra.mxu0 0
      %2513 = vmatprep.subr.bf16.mxu0 0
      %2514 = vmatpush1.bf16.msra.mxu0 0
      %2515 = vmatprep.subr.bf16.mxu0 0
      %2516 = vmatpush1.bf16.msra.mxu0 0
      %2517 = vmatprep.subr.bf16.mxu0 0
      %2518 = vmatpush1.bf16.msra.mxu0 0
      %2519 = vmatprep.subr.bf16.mxu0 0
      %2520 = vmatpush1.bf16.msra.mxu0 0
      %2521 = vmatprep.subr.bf16.mxu0 0
      %2522 = vmatpush1.bf16.msra.mxu0 0
      %2523 = vmatprep.subr.bf16.mxu0 0
      %2524 = vmatpush1.bf16.msra.mxu0 0
      %2525 = vmatprep.subr.bf16.mxu0 0
      %2526 = vmatpush1.bf16.msra.mxu0 0
      %2527 = vmatprep.mubr.bf16.mxu0 0
      %2528 = vmatmul.mubr.bf16.gmra.mrb[0].mxu0 %v2481
      %v2529 = vpop.f32.mrb[0].mxu0
      %v2530 = vadd.f32 0.0, %v2529
      %v2531 = vpop.f32.mrb[0].mxu0
      %v2532 = vpop.f32.mrb[0].mxu0
      %v2533 = vadd.f32 0.0, %v2532
      %v2534 = vpop.f32.mrb[0].mxu0
      %2535 = vmatprep.mubr.bf16.mxu0 0
      %2536 = vmatmul.mubr.bf16.gmra.mrb[0].mxu0 %v2484
      %v2537 = vpop.f32.mrb[0].mxu0
      %v2538 = vadd.f32 0.0, %v2537
      %v2539 = vpop.f32.mrb[0].mxu0
      %v2540 = vpop.f32.mrb[0].mxu0
      %v2541 = vadd.f32 0.0, %v2540
      %v2542 = vpop.f32.mrb[0].mxu0
      %2543 = vmatprep.mubr.bf16.mxu0 0
      %2544 = vmatmul.mubr.bf16.gmra.mrb[0].mxu0 %v2487
      %v2545 = vpop.f32.mrb[0].mxu0
      %v2546 = vadd.f32 0.0, %v2545
      %v2547 = vpop.f32.mrb[0].mxu0
      %v2548 = vpop.f32.mrb[0].mxu0
      %v2549 = vadd.f32 0.0, %v2548
      %v2550 = vpop.f32.mrb[0].mxu0
      %2551 = vmatprep.mubr.bf16.mxu0 0
      %2552 = vmatmul.mubr.bf16.gmra.mrb[0].mxu0 %v2490
      %v2553 = vpop.f32.mrb[0].mxu0
      %v2554 = vadd.f32 0.0, %v2553
      %v2555 = vpop.f32.mrb[0].mxu0
      %v2556 = vpop.f32.mrb[0].mxu0
      %v2557 = vadd.f32 0.0, %v2556
      %v2558 = vpop.f32.mrb[0].mxu0
      %2559 = vdwg.mxu0
      %v2560 = vadd.f32 %v2380, %v2530
      %v2561 = vadd.f32 %v2383, %v2533
      %v2562 = vadd.f32 %v2388, %v2538
      %v2563 = vadd.f32 %v2391, %v2541
      %v2564 = vadd.f32 %v2396, %v2546
      %v2565 = vadd.f32 %v2399, %v2549
      %v2566 = vadd.f32 %v2404, %v2554
      %v2567 = vadd.f32 %v2407, %v2557
      %v2568 = vld [vmem:[%s2032] sm:$0xf]
      %v2569 = vld [vmem:[%s2032 + $0x8] sm:$0xf]
      %v2570 = vld [vmem:[%s2032 + $0x10] sm:$0xf]
      %v2571 = vld [vmem:[%s2032 + $0x18] sm:$0xf]
      %v2572 = vld [vmem:[%s2032 + $0x20] sm:$0xf]
      %v2573 = vld [vmem:[%s2032 + $0x28] sm:$0xf]
      %v2574 = vld [vmem:[%s2032 + $0x30] sm:$0xf]
      %v2575 = vld [vmem:[%s2032 + $0x38] sm:$0xf]
      %s2576 = scalar_lea.vmem %s4, 12
      %v2577 = vld [vmem:[%s2576] sm:$0xf]
      %v2586 = vunpack.c.l.b16 %v2568
      %v2587 = vunpack.c.l.b16 %v2569
      %v2588 = vunpack.c.l.b16 %v2570
      %v2589 = vunpack.c.l.b16 %v2571
      %v2590 = vunpack.c.l.b16 %v2572
      %v2591 = vunpack.c.l.b16 %v2573
      %v2592 = vunpack.c.l.b16 %v2574
      %v2593 = vunpack.c.l.b16 %v2575
      %v2594 = vpack.c.b16 %v2587, %v2586
      %v2595 = vpack.c.b16 %v2589, %v2588
      %v2596 = vpack.c.b16 %v2591, %v2590
      %v2597 = vpack.c.b16 %v2593, %v2592
      %v2599 = vsel %vm2228, %v2594, 0
      %v2602 = vsel %vm2228, %v2595, 0
      %v2605 = vsel %vm2228, %v2596, 0
      %v2608 = vsel %vm2228, %v2597, 0
      %v2611 = vsel %vm2241, %v2577, 0
      %2613 = vmatprep.subr.bf16.mxu0 0
      %2614 = vmatpush1.bf16.msra.mxu0 %v2611
      %2615 = vmatprep.subr.bf16.mxu0 0
      %2616 = vmatpush1.bf16.msra.mxu0 0
      %2617 = vmatprep.subr.bf16.mxu0 0
      %2618 = vmatpush1.bf16.msra.mxu0 0
      %2619 = vmatprep.subr.bf16.mxu0 0
      %2620 = vmatpush1.bf16.msra.mxu0 0
      %2621 = vmatprep.subr.bf16.mxu0 0
      %2622 = vmatpush1.bf16.msra.mxu0 0
      %2623 = vmatprep.subr.bf16.mxu0 0
      %2624 = vmatpush1.bf16.msra.mxu0 0
      %2625 = vmatprep.subr.bf16.mxu0 0
      %2626 = vmatpush1.bf16.msra.mxu0 0
      %2627 = vmatprep.subr.bf16.mxu0 0
      %2628 = vmatpush1.bf16.msra.mxu0 0
      %2629 = vmatprep.subr.bf16.mxu0 0
      %2630 = vmatpush1.bf16.msra.mxu0 0
      %2631 = vmatprep.subr.bf16.mxu0 0
      %2632 = vmatpush1.bf16.msra.mxu0 0
      %2633 = vmatprep.subr.bf16.mxu0 0
      %2634 = vmatpush1.bf16.msra.mxu0 0
      %2635 = vmatprep.subr.bf16.mxu0 0
      %2636 = vmatpush1.bf16.msra.mxu0 0
      %2637 = vmatprep.subr.bf16.mxu0 0
      %2638 = vmatpush1.bf16.msra.mxu0 0
      %2639 = vmatprep.subr.bf16.mxu0 0
      %2640 = vmatpush1.bf16.msra.mxu0 0
      %2641 = vmatprep.subr.bf16.mxu0 0
      %2642 = vmatpush1.bf16.msra.mxu0 0
      %2643 = vmatprep.subr.bf16.mxu0 0
      %2644 = vmatpush1.bf16.msra.mxu0 0
      %2645 = vmatprep.mubr.bf16.mxu0 0
      %2646 = vmatmul.mubr.bf16.gmra.mrb[0].mxu0 %v2599
      %v2647 = vpop.f32.mrb[0].mxu0
      %v2648 = vadd.f32 0.0, %v2647
      %v2649 = vpop.f32.mrb[0].mxu0
      %v2650 = vpop.f32.mrb[0].mxu0
      %v2651 = vadd.f32 0.0, %v2650
      %v2652 = vpop.f32.mrb[0].mxu0
      %2653 = vmatprep.mubr.bf16.mxu0 0
      %2654 = vmatmul.mubr.bf16.gmra.mrb[0].mxu0 %v2602
      %v2655 = vpop.f32.mrb[0].mxu0
      %v2656 = vadd.f32 0.0, %v2655
      %v2657 = vpop.f32.mrb[0].mxu0
      %v2658 = vpop.f32.mrb[0].mxu0
      %v2659 = vadd.f32 0.0, %v2658
      %v2660 = vpop.f32.mrb[0].mxu0
      %2661 = vmatprep.mubr.bf16.mxu0 0
      %2662 = vmatmul.mubr.bf16.gmra.mrb[0].mxu0 %v2605
      %v2663 = vpop.f32.mrb[0].mxu0
      %v2664 = vadd.f32 0.0, %v2663
      %v2665 = vpop.f32.mrb[0].mxu0
      %v2666 = vpop.f32.mrb[0].mxu0
      %v2667 = vadd.f32 0.0, %v2666
      %v2668 = vpop.f32.mrb[0].mxu0
      %2669 = vmatprep.mubr.bf16.mxu0 0
      %2670 = vmatmul.mubr.bf16.gmra.mrb[0].mxu0 %v2608
      %v2671 = vpop.f32.mrb[0].mxu0
      %v2672 = vadd.f32 0.0, %v2671
      %v2673 = vpop.f32.mrb[0].mxu0
      %v2674 = vpop.f32.mrb[0].mxu0
      %v2675 = vadd.f32 0.0, %v2674
      %v2676 = vpop.f32.mrb[0].mxu0
      %2677 = vdwg.mxu0
      %v2678 = vadd.f32 %v2560, %v2648
      %v2679 = vadd.f32 %v2561, %v2651
      %v2680 = vadd.f32 %v2562, %v2656
      %v2681 = vadd.f32 %v2563, %v2659
      %v2682 = vadd.f32 %v2564, %v2664
      %v2683 = vadd.f32 %v2565, %v2667
      %v2684 = vadd.f32 %v2566, %v2672
      %v2685 = vadd.f32 %v2567, %v2675
      %v2686 = vld [vmem:[%s2032] sm:$0xf]
      %v2687 = vld [vmem:[%s2032 + $0x4] sm:$0x1]
      %v2688 = vld [vmem:[%s2032 + $0x8] sm:$0xf]
      %v2689 = vld [vmem:[%s2032 + $0xc] sm:$0x1]
      %v2690 = vld [vmem:[%s2032 + $0x10] sm:$0xf]
      %v2691 = vld [vmem:[%s2032 + $0x14] sm:$0x1]
      %v2692 = vld [vmem:[%s2032 + $0x18] sm:$0xf]
      %v2693 = vld [vmem:[%s2032 + $0x1c] sm:$0x1]
      %v2694 = vld [vmem:[%s2032 + $0x20] sm:$0xf]
      %v2695 = vld [vmem:[%s2032 + $0x24] sm:$0x1]
      %v2696 = vld [vmem:[%s2032 + $0x28] sm:$0xf]
      %v2697 = vld [vmem:[%s2032 + $0x2c] sm:$0x1]
      %v2698 = vld [vmem:[%s2032 + $0x30] sm:$0xf]
      %v2699 = vld [vmem:[%s2032 + $0x34] sm:$0x1]
      %v2700 = vld [vmem:[%s2032 + $0x38] sm:$0xf]
      %v2701 = vld [vmem:[%s2032 + $0x3c] sm:$0x1]
      %v2703 = vshrl.u32 %v2686, 16
      %v2705 = vrot.slane %v2703, 4
      %v2706 = vshll.u32 %v2686, 16
      %v2708 = vrot.slane %v2706, 5
      %v2709 = vor.u32 %v2705, %v2708
      %v2710 = vrot.slane %v2709, 4
      %v2712 = vshll.u32 %v2687, 16
      %v2714 = vrot.slane %v2712, 5
      %v2715 = vsel %vm400, %v2710, %v2714
      %v2717 = vshrl.u32 %v2688, 16
      %v2719 = vrot.slane %v2717, 4
      %v2720 = vshll.u32 %v2688, 16
      %v2722 = vrot.slane %v2720, 5
      %v2723 = vor.u32 %v2719, %v2722
      %v2724 = vrot.slane %v2723, 4
      %v2726 = vshll.u32 %v2689, 16
      %v2728 = vrot.slane %v2726, 5
      %v2729 = vsel %vm400, %v2724, %v2728
      %v2731 = vshrl.u32 %v2690, 16
      %v2733 = vrot.slane %v2731, 4
      %v2734 = vshll.u32 %v2690, 16
      %v2736 = vrot.slane %v2734, 5
      %v2737 = vor.u32 %v2733, %v2736
      %v2738 = vrot.slane %v2737, 4
      %v2740 = vshll.u32 %v2691, 16
      %v2742 = vrot.slane %v2740, 5
      %v2743 = vsel %vm400, %v2738, %v2742
      %v2745 = vshrl.u32 %v2692, 16
      %v2747 = vrot.slane %v2745, 4
      %v2748 = vshll.u32 %v2692, 16
      %v2750 = vrot.slane %v2748, 5
      %v2751 = vor.u32 %v2747, %v2750
      %v2752 = vrot.slane %v2751, 4
      %v2754 = vshll.u32 %v2693, 16
      %v2756 = vrot.slane %v2754, 5
      %v2757 = vsel %vm400, %v2752, %v2756
      %v2759 = vshrl.u32 %v2694, 16
      %v2761 = vrot.slane %v2759, 4
      %v2762 = vshll.u32 %v2694, 16
      %v2764 = vrot.slane %v2762, 5
      %v2765 = vor.u32 %v2761, %v2764
      %v2766 = vrot.slane %v2765, 4
      %v2768 = vshll.u32 %v2695, 16
      %v2770 = vrot.slane %v2768, 5
      %v2771 = vsel %vm400, %v2766, %v2770
      %v2773 = vshrl.u32 %v2696, 16
      %v2775 = vrot.slane %v2773, 4
      %v2776 = vshll.u32 %v2696, 16
      %v2778 = vrot.slane %v2776, 5
      %v2779 = vor.u32 %v2775, %v2778
      %v2780 = vrot.slane %v2779, 4
      %v2782 = vshll.u32 %v2697, 16
      %v2784 = vrot.slane %v2782, 5
      %v2785 = vsel %vm400, %v2780, %v2784
      %v2787 = vshrl.u32 %v2698, 16
      %v2789 = vrot.slane %v2787, 4
      %v2790 = vshll.u32 %v2698, 16
      %v2792 = vrot.slane %v2790, 5
      %v2793 = vor.u32 %v2789, %v2792
      %v2794 = vrot.slane %v2793, 4
      %v2796 = vshll.u32 %v2699, 16
      %v2798 = vrot.slane %v2796, 5
      %v2799 = vsel %vm400, %v2794, %v2798
      %v2801 = vshrl.u32 %v2700, 16
      %v2803 = vrot.slane %v2801, 4
      %v2804 = vshll.u32 %v2700, 16
      %v2806 = vrot.slane %v2804, 5
      %v2807 = vor.u32 %v2803, %v2806
      %v2808 = vrot.slane %v2807, 4
      %v2810 = vshll.u32 %v2701, 16
      %v2812 = vrot.slane %v2810, 5
      %v2813 = vsel %vm400, %v2808, %v2812
      %s2814 = scalar_lea.vmem %s4, 16
      %v2815 = vld [vmem:[%s2814] sm:$0xf]
      %v2816 = vunpack.c.l.b16 %v2715
      %v2817 = vunpack.c.l.b16 %v2729
      %v2818 = vunpack.c.l.b16 %v2743
      %v2819 = vunpack.c.l.b16 %v2757
      %v2820 = vunpack.c.l.b16 %v2771
      %v2821 = vunpack.c.l.b16 %v2785
      %v2822 = vunpack.c.l.b16 %v2799
      %v2823 = vunpack.c.l.b16 %v2813
      %v2824 = vpack.c.b16 %v2817, %v2816
      %v2825 = vpack.c.b16 %v2819, %v2818
      %v2826 = vpack.c.b16 %v2821, %v2820
      %v2827 = vpack.c.b16 %v2823, %v2822
      %v2829 = vsel %vm2228, %v2824, 0
      %v2832 = vsel %vm2228, %v2825, 0
      %v2835 = vsel %vm2228, %v2826, 0
      %v2838 = vsel %vm2228, %v2827, 0
      %v2841 = vsel %vm2241, %v2815, 0
      %2843 = vmatprep.subr.bf16.mxu0 0
      %2844 = vmatpush1.bf16.msra.mxu0 %v2841
      %2845 = vmatprep.subr.bf16.mxu0 0
      %2846 = vmatpush1.bf16.msra.mxu0 0
      %2847 = vmatprep.subr.bf16.mxu0 0
      %2848 = vmatpush1.bf16.msra.mxu0 0
      %2849 = vmatprep.subr.bf16.mxu0 0
      %2850 = vmatpush1.bf16.msra.mxu0 0
      %2851 = vmatprep.subr.bf16.mxu0 0
      %2852 = vmatpush1.bf16.msra.mxu0 0
      %2853 = vmatprep.subr.bf16.mxu0 0
      %2854 = vmatpush1.bf16.msra.mxu0 0
      %2855 = vmatprep.subr.bf16.mxu0 0
      %2856 = vmatpush1.bf16.msra.mxu0 0
      %2857 = vmatprep.subr.bf16.mxu0 0
      %2858 = vmatpush1.bf16.msra.mxu0 0
      %2859 = vmatprep.subr.bf16.mxu0 0
      %2860 = vmatpush1.bf16.msra.mxu0 0
      %2861 = vmatprep.subr.bf16.mxu0 0
      %2862 = vmatpush1.bf16.msra.mxu0 0
      %2863 = vmatprep.subr.bf16.mxu0 0
      %2864 = vmatpush1.bf16.msra.mxu0 0
      %2865 = vmatprep.subr.bf16.mxu0 0
      %2866 = vmatpush1.bf16.msra.mxu0 0
      %2867 = vmatprep.subr.bf16.mxu0 0
      %2868 = vmatpush1.bf16.msra.mxu0 0
      %2869 = vmatprep.subr.bf16.mxu0 0
      %2870 = vmatpush1.bf16.msra.mxu0 0
      %2871 = vmatprep.subr.bf16.mxu0 0
      %2872 = vmatpush1.bf16.msra.mxu0 0
      %2873 = vmatprep.subr.bf16.mxu0 0
      %2874 = vmatpush1.bf16.msra.mxu0 0
      %2875 = vmatprep.mubr.bf16.mxu0 0
      %2876 = vmatmul.mubr.bf16.gmra.mrb[0].mxu0 %v2829
      %v2877 = vpop.f32.mrb[0].mxu0
      %v2878 = vadd.f32 0.0, %v2877
      %v2879 = vpop.f32.mrb[0].mxu0
      %v2880 = vpop.f32.mrb[0].mxu0
      %v2881 = vadd.f32 0.0, %v2880
      %v2882 = vpop.f32.mrb[0].mxu0
      %2883 = vmatprep.mubr.bf16.mxu0 0
      %2884 = vmatmul.mubr.bf16.gmra.mrb[0].mxu0 %v2832
      %v2885 = vpop.f32.mrb[0].mxu0
      %v2886 = vadd.f32 0.0, %v2885
      %v2887 = vpop.f32.mrb[0].mxu0
      %v2888 = vpop.f32.mrb[0].mxu0
      %v2889 = vadd.f32 0.0, %v2888
      %v2890 = vpop.f32.mrb[0].mxu0
      %2891 = vmatprep.mubr.bf16.mxu0 0
      %2892 = vmatmul.mubr.bf16.gmra.mrb[0].mxu0 %v2835
      %v2893 = vpop.f32.mrb[0].mxu0
      %v2894 = vadd.f32 0.0, %v2893
      %v2895 = vpop.f32.mrb[0].mxu0
      %v2896 = vpop.f32.mrb[0].mxu0
      %v2897 = vadd.f32 0.0, %v2896
      %v2898 = vpop.f32.mrb[0].mxu0
      %2899 = vmatprep.mubr.bf16.mxu0 0
      %2900 = vmatmul.mubr.bf16.gmra.mrb[0].mxu0 %v2838
      %v2901 = vpop.f32.mrb[0].mxu0
      %v2902 = vadd.f32 0.0, %v2901
      %v2903 = vpop.f32.mrb[0].mxu0
      %v2904 = vpop.f32.mrb[0].mxu0
      %v2905 = vadd.f32 0.0, %v2904
      %v2906 = vpop.f32.mrb[0].mxu0
      %2907 = vdwg.mxu0
      %v2908 = vadd.f32 %v2678, %v2878
      %v2909 = vadd.f32 %v2679, %v2881
      %v2910 = vadd.f32 %v2680, %v2886
      %v2911 = vadd.f32 %v2681, %v2889
      %v2912 = vadd.f32 %v2682, %v2894
      %v2913 = vadd.f32 %v2683, %v2897
      %v2914 = vadd.f32 %v2684, %v2902
      %v2915 = vadd.f32 %v2685, %v2905
      %v2916 = vld [vmem:[%s2032] sm:$0xe]
      %v2917 = vld [vmem:[%s2032 + $0x8] sm:$0xe]
      %v2918 = vld [vmem:[%s2032 + $0x10] sm:$0xe]
      %v2919 = vld [vmem:[%s2032 + $0x18] sm:$0xe]
      %v2920 = vld [vmem:[%s2032 + $0x20] sm:$0xe]
      %v2921 = vld [vmem:[%s2032 + $0x28] sm:$0xe]
      %v2922 = vld [vmem:[%s2032 + $0x30] sm:$0xe]
      %v2923 = vld [vmem:[%s2032 + $0x38] sm:$0xe]
      %v2940 = vrot.slane %v2916, 5
      %v2941 = vrot.slane %v2940, 4
      %v2942 = vrot.slane %v2687, 5
      %v2943 = vsel %vm735, %v2941, %v2942
      %v2944 = vrot.slane %v2917, 5
      %v2945 = vrot.slane %v2944, 4
      %v2946 = vrot.slane %v2689, 5
      %v2947 = vsel %vm735, %v2945, %v2946
      %v2948 = vrot.slane %v2918, 5
      %v2949 = vrot.slane %v2948, 4
      %v2950 = vrot.slane %v2691, 5
      %v2951 = vsel %vm735, %v2949, %v2950
      %v2952 = vrot.slane %v2919, 5
      %v2953 = vrot.slane %v2952, 4
      %v2954 = vrot.slane %v2693, 5
      %v2955 = vsel %vm735, %v2953, %v2954
      %v2956 = vrot.slane %v2920, 5
      %v2957 = vrot.slane %v2956, 4
      %v2958 = vrot.slane %v2695, 5
      %v2959 = vsel %vm735, %v2957, %v2958
      %v2960 = vrot.slane %v2921, 5
      %v2961 = vrot.slane %v2960, 4
      %v2962 = vrot.slane %v2697, 5
      %v2963 = vsel %vm735, %v2961, %v2962
      %v2964 = vrot.slane %v2922, 5
      %v2965 = vrot.slane %v2964, 4
      %v2966 = vrot.slane %v2699, 5
      %v2967 = vsel %vm735, %v2965, %v2966
      %v2968 = vrot.slane %v2923, 5
      %v2969 = vrot.slane %v2968, 4
      %v2970 = vrot.slane %v2701, 5
      %v2971 = vsel %vm735, %v2969, %v2970
      %s2972 = scalar_lea.vmem %s4, 20
      %v2973 = vld [vmem:[%s2972] sm:$0xf]
      %v2974 = vunpack.c.l.b16 %v2943
      %v2975 = vunpack.c.l.b16 %v2947
      %v2976 = vunpack.c.l.b16 %v2951
      %v2977 = vunpack.c.l.b16 %v2955
      %v2978 = vunpack.c.l.b16 %v2959
      %v2979 = vunpack.c.l.b16 %v2963
      %v2980 = vunpack.c.l.b16 %v2967
      %v2981 = vunpack.c.l.b16 %v2971
      %v2982 = vpack.c.b16 %v2975, %v2974
      %v2983 = vpack.c.b16 %v2977, %v2976
      %v2984 = vpack.c.b16 %v2979, %v2978
      %v2985 = vpack.c.b16 %v2981, %v2980
      %v2987 = vsel %vm2228, %v2982, 0
      %v2990 = vsel %vm2228, %v2983, 0
      %v2993 = vsel %vm2228, %v2984, 0
      %v2996 = vsel %vm2228, %v2985, 0
      %v2999 = vsel %vm2241, %v2973, 0
      %3001 = vmatprep.subr.bf16.mxu0 0
      %3002 = vmatpush1.bf16.msra.mxu0 %v2999
      %3003 = vmatprep.subr.bf16.mxu0 0
      %3004 = vmatpush1.bf16.msra.mxu0 0
      %3005 = vmatprep.subr.bf16.mxu0 0
      %3006 = vmatpush1.bf16.msra.mxu0 0
      %3007 = vmatprep.subr.bf16.mxu0 0
      %3008 = vmatpush1.bf16.msra.mxu0 0
      %3009 = vmatprep.subr.bf16.mxu0 0
      %3010 = vmatpush1.bf16.msra.mxu0 0
      %3011 = vmatprep.subr.bf16.mxu0 0
      %3012 = vmatpush1.bf16.msra.mxu0 0
      %3013 = vmatprep.subr.bf16.mxu0 0
      %3014 = vmatpush1.bf16.msra.mxu0 0
      %3015 = vmatprep.subr.bf16.mxu0 0
      %3016 = vmatpush1.bf16.msra.mxu0 0
      %3017 = vmatprep.subr.bf16.mxu0 0
      %3018 = vmatpush1.bf16.msra.mxu0 0
      %3019 = vmatprep.subr.bf16.mxu0 0
      %3020 = vmatpush1.bf16.msra.mxu0 0
      %3021 = vmatprep.subr.bf16.mxu0 0
      %3022 = vmatpush1.bf16.msra.mxu0 0
      %3023 = vmatprep.subr.bf16.mxu0 0
      %3024 = vmatpush1.bf16.msra.mxu0 0
      %3025 = vmatprep.subr.bf16.mxu0 0
      %3026 = vmatpush1.bf16.msra.mxu0 0
      %3027 = vmatprep.subr.bf16.mxu0 0
      %3028 = vmatpush1.bf16.msra.mxu0 0
      %3029 = vmatprep.subr.bf16.mxu0 0
      %3030 = vmatpush1.bf16.msra.mxu0 0
      %3031 = vmatprep.subr.bf16.mxu0 0
      %3032 = vmatpush1.bf16.msra.mxu0 0
      %3033 = vmatprep.mubr.bf16.mxu0 0
      %3034 = vmatmul.mubr.bf16.gmra.mrb[0].mxu0 %v2987
      %v3035 = vpop.f32.mrb[0].mxu0
      %v3036 = vadd.f32 0.0, %v3035
      %v3037 = vpop.f32.mrb[0].mxu0
      %v3038 = vpop.f32.mrb[0].mxu0
      %v3039 = vadd.f32 0.0, %v3038
      %v3040 = vpop.f32.mrb[0].mxu0
      %3041 = vmatprep.mubr.bf16.mxu0 0
      %3042 = vmatmul.mubr.bf16.gmra.mrb[0].mxu0 %v2990
      %v3043 = vpop.f32.mrb[0].mxu0
      %v3044 = vadd.f32 0.0, %v3043
      %v3045 = vpop.f32.mrb[0].mxu0
      %v3046 = vpop.f32.mrb[0].mxu0
      %v3047 = vadd.f32 0.0, %v3046
      %v3048 = vpop.f32.mrb[0].mxu0
      %3049 = vmatprep.mubr.bf16.mxu0 0
      %3050 = vmatmul.mubr.bf16.gmra.mrb[0].mxu0 %v2993
      %v3051 = vpop.f32.mrb[0].mxu0
      %v3052 = vadd.f32 0.0, %v3051
      %v3053 = vpop.f32.mrb[0].mxu0
      %v3054 = vpop.f32.mrb[0].mxu0
      %v3055 = vadd.f32 0.0, %v3054
      %v3056 = vpop.f32.mrb[0].mxu0
      %3057 = vmatprep.mubr.bf16.mxu0 0
      %3058 = vmatmul.mubr.bf16.gmra.mrb[0].mxu0 %v2996
      %v3059 = vpop.f32.mrb[0].mxu0
      %v3060 = vadd.f32 0.0, %v3059
      %v3061 = vpop.f32.mrb[0].mxu0
      %v3062 = vpop.f32.mrb[0].mxu0
      %v3063 = vadd.f32 0.0, %v3062
      %v3064 = vpop.f32.mrb[0].mxu0
      %3065 = vdwg.mxu0
      %v3066 = vadd.f32 %v2908, %v3036
      %v3067 = vadd.f32 %v2909, %v3039
      %v3068 = vadd.f32 %v2910, %v3044
      %v3069 = vadd.f32 %v2911, %v3047
      %v3070 = vadd.f32 %v2912, %v3052
      %v3071 = vadd.f32 %v2913, %v3055
      %v3072 = vadd.f32 %v2914, %v3060
      %v3073 = vadd.f32 %v2915, %v3063
      %s3074 = scalar_lea.vmem [#allocation2], 16
      %v3075 = vld [vmem:[%s3074] sm:$0xf]
      %v3076 = vld [vmem:[%s3074 + $0x8] sm:$0xf]
      %v3077 = vld [vmem:[%s3074 + $0x10] sm:$0xf]
      %v3078 = vld [vmem:[%s3074 + $0x18] sm:$0xf]
      %v3079 = vld [vmem:[%s3074 + $0x20] sm:$0xf]
      %v3080 = vld [vmem:[%s3074 + $0x28] sm:$0xf]
      %v3081 = vld [vmem:[%s3074 + $0x30] sm:$0xf]
      %v3082 = vld [vmem:[%s3074 + $0x38] sm:$0xf]
      %s3083 = scalar_lea.vmem %s4, 24
      %v3084 = vld [vmem:[%s3083] sm:$0xf]
      %v3093 = vunpack.c.l.b16 %v3075
      %v3094 = vunpack.c.l.b16 %v3076
      %v3095 = vunpack.c.l.b16 %v3077
      %v3096 = vunpack.c.l.b16 %v3078
      %v3097 = vunpack.c.l.b16 %v3079
      %v3098 = vunpack.c.l.b16 %v3080
      %v3099 = vunpack.c.l.b16 %v3081
      %v3100 = vunpack.c.l.b16 %v3082
      %v3101 = vpack.c.b16 %v3094, %v3093
      %v3102 = vpack.c.b16 %v3096, %v3095
      %v3103 = vpack.c.b16 %v3098, %v3097
      %v3104 = vpack.c.b16 %v3100, %v3099
      %v3106 = vsel %vm2228, %v3101, 0
      %v3109 = vsel %vm2228, %v3102, 0
      %v3112 = vsel %vm2228, %v3103, 0
      %v3115 = vsel %vm2228, %v3104, 0
      %v3118 = vsel %vm2241, %v3084, 0
      %3120 = vmatprep.subr.bf16.mxu0 0
      %3121 = vmatpush1.bf16.msra.mxu0 %v3118
      %3122 = vmatprep.subr.bf16.mxu0 0
      %3123 = vmatpush1.bf16.msra.mxu0 0
      %3124 = vmatprep.subr.bf16.mxu0 0
      %3125 = vmatpush1.bf16.msra.mxu0 0
      %3126 = vmatprep.subr.bf16.mxu0 0
      %3127 = vmatpush1.bf16.msra.mxu0 0
      %3128 = vmatprep.subr.bf16.mxu0 0
      %3129 = vmatpush1.bf16.msra.mxu0 0
      %3130 = vmatprep.subr.bf16.mxu0 0
      %3131 = vmatpush1.bf16.msra.mxu0 0
      %3132 = vmatprep.subr.bf16.mxu0 0
      %3133 = vmatpush1.bf16.msra.mxu0 0
      %3134 = vmatprep.subr.bf16.mxu0 0
      %3135 = vmatpush1.bf16.msra.mxu0 0
      %3136 = vmatprep.subr.bf16.mxu0 0
      %3137 = vmatpush1.bf16.msra.mxu0 0
      %3138 = vmatprep.subr.bf16.mxu0 0
      %3139 = vmatpush1.bf16.msra.mxu0 0
      %3140 = vmatprep.subr.bf16.mxu0 0
      %3141 = vmatpush1.bf16.msra.mxu0 0
      %3142 = vmatprep.subr.bf16.mxu0 0
      %3143 = vmatpush1.bf16.msra.mxu0 0
      %3144 = vmatprep.subr.bf16.mxu0 0
      %3145 = vmatpush1.bf16.msra.mxu0 0
      %3146 = vmatprep.subr.bf16.mxu0 0
      %3147 = vmatpush1.bf16.msra.mxu0 0
      %3148 = vmatprep.subr.bf16.mxu0 0
      %3149 = vmatpush1.bf16.msra.mxu0 0
      %3150 = vmatprep.subr.bf16.mxu0 0
      %3151 = vmatpush1.bf16.msra.mxu0 0
      %3152 = vmatprep.mubr.bf16.mxu0 0
      %3153 = vmatmul.mubr.bf16.gmra.mrb[0].mxu0 %v3106
      %v3154 = vpop.f32.mrb[0].mxu0
      %v3155 = vadd.f32 0.0, %v3154
      %v3156 = vpop.f32.mrb[0].mxu0
      %v3157 = vpop.f32.mrb[0].mxu0
      %v3158 = vadd.f32 0.0, %v3157
      %v3159 = vpop.f32.mrb[0].mxu0
      %3160 = vmatprep.mubr.bf16.mxu0 0
      %3161 = vmatmul.mubr.bf16.gmra.mrb[0].mxu0 %v3109
      %v3162 = vpop.f32.mrb[0].mxu0
      %v3163 = vadd.f32 0.0, %v3162
      %v3164 = vpop.f32.mrb[0].mxu0
      %v3165 = vpop.f32.mrb[0].mxu0
      %v3166 = vadd.f32 0.0, %v3165
      %v3167 = vpop.f32.mrb[0].mxu0
      %3168 = vmatprep.mubr.bf16.mxu0 0
      %3169 = vmatmul.mubr.bf16.gmra.mrb[0].mxu0 %v3112
      %v3170 = vpop.f32.mrb[0].mxu0
      %v3171 = vadd.f32 0.0, %v3170
      %v3172 = vpop.f32.mrb[0].mxu0
      %v3173 = vpop.f32.mrb[0].mxu0
      %v3174 = vadd.f32 0.0, %v3173
      %v3175 = vpop.f32.mrb[0].mxu0
      %3176 = vmatprep.mubr.bf16.mxu0 0
      %3177 = vmatmul.mubr.bf16.gmra.mrb[0].mxu0 %v3115
      %v3178 = vpop.f32.mrb[0].mxu0
      %v3179 = vadd.f32 0.0, %v3178
      %v3180 = vpop.f32.mrb[0].mxu0
      %v3181 = vpop.f32.mrb[0].mxu0
      %v3182 = vadd.f32 0.0, %v3181
      %v3183 = vpop.f32.mrb[0].mxu0
      %3184 = vdwg.mxu0
      %v3185 = vadd.f32 %v3066, %v3155
      %v3186 = vadd.f32 %v3067, %v3158
      %v3187 = vadd.f32 %v3068, %v3163
      %v3188 = vadd.f32 %v3069, %v3166
      %v3189 = vadd.f32 %v3070, %v3171
      %v3190 = vadd.f32 %v3071, %v3174
      %v3191 = vadd.f32 %v3072, %v3179
      %v3192 = vadd.f32 %v3073, %v3182
      %v3193 = vld [vmem:[%s3074] sm:$0xf]
      %v3194 = vld [vmem:[%s3074 + $0x4] sm:$0x1]
      %v3195 = vld [vmem:[%s3074 + $0x8] sm:$0xf]
      %v3196 = vld [vmem:[%s3074 + $0xc] sm:$0x1]
      %v3197 = vld [vmem:[%s3074 + $0x10] sm:$0xf]
      %v3198 = vld [vmem:[%s3074 + $0x14] sm:$0x1]
      %v3199 = vld [vmem:[%s3074 + $0x18] sm:$0xf]
      %v3200 = vld [vmem:[%s3074 + $0x1c] sm:$0x1]
      %v3201 = vld [vmem:[%s3074 + $0x20] sm:$0xf]
      %v3202 = vld [vmem:[%s3074 + $0x24] sm:$0x1]
      %v3203 = vld [vmem:[%s3074 + $0x28] sm:$0xf]
      %v3204 = vld [vmem:[%s3074 + $0x2c] sm:$0x1]
      %v3205 = vld [vmem:[%s3074 + $0x30] sm:$0xf]
      %v3206 = vld [vmem:[%s3074 + $0x34] sm:$0x1]
      %v3207 = vld [vmem:[%s3074 + $0x38] sm:$0xf]
      %v3208 = vld [vmem:[%s3074 + $0x3c] sm:$0x1]
      %v3210 = vshrl.u32 %v3193, 16
      %v3212 = vrot.slane %v3210, 4
      %v3213 = vshll.u32 %v3193, 16
      %v3215 = vrot.slane %v3213, 5
      %v3216 = vor.u32 %v3212, %v3215
      %v3217 = vrot.slane %v3216, 4
      %v3219 = vshll.u32 %v3194, 16
      %v3221 = vrot.slane %v3219, 5
      %v3222 = vsel %vm400, %v3217, %v3221
      %v3224 = vshrl.u32 %v3195, 16
      %v3226 = vrot.slane %v3224, 4
      %v3227 = vshll.u32 %v3195, 16
      %v3229 = vrot.slane %v3227, 5
      %v3230 = vor.u32 %v3226, %v3229
      %v3231 = vrot.slane %v3230, 4
      %v3233 = vshll.u32 %v3196, 16
      %v3235 = vrot.slane %v3233, 5
      %v3236 = vsel %vm400, %v3231, %v3235
      %v3238 = vshrl.u32 %v3197, 16
      %v3240 = vrot.slane %v3238, 4
      %v3241 = vshll.u32 %v3197, 16
      %v3243 = vrot.slane %v3241, 5
      %v3244 = vor.u32 %v3240, %v3243
      %v3245 = vrot.slane %v3244, 4
      %v3247 = vshll.u32 %v3198, 16
      %v3249 = vrot.slane %v3247, 5
      %v3250 = vsel %vm400, %v3245, %v3249
      %v3252 = vshrl.u32 %v3199, 16
      %v3254 = vrot.slane %v3252, 4
      %v3255 = vshll.u32 %v3199, 16
      %v3257 = vrot.slane %v3255, 5
      %v3258 = vor.u32 %v3254, %v3257
      %v3259 = vrot.slane %v3258, 4
      %v3261 = vshll.u32 %v3200, 16
      %v3263 = vrot.slane %v3261, 5
      %v3264 = vsel %vm400, %v3259, %v3263
      %v3266 = vshrl.u32 %v3201, 16
      %v3268 = vrot.slane %v3266, 4
      %v3269 = vshll.u32 %v3201, 16
      %v3271 = vrot.slane %v3269, 5
      %v3272 = vor.u32 %v3268, %v3271
      %v3273 = vrot.slane %v3272, 4
      %v3275 = vshll.u32 %v3202, 16
      %v3277 = vrot.slane %v3275, 5
      %v3278 = vsel %vm400, %v3273, %v3277
      %v3280 = vshrl.u32 %v3203, 16
      %v3282 = vrot.slane %v3280, 4
      %v3283 = vshll.u32 %v3203, 16
      %v3285 = vrot.slane %v3283, 5
      %v3286 = vor.u32 %v3282, %v3285
      %v3287 = vrot.slane %v3286, 4
      %v3289 = vshll.u32 %v3204, 16
      %v3291 = vrot.slane %v3289, 5
      %v3292 = vsel %vm400, %v3287, %v3291
      %v3294 = vshrl.u32 %v3205, 16
      %v3296 = vrot.slane %v3294, 4
      %v3297 = vshll.u32 %v3205, 16
      %v3299 = vrot.slane %v3297, 5
      %v3300 = vor.u32 %v3296, %v3299
      %v3301 = vrot.slane %v3300, 4
      %v3303 = vshll.u32 %v3206, 16
      %v3305 = vrot.slane %v3303, 5
      %v3306 = vsel %vm400, %v3301, %v3305
      %v3308 = vshrl.u32 %v3207, 16
      %v3310 = vrot.slane %v3308, 4
      %v3311 = vshll.u32 %v3207, 16
      %v3313 = vrot.slane %v3311, 5
      %v3314 = vor.u32 %v3310, %v3313
      %v3315 = vrot.slane %v3314, 4
      %v3317 = vshll.u32 %v3208, 16
      %v3319 = vrot.slane %v3317, 5
      %v3320 = vsel %vm400, %v3315, %v3319
      %s3321 = scalar_lea.vmem %s4, 28
      %v3322 = vld [vmem:[%s3321] sm:$0xf]
      %v3323 = vunpack.c.l.b16 %v3222
      %v3324 = vunpack.c.l.b16 %v3236
      %v3325 = vunpack.c.l.b16 %v3250
      %v3326 = vunpack.c.l.b16 %v3264
      %v3327 = vunpack.c.l.b16 %v3278
      %v3328 = vunpack.c.l.b16 %v3292
      %v3329 = vunpack.c.l.b16 %v3306
      %v3330 = vunpack.c.l.b16 %v3320
      %v3331 = vpack.c.b16 %v3324, %v3323
      %v3332 = vpack.c.b16 %v3326, %v3325
      %v3333 = vpack.c.b16 %v3328, %v3327
      %v3334 = vpack.c.b16 %v3330, %v3329
      %v3336 = vsel %vm2228, %v3331, 0
      %v3339 = vsel %vm2228, %v3332, 0
      %v3342 = vsel %vm2228, %v3333, 0
      %v3345 = vsel %vm2228, %v3334, 0
      %v3348 = vsel %vm2241, %v3322, 0
      %3350 = vmatprep.subr.bf16.mxu0 0
      %3351 = vmatpush1.bf16.msra.mxu0 %v3348
      %3352 = vmatprep.subr.bf16.mxu0 0
      %3353 = vmatpush1.bf16.msra.mxu0 0
      %3354 = vmatprep.subr.bf16.mxu0 0
      %3355 = vmatpush1.bf16.msra.mxu0 0
      %3356 = vmatprep.subr.bf16.mxu0 0
      %3357 = vmatpush1.bf16.msra.mxu0 0
      %3358 = vmatprep.subr.bf16.mxu0 0
      %3359 = vmatpush1.bf16.msra.mxu0 0
      %3360 = vmatprep.subr.bf16.mxu0 0
      %3361 = vmatpush1.bf16.msra.mxu0 0
      %3362 = vmatprep.subr.bf16.mxu0 0
      %3363 = vmatpush1.bf16.msra.mxu0 0
      %3364 = vmatprep.subr.bf16.mxu0 0
      %3365 = vmatpush1.bf16.msra.mxu0 0
      %3366 = vmatprep.subr.bf16.mxu0 0
      %3367 = vmatpush1.bf16.msra.mxu0 0
      %3368 = vmatprep.subr.bf16.mxu0 0
      %3369 = vmatpush1.bf16.msra.mxu0 0
      %3370 = vmatprep.subr.bf16.mxu0 0
      %3371 = vmatpush1.bf16.msra.mxu0 0
      %3372 = vmatprep.subr.bf16.mxu0 0
      %3373 = vmatpush1.bf16.msra.mxu0 0
      %3374 = vmatprep.subr.bf16.mxu0 0
      %3375 = vmatpush1.bf16.msra.mxu0 0
      %3376 = vmatprep.subr.bf16.mxu0 0
      %3377 = vmatpush1.bf16.msra.mxu0 0
      %3378 = vmatprep.subr.bf16.mxu0 0
      %3379 = vmatpush1.bf16.msra.mxu0 0
      %3380 = vmatprep.subr.bf16.mxu0 0
      %3381 = vmatpush1.bf16.msra.mxu0 0
      %3382 = vmatprep.mubr.bf16.mxu0 0
      %3383 = vmatmul.mubr.bf16.gmra.mrb[0].mxu0 %v3336
      %v3384 = vpop.f32.mrb[0].mxu0
      %v3385 = vadd.f32 0.0, %v3384
      %v3386 = vpop.f32.mrb[0].mxu0
      %v3387 = vpop.f32.mrb[0].mxu0
      %v3388 = vadd.f32 0.0, %v3387
      %v3389 = vpop.f32.mrb[0].mxu0
      %3390 = vmatprep.mubr.bf16.mxu0 0
      %3391 = vmatmul.mubr.bf16.gmra.mrb[0].mxu0 %v3339
      %v3392 = vpop.f32.mrb[0].mxu0
      %v3393 = vadd.f32 0.0, %v3392
      %v3394 = vpop.f32.mrb[0].mxu0
      %v3395 = vpop.f32.mrb[0].mxu0
      %v3396 = vadd.f32 0.0, %v3395
      %v3397 = vpop.f32.mrb[0].mxu0
      %3398 = vmatprep.mubr.bf16.mxu0 0
      %3399 = vmatmul.mubr.bf16.gmra.mrb[0].mxu0 %v3342
      %v3400 = vpop.f32.mrb[0].mxu0
      %v3401 = vadd.f32 0.0, %v3400
      %v3402 = vpop.f32.mrb[0].mxu0
      %v3403 = vpop.f32.mrb[0].mxu0
      %v3404 = vadd.f32 0.0, %v3403
      %v3405 = vpop.f32.mrb[0].mxu0
      %3406 = vmatprep.mubr.bf16.mxu0 0
      %3407 = vmatmul.mubr.bf16.gmra.mrb[0].mxu0 %v3345
      %v3408 = vpop.f32.mrb[0].mxu0
      %v3409 = vadd.f32 0.0, %v3408
      %v3410 = vpop.f32.mrb[0].mxu0
      %v3411 = vpop.f32.mrb[0].mxu0
      %v3412 = vadd.f32 0.0, %v3411
      %v3413 = vpop.f32.mrb[0].mxu0
      %3414 = vdwg.mxu0
      %v3415 = vadd.f32 %v3185, %v3385
      %v3416 = vadd.f32 %v3186, %v3388
      %v3417 = vadd.f32 %v3187, %v3393
      %v3418 = vadd.f32 %v3188, %v3396
      %v3419 = vadd.f32 %v3189, %v3401
      %v3420 = vadd.f32 %v3190, %v3404
      %v3421 = vadd.f32 %v3191, %v3409
      %v3422 = vadd.f32 %v3192, %v3412
      %v3423 = vld [vmem:[%s3074] sm:$0xe]
      %v3424 = vld [vmem:[%s3074 + $0x8] sm:$0xe]
      %v3425 = vld [vmem:[%s3074 + $0x10] sm:$0xe]
      %v3426 = vld [vmem:[%s3074 + $0x18] sm:$0xe]
      %v3427 = vld [vmem:[%s3074 + $0x20] sm:$0xe]
      %v3428 = vld [vmem:[%s3074 + $0x28] sm:$0xe]
      %v3429 = vld [vmem:[%s3074 + $0x30] sm:$0xe]
      %v3430 = vld [vmem:[%s3074 + $0x38] sm:$0xe]
      %v3447 = vrot.slane %v3423, 5
      %v3448 = vrot.slane %v3447, 4
      %v3449 = vrot.slane %v3194, 5
      %v3450 = vsel %vm735, %v3448, %v3449
      %v3451 = vrot.slane %v3424, 5
      %v3452 = vrot.slane %v3451, 4
      %v3453 = vrot.slane %v3196, 5
      %v3454 = vsel %vm735, %v3452, %v3453
      %v3455 = vrot.slane %v3425, 5
      %v3456 = vrot.slane %v3455, 4
      %v3457 = vrot.slane %v3198, 5
      %v3458 = vsel %vm735, %v3456, %v3457
      %v3459 = vrot.slane %v3426, 5
      %v3460 = vrot.slane %v3459, 4
      %v3461 = vrot.slane %v3200, 5
      %v3462 = vsel %vm735, %v3460, %v3461
      %v3463 = vrot.slane %v3427, 5
      %v3464 = vrot.slane %v3463, 4
      %v3465 = vrot.slane %v3202, 5
      %v3466 = vsel %vm735, %v3464, %v3465
      %v3467 = vrot.slane %v3428, 5
      %v3468 = vrot.slane %v3467, 4
      %v3469 = vrot.slane %v3204, 5
      %v3470 = vsel %vm735, %v3468, %v3469
      %v3471 = vrot.slane %v3429, 5
      %v3472 = vrot.slane %v3471, 4
      %v3473 = vrot.slane %v3206, 5
      %v3474 = vsel %vm735, %v3472, %v3473
      %v3475 = vrot.slane %v3430, 5
      %v3476 = vrot.slane %v3475, 4
      %v3477 = vrot.slane %v3208, 5
      %v3478 = vsel %vm735, %v3476, %v3477
      %s3479 = scalar_lea.vmem %s4, 32
      %v3480 = vld [vmem:[%s3479] sm:$0xf]
      %v3481 = vunpack.c.l.b16 %v3450
      %v3482 = vunpack.c.l.b16 %v3454
      %v3483 = vunpack.c.l.b16 %v3458
      %v3484 = vunpack.c.l.b16 %v3462
      %v3485 = vunpack.c.l.b16 %v3466
      %v3486 = vunpack.c.l.b16 %v3470
      %v3487 = vunpack.c.l.b16 %v3474
      %v3488 = vunpack.c.l.b16 %v3478
      %v3489 = vpack.c.b16 %v3482, %v3481
      %v3490 = vpack.c.b16 %v3484, %v3483
      %v3491 = vpack.c.b16 %v3486, %v3485
      %v3492 = vpack.c.b16 %v3488, %v3487
      %v3494 = vsel %vm2228, %v3489, 0
      %v3497 = vsel %vm2228, %v3490, 0
      %v3500 = vsel %vm2228, %v3491, 0
      %v3503 = vsel %vm2228, %v3492, 0
      %v3506 = vsel %vm2241, %v3480, 0
      %3508 = vmatprep.subr.bf16.mxu0 0
      %3509 = vmatpush1.bf16.msra.mxu0 %v3506
      %3510 = vmatprep.subr.bf16.mxu0 0
      %3511 = vmatpush1.bf16.msra.mxu0 0
      %3512 = vmatprep.subr.bf16.mxu0 0
      %3513 = vmatpush1.bf16.msra.mxu0 0
      %3514 = vmatprep.subr.bf16.mxu0 0
      %3515 = vmatpush1.bf16.msra.mxu0 0
      %3516 = vmatprep.subr.bf16.mxu0 0
      %3517 = vmatpush1.bf16.msra.mxu0 0
      %3518 = vmatprep.subr.bf16.mxu0 0
      %3519 = vmatpush1.bf16.msra.mxu0 0
      %3520 = vmatprep.subr.bf16.mxu0 0
      %3521 = vmatpush1.bf16.msra.mxu0 0
      %3522 = vmatprep.subr.bf16.mxu0 0
      %3523 = vmatpush1.bf16.msra.mxu0 0
      %3524 = vmatprep.subr.bf16.mxu0 0
      %3525 = vmatpush1.bf16.msra.mxu0 0
      %3526 = vmatprep.subr.bf16.mxu0 0
      %3527 = vmatpush1.bf16.msra.mxu0 0
      %3528 = vmatprep.subr.bf16.mxu0 0
      %3529 = vmatpush1.bf16.msra.mxu0 0
      %3530 = vmatprep.subr.bf16.mxu0 0
      %3531 = vmatpush1.bf16.msra.mxu0 0
      %3532 = vmatprep.subr.bf16.mxu0 0
      %3533 = vmatpush1.bf16.msra.mxu0 0
      %3534 = vmatprep.subr.bf16.mxu0 0
      %3535 = vmatpush1.bf16.msra.mxu0 0
      %3536 = vmatprep.subr.bf16.mxu0 0
      %3537 = vmatpush1.bf16.msra.mxu0 0
      %3538 = vmatprep.subr.bf16.mxu0 0
      %3539 = vmatpush1.bf16.msra.mxu0 0
      %3540 = vmatprep.mubr.bf16.mxu0 0
      %3541 = vmatmul.mubr.bf16.gmra.mrb[0].mxu0 %v3494
      %v3542 = vpop.f32.mrb[0].mxu0
      %v3543 = vadd.f32 0.0, %v3542
      %v3544 = vpop.f32.mrb[0].mxu0
      %v3545 = vpop.f32.mrb[0].mxu0
      %v3546 = vadd.f32 0.0, %v3545
      %v3547 = vpop.f32.mrb[0].mxu0
      %3548 = vmatprep.mubr.bf16.mxu0 0
      %3549 = vmatmul.mubr.bf16.gmra.mrb[0].mxu0 %v3497
      %v3550 = vpop.f32.mrb[0].mxu0
      %v3551 = vadd.f32 0.0, %v3550
      %v3552 = vpop.f32.mrb[0].mxu0
      %v3553 = vpop.f32.mrb[0].mxu0
      %v3554 = vadd.f32 0.0, %v3553
      %v3555 = vpop.f32.mrb[0].mxu0
      %3556 = vmatprep.mubr.bf16.mxu0 0
      %3557 = vmatmul.mubr.bf16.gmra.mrb[0].mxu0 %v3500
      %v3558 = vpop.f32.mrb[0].mxu0
      %v3559 = vadd.f32 0.0, %v3558
      %v3560 = vpop.f32.mrb[0].mxu0
      %v3561 = vpop.f32.mrb[0].mxu0
      %v3562 = vadd.f32 0.0, %v3561
      %v3563 = vpop.f32.mrb[0].mxu0
      %3564 = vmatprep.mubr.bf16.mxu0 0
      %3565 = vmatmul.mubr.bf16.gmra.mrb[0].mxu0 %v3503
      %v3566 = vpop.f32.mrb[0].mxu0
      %v3567 = vadd.f32 0.0, %v3566
      %v3568 = vpop.f32.mrb[0].mxu0
      %v3569 = vpop.f32.mrb[0].mxu0
      %v3570 = vadd.f32 0.0, %v3569
      %v3571 = vpop.f32.mrb[0].mxu0
      %3572 = vdwg.mxu0
      %v3573 = vadd.f32 %v3415, %v3543
      %v3574 = vadd.f32 %v3416, %v3546
      %v3575 = vadd.f32 %v3417, %v3551
      %v3576 = vadd.f32 %v3418, %v3554
      %v3577 = vadd.f32 %v3419, %v3559
      %v3578 = vadd.f32 %v3420, %v3562
      %v3579 = vadd.f32 %v3421, %v3567
      %v3580 = vadd.f32 %v3422, %v3570
      %v3582 = vlaneseq
      %v3583 = vshrl.u32 %v3582, 7
      %v3584 = vsub.s32 0, %v3583
      %v3585 = vrot.slane %v2083, %v3584
      %v3587 = vmul.f32 %v3573, %v3585
      %v3588 = vmul.f32 %v3574, %v3585
      %v3589 = vmul.f32 %v3575, %v3585
      %v3590 = vmul.f32 %v3576, %v3585
      %v3591 = vmul.f32 %v3577, %v3585
      %v3592 = vmul.f32 %v3578, %v3585
      %v3593 = vmul.f32 %v3579, %v3585
      %v3594 = vmul.f32 %v3580, %v3585
      %v3596 = vlaneseq
      %v3597 = vshrl.u32 %v3596, 7
      %v3598 = vsub.s32 0, %v3597
      %v3599 = vrot.slane %v2084, %v3598
      %v3601 = vadd.f32 %v3587, %v3599
      %v3602 = vadd.f32 %v3588, %v3599
      %v3603 = vadd.f32 %v3589, %v3599
      %v3604 = vadd.f32 %v3590, %v3599
      %v3605 = vadd.f32 %v3591, %v3599
      %v3606 = vadd.f32 %v3592, %v3599
      %v3607 = vadd.f32 %v3593, %v3599
      %v3608 = vadd.f32 %v3594, %v3599
      %v3609 = vld [vmem:[%s870] sm:$0xf]
      %v3610 = vld [vmem:[%s870 + $0x4] sm:$0x1]
      %v3611 = vld [vmem:[%s870 + $0x8] sm:$0xf]
      %v3612 = vld [vmem:[%s870 + $0xc] sm:$0x1]
      %v3613 = vld [vmem:[%s870 + $0x10] sm:$0xf]
      %v3614 = vld [vmem:[%s870 + $0x14] sm:$0x1]
      %v3615 = vld [vmem:[%s870 + $0x18] sm:$0xf]
      %v3616 = vld [vmem:[%s870 + $0x1c] sm:$0x1]
      %v3617 = vld [vmem:[%s870 + $0x20] sm:$0xf]
      %v3618 = vld [vmem:[%s870 + $0x24] sm:$0x1]
      %v3619 = vld [vmem:[%s870 + $0x28] sm:$0xf]
      %v3620 = vld [vmem:[%s870 + $0x2c] sm:$0x1]
      %v3621 = vld [vmem:[%s870 + $0x30] sm:$0xf]
      %v3622 = vld [vmem:[%s870 + $0x34] sm:$0x1]
      %v3623 = vld [vmem:[%s870 + $0x38] sm:$0xf]
      %v3624 = vld [vmem:[%s870 + $0x3c] sm:$0x1]
      %v3626 = vshrl.u32 %v3609, 16
      %v3628 = vrot.slane %v3626, 4
      %v3629 = vshll.u32 %v3609, 16
      %v3631 = vrot.slane %v3629, 5
      %v3632 = vor.u32 %v3628, %v3631
      %v3633 = vrot.slane %v3632, 4
      %v3635 = vshll.u32 %v3610, 16
      %v3637 = vrot.slane %v3635, 5
      %v3638 = vsel %vm400, %v3633, %v3637
      %v3640 = vshrl.u32 %v3611, 16
      %v3642 = vrot.slane %v3640, 4
      %v3643 = vshll.u32 %v3611, 16
      %v3645 = vrot.slane %v3643, 5
      %v3646 = vor.u32 %v3642, %v3645
      %v3647 = vrot.slane %v3646, 4
      %v3649 = vshll.u32 %v3612, 16
      %v3651 = vrot.slane %v3649, 5
      %v3652 = vsel %vm400, %v3647, %v3651
      %v3654 = vshrl.u32 %v3613, 16
      %v3656 = vrot.slane %v3654, 4
      %v3657 = vshll.u32 %v3613, 16
      %v3659 = vrot.slane %v3657, 5
      %v3660 = vor.u32 %v3656, %v3659
      %v3661 = vrot.slane %v3660, 4
      %v3663 = vshll.u32 %v3614, 16
      %v3665 = vrot.slane %v3663, 5
      %v3666 = vsel %vm400, %v3661, %v3665
      %v3668 = vshrl.u32 %v3615, 16
      %v3670 = vrot.slane %v3668, 4
      %v3671 = vshll.u32 %v3615, 16
      %v3673 = vrot.slane %v3671, 5
      %v3674 = vor.u32 %v3670, %v3673
      %v3675 = vrot.slane %v3674, 4
      %v3677 = vshll.u32 %v3616, 16
      %v3679 = vrot.slane %v3677, 5
      %v3680 = vsel %vm400, %v3675, %v3679
      %v3682 = vshrl.u32 %v3617, 16
      %v3684 = vrot.slane %v3682, 4
      %v3685 = vshll.u32 %v3617, 16
      %v3687 = vrot.slane %v3685, 5
      %v3688 = vor.u32 %v3684, %v3687
      %v3689 = vrot.slane %v3688, 4
      %v3691 = vshll.u32 %v3618, 16
      %v3693 = vrot.slane %v3691, 5
      %v3694 = vsel %vm400, %v3689, %v3693
      %v3696 = vshrl.u32 %v3619, 16
      %v3698 = vrot.slane %v3696, 4
      %v3699 = vshll.u32 %v3619, 16
      %v3701 = vrot.slane %v3699, 5
      %v3702 = vor.u32 %v3698, %v3701
      %v3703 = vrot.slane %v3702, 4
      %v3705 = vshll.u32 %v3620, 16
      %v3707 = vrot.slane %v3705, 5
      %v3708 = vsel %vm400, %v3703, %v3707
      %v3710 = vshrl.u32 %v3621, 16
      %v3712 = vrot.slane %v3710, 4
      %v3713 = vshll.u32 %v3621, 16
      %v3715 = vrot.slane %v3713, 5
      %v3716 = vor.u32 %v3712, %v3715
      %v3717 = vrot.slane %v3716, 4
      %v3719 = vshll.u32 %v3622, 16
      %v3721 = vrot.slane %v3719, 5
      %v3722 = vsel %vm400, %v3717, %v3721
      %v3724 = vshrl.u32 %v3623, 16
      %v3726 = vrot.slane %v3724, 4
      %v3727 = vshll.u32 %v3623, 16
      %v3729 = vrot.slane %v3727, 5
      %v3730 = vor.u32 %v3726, %v3729
      %v3731 = vrot.slane %v3730, 4
      %v3733 = vshll.u32 %v3624, 16
      %v3735 = vrot.slane %v3733, 5
      %v3736 = vsel %vm400, %v3731, %v3735
      %v3737 = vld [vmem:[%s7] sm:$0x3]
      %v3738 = vunpack.c.l.b16 %v3638
      %v3739 = vunpack.c.l.b16 %v3652
      %v3740 = vunpack.c.l.b16 %v3666
      %v3741 = vunpack.c.l.b16 %v3680
      %v3742 = vunpack.c.l.b16 %v3694
      %v3743 = vunpack.c.l.b16 %v3708
      %v3744 = vunpack.c.l.b16 %v3722
      %v3745 = vunpack.c.l.b16 %v3736
      %v3746 = vpack.c.b16 %v3739, %v3738
      %v3747 = vpack.c.b16 %v3741, %v3740
      %v3748 = vpack.c.b16 %v3743, %v3742
      %v3749 = vpack.c.b16 %v3745, %v3744
      %v3751 = vsel %vm527, %v3746, 0
      %v3754 = vsel %vm527, %v3747, 0
      %v3757 = vsel %vm527, %v3748, 0
      %v3760 = vsel %vm527, %v3749, 0
      %v3763 = vsel %vm540, %v3737, 0
      %3765 = vmatprep.subr.bf16.mxu0 0
      %3766 = vmatpush1.bf16.msra.mxu0 %v3763
      %3767 = vmatprep.subr.bf16.mxu0 0
      %3768 = vmatpush1.bf16.msra.mxu0 0
      %3769 = vmatprep.subr.bf16.mxu0 0
      %3770 = vmatpush1.bf16.msra.mxu0 0
      %3771 = vmatprep.subr.bf16.mxu0 0
      %3772 = vmatpush1.bf16.msra.mxu0 0
      %3773 = vmatprep.subr.bf16.mxu0 0
      %3774 = vmatpush1.bf16.msra.mxu0 0
      %3775 = vmatprep.subr.bf16.mxu0 0
      %3776 = vmatpush1.bf16.msra.mxu0 0
      %3777 = vmatprep.subr.bf16.mxu0 0
      %3778 = vmatpush1.bf16.msra.mxu0 0
      %3779 = vmatprep.subr.bf16.mxu0 0
      %3780 = vmatpush1.bf16.msra.mxu0 0
      %3781 = vmatprep.subr.bf16.mxu0 0
      %3782 = vmatpush1.bf16.msra.mxu0 0
      %3783 = vmatprep.subr.bf16.mxu0 0
      %3784 = vmatpush1.bf16.msra.mxu0 0
      %3785 = vmatprep.subr.bf16.mxu0 0
      %3786 = vmatpush1.bf16.msra.mxu0 0
      %3787 = vmatprep.subr.bf16.mxu0 0
      %3788 = vmatpush1.bf16.msra.mxu0 0
      %3789 = vmatprep.subr.bf16.mxu0 0
      %3790 = vmatpush1.bf16.msra.mxu0 0
      %3791 = vmatprep.subr.bf16.mxu0 0
      %3792 = vmatpush1.bf16.msra.mxu0 0
      %3793 = vmatprep.subr.bf16.mxu0 0
      %3794 = vmatpush1.bf16.msra.mxu0 0
      %3795 = vmatprep.subr.bf16.mxu0 0
      %3796 = vmatpush1.bf16.msra.mxu0 0
      %3797 = vmatprep.mubr.bf16.mxu0 0
      %3798 = vmatmul.mubr.bf16.gmra.mrb[0].mxu0 %v3751
      %v3799 = vpop.f32.mrb[0].mxu0
      %v3800 = vadd.f32 0.0, %v3799
      %v3801 = vpop.f32.mrb[0].mxu0
      %v3802 = vpop.f32.mrb[0].mxu0
      %v3803 = vadd.f32 0.0, %v3802
      %v3804 = vpop.f32.mrb[0].mxu0
      %3805 = vmatprep.mubr.bf16.mxu0 0
      %3806 = vmatmul.mubr.bf16.gmra.mrb[0].mxu0 %v3754
      %v3807 = vpop.f32.mrb[0].mxu0
      %v3808 = vadd.f32 0.0, %v3807
      %v3809 = vpop.f32.mrb[0].mxu0
      %v3810 = vpop.f32.mrb[0].mxu0
      %v3811 = vadd.f32 0.0, %v3810
      %v3812 = vpop.f32.mrb[0].mxu0
      %3813 = vmatprep.mubr.bf16.mxu0 0
      %3814 = vmatmul.mubr.bf16.gmra.mrb[0].mxu0 %v3757
      %v3815 = vpop.f32.mrb[0].mxu0
      %v3816 = vadd.f32 0.0, %v3815
      %v3817 = vpop.f32.mrb[0].mxu0
      %v3818 = vpop.f32.mrb[0].mxu0
      %v3819 = vadd.f32 0.0, %v3818
      %v3820 = vpop.f32.mrb[0].mxu0
      %3821 = vmatprep.mubr.bf16.mxu0 0
      %3822 = vmatmul.mubr.bf16.gmra.mrb[0].mxu0 %v3760
      %v3823 = vpop.f32.mrb[0].mxu0
      %v3824 = vadd.f32 0.0, %v3823
      %v3825 = vpop.f32.mrb[0].mxu0
      %v3826 = vpop.f32.mrb[0].mxu0
      %v3827 = vadd.f32 0.0, %v3826
      %v3828 = vpop.f32.mrb[0].mxu0
      %3829 = vdwg.mxu0
      %v3830 = vadd.f32 %v3601, %v3800
      %v3831 = vadd.f32 %v3602, %v3803
      %v3832 = vadd.f32 %v3603, %v3808
      %v3833 = vadd.f32 %v3604, %v3811
      %v3834 = vadd.f32 %v3605, %v3816
      %v3835 = vadd.f32 %v3606, %v3819
      %v3836 = vadd.f32 %v3607, %v3824
      %v3837 = vadd.f32 %v3608, %v3827
      %v3838 = vmax.f32 %v3830, 0.0
      %v3839 = vmax.f32 %v3831, 0.0
      %v3840 = vmax.f32 %v3832, 0.0
      %v3841 = vmax.f32 %v3833, 0.0
      %v3842 = vmax.f32 %v3834, 0.0
      %v3843 = vmax.f32 %v3835, 0.0
      %v3844 = vmax.f32 %v3836, 0.0
      %v3845 = vmax.f32 %v3837, 0.0
      %3846 = vst.msk [vmem:[%s305] sm:$0xff] %vm2228, %v3838
      %3847 = vst.msk [vmem:[%s305 + $0x8] sm:$0xff] %vm2228, %v3839
      %3848 = vst.msk [vmem:[%s305 + $0x10] sm:$0xff] %vm2228, %v3840
      %3849 = vst.msk [vmem:[%s305 + $0x18] sm:$0xff] %vm2228, %v3841
      %3850 = vst.msk [vmem:[%s305 + $0x20] sm:$0xff] %vm2228, %v3842
      %3851 = vst.msk [vmem:[%s305 + $0x28] sm:$0xff] %vm2228, %v3843
      %3852 = vst.msk [vmem:[%s305 + $0x30] sm:$0xff] %vm2228, %v3844
      %3853 = vst.msk [vmem:[%s305 + $0x38] sm:$0xff] %vm2228, %v3845
      %p3854 = scmp.lt.s32.totalorder %s19, 1
      %s3855 = scalar_select %p3854, %s19, 1
      %s3856 = smul.addr %s3855, 8
      %s3857 = smul.addr %s3856, 8
      %s3858 = scalar_lea.vmem %s8, %s3857
      // Predicated region
      $region53: #{tpu_custom_call.1} parent=51 // pred_check
        %p3859 = pneg %p210
      $region54: #{tpu_custom_call.1} parent=51 // pred_check_branch
        %3861 = sbr.rel (%p3859) target = $region56
      $region55: #{tpu_custom_call.1} parent=51 // pred_region
        _
      $region56: #{tpu_custom_call.1} parent=51 // pred_fallthru
        _
    $region52: #{tpu_custom_call.1} parent=5 // pred_fallthru
      _
    %p3862 = scmp.le.s32.totalorder 2, %s14
    // Predicated region
    $region57: #{tpu_custom_call.1} parent=5 // pred_check
      %p3863 = pneg %p3862
    $region58: #{tpu_custom_call.1} parent=5 // pred_check_branch
      %3865 = sbr.rel (%p3863) target = $region60
    $region59: #{tpu_custom_call.1} parent=5 // pred_region
      %s3866 = ssub.s32 %s14, 2
      // Predicated region
      $region61: #{tpu_custom_call.1} parent=59 // pred_check
        %p3867 = pneg %p216
      $region62: #{tpu_custom_call.1} parent=59 // pred_check_branch
        %3869 = sbr.rel (%p3867) target = $region64
      $region63: #{tpu_custom_call.1} parent=59 // pred_region
        %p3870 = scmp.lt.s32.totalorder %s20, 1
        %s3871 = scalar_select %p3870, %s20, 1
        %s3872 = smul.addr %s3871, 8
        %s3873 = smul.addr %s3872, 8
        %s3874 = scalar_lea.vmem %s8, %s3873
      $region64: #{tpu_custom_call.1} parent=59 // pred_fallthru
        _
    $region60: #{tpu_custom_call.1} parent=5 // pred_fallthru
      _
  $region6: #{tpu_custom_call.1} parent=0 // loop_footer
    %s18 = sadd.s32 1, %s14
  $region7: #{tpu_custom_call.1} parent=0 // loop_footer_branch
    %13 = sbr.rel target = $region3
  $region8: #{tpu_custom_call.1} parent=0 // loop_exit
    _

</llo_original>
